<compile_context>
chip_gen: v7x
topology: tpu7x:2x2x1
jax: 0.10.0
libtpu: 0.0.40
codegen_flags: <defaults>
</compile_context>

<pallas_src>
import functools
import numpy as np
import jax
import jax.numpy as jnp
from jax import lax
from jax.experimental import pallas as pl
from jax.experimental.pallas import tpu as pltpu

# ----------------------- model hyper-parameters (small) -----------------------
B        = 2      # batch
CTX      = 16     # context_length (= sequence length L)
D_IN     = 8      # input_dim
WIDTH    = 64     # transformer width (d_model)
HEADS    = 4      # n_head  (head_dim = 16)
D_OUT    = 8      # output_dim
LAYERS   = 2
HEAD_DIM = WIDTH // HEADS
EPS      = 1e-5   # LayerNorm eps (PyTorch default)
OUT_PAD  = 128    # lane-dense padded output width (sliced back to D_OUT in wrapper)


def _layer_norm(x, w, b):
    m = jnp.mean(x, axis=-1, keepdims=True)
    v = jnp.mean((x - m) ** 2, axis=-1, keepdims=True)
    return (x - m) * lax.rsqrt(v + EPS) * w + b


# --------------------------------- kernel -------------------------------------
def transformer_kernel(
    x_ref,                       # (bb, L, D_in)
    win_ref, bin_ref, pos_ref,   # input proj + positional embedding
    ln1w_ref, ln1b_ref,
    qkvw_ref, qkvb_ref,
    outw_ref, outb_ref,
    ln2w_ref, ln2b_ref,
    fcw_ref, fcb_ref,
    pjw_ref, pjb_ref,
    lnfw_ref, lnfb_ref,
    wout_ref, bout_ref,          # padded to OUT_PAD lanes
    o_ref,                       # (bb, L, OUT_PAD)
    *, bb,
):
    L = CTX
    x = x_ref[...].reshape(bb * L, D_IN)                           # fuse batch into sublanes

    # input_proj + positional embedding
    h = jnp.dot(x, win_ref[...], preferred_element_type=jnp.float32) + bin_ref[...]
    pos = pos_ref[...]
    if bb > 1:
        pos = jnp.concatenate([pos] * bb, axis=0)
    h = h + pos                                                    # (bb*L, W)

    scale = 1.0 / float(np.sqrt(HEAD_DIM))

    for l in range(LAYERS):                                        # static unroll (LAYERS=2)
        # ---- attention sub-block: h = h + out_proj(MHA(ln_1(h))) ----
        ln1 = _layer_norm(h, ln1w_ref[l], ln1b_ref[l])
        qkv = jnp.dot(ln1, qkvw_ref[l], preferred_element_type=jnp.float32) + qkvb_ref[l]
        q = qkv[:, 0 * WIDTH:1 * WIDTH] * scale                    # scale once, not per head
        k = qkv[:, 1 * WIDTH:2 * WIDTH]
        v = qkv[:, 2 * WIDTH:3 * WIDTH]

        batch_outs = []
        for bi in range(bb):                                       # static batch loop
            r0 = bi * L
            head_outs = []
            for hi in range(HEADS):                                # static head loop
                c0 = hi * HEAD_DIM
                qh = q[r0:r0 + L, c0:c0 + HEAD_DIM]
                kh = k[r0:r0 + L, c0:c0 + HEAD_DIM]
                vh = v[r0:r0 + L, c0:c0 + HEAD_DIM]
                # q @ k^T without materializing an XLU transpose of kh
                s = lax.dot_general(qh, kh, (((1,), (1,)), ((), ())),
                                    preferred_element_type=jnp.float32)
                s = s - jnp.max(s, axis=-1, keepdims=True)
                p = jnp.exp(s)
                p = p * pl.reciprocal(jnp.sum(p, axis=-1, keepdims=True), approx=True)
                head_outs.append(jnp.dot(p, vh, preferred_element_type=jnp.float32))
            batch_outs.append(jnp.concatenate(head_outs, axis=-1))  # (L, W)
        attn = batch_outs[0] if bb == 1 else jnp.concatenate(batch_outs, axis=0)
        attn = jnp.dot(attn, outw_ref[l], preferred_element_type=jnp.float32) + outb_ref[l]
        h = h + attn

        # ---- MLP sub-block: h = h + c_proj(QuickGELU(c_fc(ln_2(h)))) ----
        ln2 = _layer_norm(h, ln2w_ref[l], ln2b_ref[l])
        fc = jnp.dot(ln2, fcw_ref[l], preferred_element_type=jnp.float32) + fcb_ref[l]
        fc = fc * jax.nn.sigmoid(1.702 * fc)                        # QuickGELU
        mlp = jnp.dot(fc, pjw_ref[l], preferred_element_type=jnp.float32) + pjb_ref[l]
        h = h + mlp

    # ln_final + output_proj (lane-dense, padded to OUT_PAD)
    hf = _layer_norm(h, lnfw_ref[...], lnfb_ref[...])
    out = jnp.dot(hf, wout_ref[...], preferred_element_type=jnp.float32) + bout_ref[...]
    o_ref[...] = out.reshape(bb, L, OUT_PAD).astype(o_ref.dtype)


# ------------------------------- wrapper ---------------------------------------
def _full_spec(shape):
    nd = len(shape)
    return pl.BlockSpec(shape, lambda g, _nd=nd: (0,) * _nd)


def _batch_block():
    """Fuse the batch into one grid step on single-TensorCore chips (v5e/v6e);
    keep a batch-parallel grid where multiple TCs can pick it up (v4/v5p/v7x)."""
    try:
        kind = jax.devices()[0].device_kind.lower()
    except Exception:
        kind = ""
    multi_core = ("7" in kind) or ("v4" in kind) or ("v5p" in kind)
    return 1 if multi_core else B


def transformer_forward(x, params):
    p = params
    # lane-dense output: pad the output projection to 128 lanes, slice after the call
    wout_p = jnp.zeros((WIDTH, OUT_PAD), jnp.float32).at[:, :D_OUT].set(p["wout"])
    bout_p = jnp.zeros((1, OUT_PAD), jnp.float32).at[:, :D_OUT].set(p["bout"])

    bb = _batch_block()
    grid = (B // bb,)

    in_arrays = [
        x,
        p["win"], p["bin"], p["pos"],
        p["ln1w"], p["ln1b"],
        p["qkvw"], p["qkvb"],
        p["outw"], p["outb"],
        p["ln2w"], p["ln2b"],
        p["fcw"], p["fcb"],
        p["pjw"], p["pjb"],
        p["lnfw"], p["lnfb"],
        wout_p, bout_p,
    ]
    in_specs = [pl.BlockSpec((bb, CTX, D_IN), lambda g: (g, 0, 0))]
    in_specs += [_full_spec(a.shape) for a in in_arrays[1:]]

    out_padded = pl.pallas_call(
        functools.partial(transformer_kernel, bb=bb),
        out_shape=jax.ShapeDtypeStruct((B, CTX, OUT_PAD), jnp.float32),
        grid_spec=pltpu.PrefetchScalarGridSpec(
            num_scalar_prefetch=0,
            grid=grid,
            in_specs=in_specs,
            out_specs=pl.BlockSpec((bb, CTX, OUT_PAD), lambda g: (g, 0, 0)),
        ),
        compiler_params=pltpu.CompilerParams(
            dimension_semantics=("parallel",),
        ),
    )(*in_arrays)
    return out_padded[..., :D_OUT]


# ----------------------- deterministic parameter init --------------------------
def init_params(key):
    proj_std = WIDTH ** (-0.5) * (2 * LAYERS) ** (-0.5)
    attn_std = WIDTH ** (-0.5)
    fc_std = (2 * WIDTH) ** (-0.5)

    keys = jax.random.split(key, 32)
    ki = iter(keys)

    def nrm(shape, std):
        return (jax.random.normal(next(ki), shape, jnp.float32) * std)

    params = {
        "win":  nrm((D_IN, WIDTH), proj_std),
        "bin":  nrm((1, WIDTH), 0.01),
        "pos":  nrm((CTX, WIDTH), 0.01),
        "ln1w": jnp.ones((LAYERS, 1, WIDTH), jnp.float32),
        "ln1b": jnp.zeros((LAYERS, 1, WIDTH), jnp.float32),
        "qkvw": nrm((LAYERS, WIDTH, 3 * WIDTH), attn_std),
        "qkvb": nrm((LAYERS, 1, 3 * WIDTH), 0.01),
        "outw": nrm((LAYERS, WIDTH, WIDTH), proj_std),
        "outb": nrm((LAYERS, 1, WIDTH), 0.01),
        "ln2w": jnp.ones((LAYERS, 1, WIDTH), jnp.float32),
        "ln2b": jnp.zeros((LAYERS, 1, WIDTH), jnp.float32),
        "fcw":  nrm((LAYERS, WIDTH, 4 * WIDTH), fc_std),
        "fcb":  nrm((LAYERS, 1, 4 * WIDTH), 0.01),
        "pjw":  nrm((LAYERS, 4 * WIDTH, WIDTH), proj_std),
        "pjb":  nrm((LAYERS, 1, WIDTH), 0.01),
        "lnfw": jnp.ones((1, WIDTH), jnp.float32),
        "lnfb": jnp.zeros((1, WIDTH), jnp.float32),
        "wout": nrm((WIDTH, D_OUT), proj_std),
        "bout": nrm((1, D_OUT), 0.01),
    }
    return params


# --------------------------- pure-JAX reference ---------------------------------
def reference_forward(x, p):
    def ln(t, w, b):
        m = jnp.mean(t, axis=-1, keepdims=True)
        v = jnp.mean((t - m) ** 2, axis=-1, keepdims=True)
        return (t - m) / jnp.sqrt(v + EPS) * w + b

    h = x @ p["win"] + p["bin"]
    h = h + p["pos"][None]
    for l in range(LAYERS):
        ln1 = ln(h, p["ln1w"][l, 0], p["ln1b"][l, 0])
        qkv = ln1 @ p["qkvw"][l] + p["qkvb"][l, 0]
        q, k, v = jnp.split(qkv, 3, axis=-1)
        sh = lambda t: t.reshape(B, CTX, HEADS, HEAD_DIM).transpose(0, 2, 1, 3)
        qh, kh, vh = sh(q), sh(k), sh(v)
        s = jnp.einsum("bhqd,bhkd->bhqk", qh, kh) / np.sqrt(HEAD_DIM)
        pa = jax.nn.softmax(s, axis=-1)
        o = jnp.einsum("bhqk,bhkd->bhqd", pa, vh).transpose(0, 2, 1, 3).reshape(B, CTX, WIDTH)
        o = o @ p["outw"][l] + p["outb"][l, 0]
        h = h + o
        ln2 = ln(h, p["ln2w"][l, 0], p["ln2b"][l, 0])
        fc = ln2 @ p["fcw"][l] + p["fcb"][l, 0]
        fc = fc * jax.nn.sigmoid(1.702 * fc)
        h = h + fc @ p["pjw"][l] + p["pjb"][l, 0]
    hf = ln(h, p["lnfw"][0], p["lnfb"][0])
    return hf @ p["wout"] + p["bout"]


# ----------------------------------- main ---------------------------------------
if __name__ == "__main__":
    key = jax.random.PRNGKey(0)
    kx, kp = jax.random.split(key)
    x = jax.random.normal(kx, (B, CTX, D_IN), jnp.float32)
    params = init_params(kp)

    out = transformer_forward(x, params)
    out = jax.block_until_ready(out)

    ref = reference_forward(x, params)
    np.testing.assert_allclose(np.asarray(out), np.asarray(ref), rtol=2e-3, atol=2e-3)

    print("KERNEL_OK")
</pallas_src>

<mosaic_0001>
module attributes {stable_mosaic.version = 11 : i64} {
  func.func @transformer_kernel(%arg0: i32, %arg1: memref<2x16x8xf32, #tpu.memory_space<vmem>>, %arg2: memref<8x64xf32, #tpu.memory_space<vmem>>, %arg3: memref<1x64xf32, #tpu.memory_space<vmem>>, %arg4: memref<16x64xf32, #tpu.memory_space<vmem>>, %arg5: memref<2x1x64xf32, #tpu.memory_space<vmem>>, %arg6: memref<2x1x64xf32, #tpu.memory_space<vmem>>, %arg7: memref<2x64x192xf32, #tpu.memory_space<vmem>>, %arg8: memref<2x1x192xf32, #tpu.memory_space<vmem>>, %arg9: memref<2x64x64xf32, #tpu.memory_space<vmem>>, %arg10: memref<2x1x64xf32, #tpu.memory_space<vmem>>, %arg11: memref<2x1x64xf32, #tpu.memory_space<vmem>>, %arg12: memref<2x1x64xf32, #tpu.memory_space<vmem>>, %arg13: memref<2x64x256xf32, #tpu.memory_space<vmem>>, %arg14: memref<2x1x256xf32, #tpu.memory_space<vmem>>, %arg15: memref<2x256x64xf32, #tpu.memory_space<vmem>>, %arg16: memref<2x1x64xf32, #tpu.memory_space<vmem>>, %arg17: memref<1x64xf32, #tpu.memory_space<vmem>>, %arg18: memref<1x64xf32, #tpu.memory_space<vmem>>, %arg19: memref<64x128xf32, #tpu.memory_space<vmem>>, %arg20: memref<1x128xf32, #tpu.memory_space<vmem>>, %arg21: memref<2x16x128xf32, #tpu.memory_space<vmem>>) attributes {dimension_semantics = [#tpu.dimension_semantics<parallel>], iteration_bounds = array<i64: 1>, scalar_prefetch = 0 : i64, scratch_operands = 0 : i64, tpu.core_type = #tpu.core_type<tc>, window_params = [{transform_indices = @transform_0, window_bounds = array<i64: 2, 16, 8>}, {pipeline_mode = #tpu.pipeline_mode<synchronous>, transform_indices = @transform_1, window_bounds = array<i64: 8, 64>}, {pipeline_mode = #tpu.pipeline_mode<synchronous>, transform_indices = @transform_2, window_bounds = array<i64: 1, 64>}, {pipeline_mode = #tpu.pipeline_mode<synchronous>, transform_indices = @transform_3, window_bounds = array<i64: 16, 64>}, {pipeline_mode = #tpu.pipeline_mode<synchronous>, transform_indices = @transform_4, window_bounds = array<i64: 2, 1, 64>}, {pipeline_mode = #tpu.pipeline_mode<synchronous>, transform_indices = @transform_5, window_bounds = array<i64: 2, 1, 64>}, {pipeline_mode = #tpu.pipeline_mode<synchronous>, transform_indices = @transform_6, window_bounds = array<i64: 2, 64, 192>}, {pipeline_mode = #tpu.pipeline_mode<synchronous>, transform_indices = @transform_7, window_bounds = array<i64: 2, 1, 192>}, {pipeline_mode = #tpu.pipeline_mode<synchronous>, transform_indices = @transform_8, window_bounds = array<i64: 2, 64, 64>}, {pipeline_mode = #tpu.pipeline_mode<synchronous>, transform_indices = @transform_9, window_bounds = array<i64: 2, 1, 64>}, {pipeline_mode = #tpu.pipeline_mode<synchronous>, transform_indices = @transform_10, window_bounds = array<i64: 2, 1, 64>}, {pipeline_mode = #tpu.pipeline_mode<synchronous>, transform_indices = @transform_11, window_bounds = array<i64: 2, 1, 64>}, {pipeline_mode = #tpu.pipeline_mode<synchronous>, transform_indices = @transform_12, window_bounds = array<i64: 2, 64, 256>}, {pipeline_mode = #tpu.pipeline_mode<synchronous>, transform_indices = @transform_13, window_bounds = array<i64: 2, 1, 256>}, {pipeline_mode = #tpu.pipeline_mode<synchronous>, transform_indices = @transform_14, window_bounds = array<i64: 2, 256, 64>}, {pipeline_mode = #tpu.pipeline_mode<synchronous>, transform_indices = @transform_15, window_bounds = array<i64: 2, 1, 64>}, {pipeline_mode = #tpu.pipeline_mode<synchronous>, transform_indices = @transform_16, window_bounds = array<i64: 1, 64>}, {pipeline_mode = #tpu.pipeline_mode<synchronous>, transform_indices = @transform_17, window_bounds = array<i64: 1, 64>}, {pipeline_mode = #tpu.pipeline_mode<synchronous>, transform_indices = @transform_18, window_bounds = array<i64: 64, 128>}, {pipeline_mode = #tpu.pipeline_mode<synchronous>, transform_indices = @transform_19, window_bounds = array<i64: 1, 128>}, {transform_indices = @transform_20, window_bounds = array<i64: 2, 16, 128>}]} {
    %c0 = arith.constant 0 : index
    %c0_0 = arith.constant 0 : index
    %c0_1 = arith.constant 0 : index
    %0 = vector.load %arg1[%c0, %c0_0, %c0_1] : memref<2x16x8xf32, #tpu.memory_space<vmem>>, vector<2x16x8xf32>
    %1 = vector.shape_cast %0 : vector<2x16x8xf32> to vector<32x8xf32>
    %c0_2 = arith.constant 0 : index
    %c0_3 = arith.constant 0 : index
    %2 = vector.load %arg2[%c0_2, %c0_3] : memref<8x64xf32, #tpu.memory_space<vmem>>, vector<8x64xf32>
    %cst = arith.constant dense<0.000000e+00> : vector<32x64xf32>
    %3 = tpu.matmul %1, %2, %cst {dimension_numbers = #tpu.dot_dimension_numbers<[1], [0], [0], [1], [0, 0, 1, 1], [], []>} : vector<32x8xf32>, vector<8x64xf32>, vector<32x64xf32> -> vector<32x64xf32>
    %c0_4 = arith.constant 0 : index
    %c0_5 = arith.constant 0 : index
    %4 = vector.load %arg3[%c0_4, %c0_5] : memref<1x64xf32, #tpu.memory_space<vmem>>, vector<1x64xf32>
    %5 = vector.broadcast %4 : vector<1x64xf32> to vector<32x64xf32>
    %6 = arith.addf %3, %5 : vector<32x64xf32>
    %c0_6 = arith.constant 0 : index
    %c0_7 = arith.constant 0 : index
    %7 = vector.load %arg4[%c0_6, %c0_7] : memref<16x64xf32, #tpu.memory_space<vmem>>, vector<16x64xf32>
    %8 = tpu.concatenate %7, %7 in 0 : vector<16x64xf32>, vector<16x64xf32> -> vector<32x64xf32>
    %9 = arith.addf %6, %8 : vector<32x64xf32>
    %c0_8 = arith.constant 0 : index
    %c0_9 = arith.constant 0 : index
    %c0_10 = arith.constant 0 : index
    %10 = vector.load %arg5[%c0_8, %c0_9, %c0_10] : memref<2x1x64xf32, #tpu.memory_space<vmem>>, vector<1x1x64xf32>
    %11 = vector.shape_cast %10 : vector<1x1x64xf32> to vector<1x64xf32>
    %c0_11 = arith.constant 0 : index
    %c0_12 = arith.constant 0 : index
    %c0_13 = arith.constant 0 : index
    %12 = vector.load %arg6[%c0_11, %c0_12, %c0_13] : memref<2x1x64xf32, #tpu.memory_space<vmem>>, vector<1x1x64xf32>
    %13 = vector.shape_cast %12 : vector<1x1x64xf32> to vector<1x64xf32>
    %cst_14 = arith.constant dense<0.000000e+00> : vector<32xf32>
    %14 = vector.multi_reduction <add>, %9, %cst_14 [1] : vector<32x64xf32> to vector<32xf32>
    %15 = vector.shape_cast %14 : vector<32xf32> to vector<32x1xf32>
    %cst_15 = arith.constant 6.400000e+01 : f32
    %16 = vector.broadcast %cst_15 : f32 to vector<32x1xf32>
    %17 = arith.divf %15, %16 : vector<32x1xf32>
    %18 = vector.broadcast %17 : vector<32x1xf32> to vector<32x64xf32>
    %19 = arith.subf %9, %18 : vector<32x64xf32>
    %20 = arith.mulf %19, %19 : vector<32x64xf32>
    %cst_16 = arith.constant dense<0.000000e+00> : vector<32xf32>
    %21 = vector.multi_reduction <add>, %20, %cst_16 [1] : vector<32x64xf32> to vector<32xf32>
    %22 = vector.shape_cast %21 : vector<32xf32> to vector<32x1xf32>
    %cst_17 = arith.constant 6.400000e+01 : f32
    %23 = vector.broadcast %cst_17 : f32 to vector<32x1xf32>
    %24 = arith.divf %22, %23 : vector<32x1xf32>
    %25 = vector.broadcast %17 : vector<32x1xf32> to vector<32x64xf32>
    %26 = arith.subf %9, %25 : vector<32x64xf32>
    %cst_18 = arith.constant 9.99999974E-6 : f32
    %27 = vector.broadcast %cst_18 : f32 to vector<32x1xf32>
    %28 = arith.addf %24, %27 : vector<32x1xf32>
    %29 = math.rsqrt %28 : vector<32x1xf32>
    %30 = vector.broadcast %29 : vector<32x1xf32> to vector<32x64xf32>
    %31 = arith.mulf %26, %30 : vector<32x64xf32>
    %32 = vector.broadcast %11 : vector<1x64xf32> to vector<32x64xf32>
    %33 = arith.mulf %31, %32 : vector<32x64xf32>
    %34 = vector.broadcast %13 : vector<1x64xf32> to vector<32x64xf32>
    %35 = arith.addf %33, %34 : vector<32x64xf32>
    %c0_19 = arith.constant 0 : index
    %c0_20 = arith.constant 0 : index
    %c0_21 = arith.constant 0 : index
    %36 = vector.load %arg7[%c0_19, %c0_20, %c0_21] : memref<2x64x192xf32, #tpu.memory_space<vmem>>, vector<1x64x192xf32>
    %37 = vector.shape_cast %36 : vector<1x64x192xf32> to vector<64x192xf32>
    %cst_22 = arith.constant dense<0.000000e+00> : vector<32x192xf32>
    %38 = tpu.matmul %35, %37, %cst_22 {dimension_numbers = #tpu.dot_dimension_numbers<[1], [0], [0], [1], [0, 0, 1, 1], [], []>} : vector<32x64xf32>, vector<64x192xf32>, vector<32x192xf32> -> vector<32x192xf32>
    %c0_23 = arith.constant 0 : index
    %c0_24 = arith.constant 0 : index
    %c0_25 = arith.constant 0 : index
    %39 = vector.load %arg8[%c0_23, %c0_24, %c0_25] : memref<2x1x192xf32, #tpu.memory_space<vmem>>, vector<1x1x192xf32>
    %40 = vector.shape_cast %39 : vector<1x1x192xf32> to vector<1x192xf32>
    %41 = vector.broadcast %40 : vector<1x192xf32> to vector<32x192xf32>
    %42 = arith.addf %38, %41 : vector<32x192xf32>
    %43 = vector.extract_strided_slice %42 {offsets = [0, 0], sizes = [32, 64], strides = [1, 1]} : vector<32x192xf32> to vector<32x64xf32>
    %cst_26 = arith.constant 2.500000e-01 : f32
    %44 = vector.broadcast %cst_26 : f32 to vector<32x64xf32>
    %45 = arith.mulf %43, %44 : vector<32x64xf32>
    %46 = vector.extract_strided_slice %42 {offsets = [0, 64], sizes = [32, 64], strides = [1, 1]} : vector<32x192xf32> to vector<32x64xf32>
    %47 = vector.extract_strided_slice %42 {offsets = [0, 128], sizes = [32, 64], strides = [1, 1]} : vector<32x192xf32> to vector<32x64xf32>
    %48 = vector.extract_strided_slice %45 {offsets = [0, 0], sizes = [16, 16], strides = [1, 1]} : vector<32x64xf32> to vector<16x16xf32>
    %49 = vector.extract_strided_slice %46 {offsets = [0, 0], sizes = [16, 16], strides = [1, 1]} : vector<32x64xf32> to vector<16x16xf32>
    %50 = vector.extract_strided_slice %47 {offsets = [0, 0], sizes = [16, 16], strides = [1, 1]} : vector<32x64xf32> to vector<16x16xf32>
    %cst_27 = arith.constant dense<0.000000e+00> : vector<16x16xf32>
    %51 = tpu.matmul %48, %49, %cst_27 {dimension_numbers = #tpu.dot_dimension_numbers<[1], [1], [0], [0], [0, 0, 1, 0], [], []>} : vector<16x16xf32>, vector<16x16xf32>, vector<16x16xf32> -> vector<16x16xf32>
    %cst_28 = arith.constant dense<0xFF800000> : vector<16xf32>
    %52 = vector.multi_reduction <maximumf>, %51, %cst_28 [1] : vector<16x16xf32> to vector<16xf32>
    %53 = vector.shape_cast %52 : vector<16xf32> to vector<16x1xf32>
    %54 = vector.broadcast %53 : vector<16x1xf32> to vector<16x16xf32>
    %55 = arith.subf %51, %54 : vector<16x16xf32>
    %56 = math.exp %55 : vector<16x16xf32>
    %cst_29 = arith.constant dense<0.000000e+00> : vector<16xf32>
    %57 = vector.multi_reduction <add>, %56, %cst_29 [1] : vector<16x16xf32> to vector<16xf32>
    %58 = vector.shape_cast %57 : vector<16xf32> to vector<16x1xf32>
    %59 = tpu.reciprocal %58 {approx = true} : vector<16x1xf32> -> vector<16x1xf32>
    %60 = vector.broadcast %59 : vector<16x1xf32> to vector<16x16xf32>
    %61 = arith.mulf %56, %60 : vector<16x16xf32>
    %cst_30 = arith.constant dense<0.000000e+00> : vector<16x16xf32>
    %62 = tpu.matmul %61, %50, %cst_30 {dimension_numbers = #tpu.dot_dimension_numbers<[1], [0], [0], [1], [0, 0, 1, 1], [], []>} : vector<16x16xf32>, vector<16x16xf32>, vector<16x16xf32> -> vector<16x16xf32>
    %63 = vector.extract_strided_slice %45 {offsets = [0, 16], sizes = [16, 16], strides = [1, 1]} : vector<32x64xf32> to vector<16x16xf32>
    %64 = vector.extract_strided_slice %46 {offsets = [0, 16], sizes = [16, 16], strides = [1, 1]} : vector<32x64xf32> to vector<16x16xf32>
    %65 = vector.extract_strided_slice %47 {offsets = [0, 16], sizes = [16, 16], strides = [1, 1]} : vector<32x64xf32> to vector<16x16xf32>
    %cst_31 = arith.constant dense<0.000000e+00> : vector<16x16xf32>
    %66 = tpu.matmul %63, %64, %cst_31 {dimension_numbers = #tpu.dot_dimension_numbers<[1], [1], [0], [0], [0, 0, 1, 0], [], []>} : vector<16x16xf32>, vector<16x16xf32>, vector<16x16xf32> -> vector<16x16xf32>
    %cst_32 = arith.constant dense<0xFF800000> : vector<16xf32>
    %67 = vector.multi_reduction <maximumf>, %66, %cst_32 [1] : vector<16x16xf32> to vector<16xf32>
    %68 = vector.shape_cast %67 : vector<16xf32> to vector<16x1xf32>
    %69 = vector.broadcast %68 : vector<16x1xf32> to vector<16x16xf32>
    %70 = arith.subf %66, %69 : vector<16x16xf32>
    %71 = math.exp %70 : vector<16x16xf32>
    %cst_33 = arith.constant dense<0.000000e+00> : vector<16xf32>
    %72 = vector.multi_reduction <add>, %71, %cst_33 [1] : vector<16x16xf32> to vector<16xf32>
    %73 = vector.shape_cast %72 : vector<16xf32> to vector<16x1xf32>
    %74 = tpu.reciprocal %73 {approx = true} : vector<16x1xf32> -> vector<16x1xf32>
    %75 = vector.broadcast %74 : vector<16x1xf32> to vector<16x16xf32>
    %76 = arith.mulf %71, %75 : vector<16x16xf32>
    %cst_34 = arith.constant dense<0.000000e+00> : vector<16x16xf32>
    %77 = tpu.matmul %76, %65, %cst_34 {dimension_numbers = #tpu.dot_dimension_numbers<[1], [0], [0], [1], [0, 0, 1, 1], [], []>} : vector<16x16xf32>, vector<16x16xf32>, vector<16x16xf32> -> vector<16x16xf32>
    %78 = vector.extract_strided_slice %45 {offsets = [0, 32], sizes = [16, 16], strides = [1, 1]} : vector<32x64xf32> to vector<16x16xf32>
    %79 = vector.extract_strided_slice %46 {offsets = [0, 32], sizes = [16, 16], strides = [1, 1]} : vector<32x64xf32> to vector<16x16xf32>
    %80 = vector.extract_strided_slice %47 {offsets = [0, 32], sizes = [16, 16], strides = [1, 1]} : vector<32x64xf32> to vector<16x16xf32>
    %cst_35 = arith.constant dense<0.000000e+00> : vector<16x16xf32>
    %81 = tpu.matmul %78, %79, %cst_35 {dimension_numbers = #tpu.dot_dimension_numbers<[1], [1], [0], [0], [0, 0, 1, 0], [], []>} : vector<16x16xf32>, vector<16x16xf32>, vector<16x16xf32> -> vector<16x16xf32>
    %cst_36 = arith.constant dense<0xFF800000> : vector<16xf32>
    %82 = vector.multi_reduction <maximumf>, %81, %cst_36 [1] : vector<16x16xf32> to vector<16xf32>
    %83 = vector.shape_cast %82 : vector<16xf32> to vector<16x1xf32>
    %84 = vector.broadcast %83 : vector<16x1xf32> to vector<16x16xf32>
    %85 = arith.subf %81, %84 : vector<16x16xf32>
    %86 = math.exp %85 : vector<16x16xf32>
    %cst_37 = arith.constant dense<0.000000e+00> : vector<16xf32>
    %87 = vector.multi_reduction <add>, %86, %cst_37 [1] : vector<16x16xf32> to vector<16xf32>
    %88 = vector.shape_cast %87 : vector<16xf32> to vector<16x1xf32>
    %89 = tpu.reciprocal %88 {approx = true} : vector<16x1xf32> -> vector<16x1xf32>
    %90 = vector.broadcast %89 : vector<16x1xf32> to vector<16x16xf32>
    %91 = arith.mulf %86, %90 : vector<16x16xf32>
    %cst_38 = arith.constant dense<0.000000e+00> : vector<16x16xf32>
    %92 = tpu.matmul %91, %80, %cst_38 {dimension_numbers = #tpu.dot_dimension_numbers<[1], [0], [0], [1], [0, 0, 1, 1], [], []>} : vector<16x16xf32>, vector<16x16xf32>, vector<16x16xf32> -> vector<16x16xf32>
    %93 = vector.extract_strided_slice %45 {offsets = [0, 48], sizes = [16, 16], strides = [1, 1]} : vector<32x64xf32> to vector<16x16xf32>
    %94 = vector.extract_strided_slice %46 {offsets = [0, 48], sizes = [16, 16], strides = [1, 1]} : vector<32x64xf32> to vector<16x16xf32>
    %95 = vector.extract_strided_slice %47 {offsets = [0, 48], sizes = [16, 16], strides = [1, 1]} : vector<32x64xf32> to vector<16x16xf32>
    %cst_39 = arith.constant dense<0.000000e+00> : vector<16x16xf32>
    %96 = tpu.matmul %93, %94, %cst_39 {dimension_numbers = #tpu.dot_dimension_numbers<[1], [1], [0], [0], [0, 0, 1, 0], [], []>} : vector<16x16xf32>, vector<16x16xf32>, vector<16x16xf32> -> vector<16x16xf32>
    %cst_40 = arith.constant dense<0xFF800000> : vector<16xf32>
    %97 = vector.multi_reduction <maximumf>, %96, %cst_40 [1] : vector<16x16xf32> to vector<16xf32>
    %98 = vector.shape_cast %97 : vector<16xf32> to vector<16x1xf32>
    %99 = vector.broadcast %98 : vector<16x1xf32> to vector<16x16xf32>
    %100 = arith.subf %96, %99 : vector<16x16xf32>
    %101 = math.exp %100 : vector<16x16xf32>
    %cst_41 = arith.constant dense<0.000000e+00> : vector<16xf32>
    %102 = vector.multi_reduction <add>, %101, %cst_41 [1] : vector<16x16xf32> to vector<16xf32>
    %103 = vector.shape_cast %102 : vector<16xf32> to vector<16x1xf32>
    %104 = tpu.reciprocal %103 {approx = true} : vector<16x1xf32> -> vector<16x1xf32>
    %105 = vector.broadcast %104 : vector<16x1xf32> to vector<16x16xf32>
    %106 = arith.mulf %101, %105 : vector<16x16xf32>
    %cst_42 = arith.constant dense<0.000000e+00> : vector<16x16xf32>
    %107 = tpu.matmul %106, %95, %cst_42 {dimension_numbers = #tpu.dot_dimension_numbers<[1], [0], [0], [1], [0, 0, 1, 1], [], []>} : vector<16x16xf32>, vector<16x16xf32>, vector<16x16xf32> -> vector<16x16xf32>
    %108 = tpu.concatenate %62, %77, %92, %107 in 1 : vector<16x16xf32>, vector<16x16xf32>, vector<16x16xf32>, vector<16x16xf32> -> vector<16x64xf32>
    %109 = vector.extract_strided_slice %45 {offsets = [16, 0], sizes = [16, 16], strides = [1, 1]} : vector<32x64xf32> to vector<16x16xf32>
    %110 = vector.extract_strided_slice %46 {offsets = [16, 0], sizes = [16, 16], strides = [1, 1]} : vector<32x64xf32> to vector<16x16xf32>
    %111 = vector.extract_strided_slice %47 {offsets = [16, 0], sizes = [16, 16], strides = [1, 1]} : vector<32x64xf32> to vector<16x16xf32>
    %cst_43 = arith.constant dense<0.000000e+00> : vector<16x16xf32>
    %112 = tpu.matmul %109, %110, %cst_43 {dimension_numbers = #tpu.dot_dimension_numbers<[1], [1], [0], [0], [0, 0, 1, 0], [], []>} : vector<16x16xf32>, vector<16x16xf32>, vector<16x16xf32> -> vector<16x16xf32>
    %cst_44 = arith.constant dense<0xFF800000> : vector<16xf32>
    %113 = vector.multi_reduction <maximumf>, %112, %cst_44 [1] : vector<16x16xf32> to vector<16xf32>
    %114 = vector.shape_cast %113 : vector<16xf32> to vector<16x1xf32>
    %115 = vector.broadcast %114 : vector<16x1xf32> to vector<16x16xf32>
    %116 = arith.subf %112, %115 : vector<16x16xf32>
    %117 = math.exp %116 : vector<16x16xf32>
    %cst_45 = arith.constant dense<0.000000e+00> : vector<16xf32>
    %118 = vector.multi_reduction <add>, %117, %cst_45 [1] : vector<16x16xf32> to vector<16xf32>
    %119 = vector.shape_cast %118 : vector<16xf32> to vector<16x1xf32>
    %120 = tpu.reciprocal %119 {approx = true} : vector<16x1xf32> -> vector<16x1xf32>
    %121 = vector.broadcast %120 : vector<16x1xf32> to vector<16x16xf32>
    %122 = arith.mulf %117, %121 : vector<16x16xf32>
    %cst_46 = arith.constant dense<0.000000e+00> : vector<16x16xf32>
    %123 = tpu.matmul %122, %111, %cst_46 {dimension_numbers = #tpu.dot_dimension_numbers<[1], [0], [0], [1], [0, 0, 1, 1], [], []>} : vector<16x16xf32>, vector<16x16xf32>, vector<16x16xf32> -> vector<16x16xf32>
    %124 = vector.extract_strided_slice %45 {offsets = [16, 16], sizes = [16, 16], strides = [1, 1]} : vector<32x64xf32> to vector<16x16xf32>
    %125 = vector.extract_strided_slice %46 {offsets = [16, 16], sizes = [16, 16], strides = [1, 1]} : vector<32x64xf32> to vector<16x16xf32>
    %126 = vector.extract_strided_slice %47 {offsets = [16, 16], sizes = [16, 16], strides = [1, 1]} : vector<32x64xf32> to vector<16x16xf32>
    %cst_47 = arith.constant dense<0.000000e+00> : vector<16x16xf32>
    %127 = tpu.matmul %124, %125, %cst_47 {dimension_numbers = #tpu.dot_dimension_numbers<[1], [1], [0], [0], [0, 0, 1, 0], [], []>} : vector<16x16xf32>, vector<16x16xf32>, vector<16x16xf32> -> vector<16x16xf32>
    %cst_48 = arith.constant dense<0xFF800000> : vector<16xf32>
    %128 = vector.multi_reduction <maximumf>, %127, %cst_48 [1] : vector<16x16xf32> to vector<16xf32>
    %129 = vector.shape_cast %128 : vector<16xf32> to vector<16x1xf32>
    %130 = vector.broadcast %129 : vector<16x1xf32> to vector<16x16xf32>
    %131 = arith.subf %127, %130 : vector<16x16xf32>
    %132 = math.exp %131 : vector<16x16xf32>
    %cst_49 = arith.constant dense<0.000000e+00> : vector<16xf32>
    %133 = vector.multi_reduction <add>, %132, %cst_49 [1] : vector<16x16xf32> to vector<16xf32>
    %134 = vector.shape_cast %133 : vector<16xf32> to vector<16x1xf32>
    %135 = tpu.reciprocal %134 {approx = true} : vector<16x1xf32> -> vector<16x1xf32>
    %136 = vector.broadcast %135 : vector<16x1xf32> to vector<16x16xf32>
    %137 = arith.mulf %132, %136 : vector<16x16xf32>
    %cst_50 = arith.constant dense<0.000000e+00> : vector<16x16xf32>
    %138 = tpu.matmul %137, %126, %cst_50 {dimension_numbers = #tpu.dot_dimension_numbers<[1], [0], [0], [1], [0, 0, 1, 1], [], []>} : vector<16x16xf32>, vector<16x16xf32>, vector<16x16xf32> -> vector<16x16xf32>
    %139 = vector.extract_strided_slice %45 {offsets = [16, 32], sizes = [16, 16], strides = [1, 1]} : vector<32x64xf32> to vector<16x16xf32>
    %140 = vector.extract_strided_slice %46 {offsets = [16, 32], sizes = [16, 16], strides = [1, 1]} : vector<32x64xf32> to vector<16x16xf32>
    %141 = vector.extract_strided_slice %47 {offsets = [16, 32], sizes = [16, 16], strides = [1, 1]} : vector<32x64xf32> to vector<16x16xf32>
    %cst_51 = arith.constant dense<0.000000e+00> : vector<16x16xf32>
    %142 = tpu.matmul %139, %140, %cst_51 {dimension_numbers = #tpu.dot_dimension_numbers<[1], [1], [0], [0], [0, 0, 1, 0], [], []>} : vector<16x16xf32>, vector<16x16xf32>, vector<16x16xf32> -> vector<16x16xf32>
    %cst_52 = arith.constant dense<0xFF800000> : vector<16xf32>
    %143 = vector.multi_reduction <maximumf>, %142, %cst_52 [1] : vector<16x16xf32> to vector<16xf32>
    %144 = vector.shape_cast %143 : vector<16xf32> to vector<16x1xf32>
    %145 = vector.broadcast %144 : vector<16x1xf32> to vector<16x16xf32>
    %146 = arith.subf %142, %145 : vector<16x16xf32>
    %147 = math.exp %146 : vector<16x16xf32>
    %cst_53 = arith.constant dense<0.000000e+00> : vector<16xf32>
    %148 = vector.multi_reduction <add>, %147, %cst_53 [1] : vector<16x16xf32> to vector<16xf32>
    %149 = vector.shape_cast %148 : vector<16xf32> to vector<16x1xf32>
    %150 = tpu.reciprocal %149 {approx = true} : vector<16x1xf32> -> vector<16x1xf32>
    %151 = vector.broadcast %150 : vector<16x1xf32> to vector<16x16xf32>
    %152 = arith.mulf %147, %151 : vector<16x16xf32>
    %cst_54 = arith.constant dense<0.000000e+00> : vector<16x16xf32>
    %153 = tpu.matmul %152, %141, %cst_54 {dimension_numbers = #tpu.dot_dimension_numbers<[1], [0], [0], [1], [0, 0, 1, 1], [], []>} : vector<16x16xf32>, vector<16x16xf32>, vector<16x16xf32> -> vector<16x16xf32>
    %154 = vector.extract_strided_slice %45 {offsets = [16, 48], sizes = [16, 16], strides = [1, 1]} : vector<32x64xf32> to vector<16x16xf32>
    %155 = vector.extract_strided_slice %46 {offsets = [16, 48], sizes = [16, 16], strides = [1, 1]} : vector<32x64xf32> to vector<16x16xf32>
    %156 = vector.extract_strided_slice %47 {offsets = [16, 48], sizes = [16, 16], strides = [1, 1]} : vector<32x64xf32> to vector<16x16xf32>
    %cst_55 = arith.constant dense<0.000000e+00> : vector<16x16xf32>
    %157 = tpu.matmul %154, %155, %cst_55 {dimension_numbers = #tpu.dot_dimension_numbers<[1], [1], [0], [0], [0, 0, 1, 0], [], []>} : vector<16x16xf32>, vector<16x16xf32>, vector<16x16xf32> -> vector<16x16xf32>
    %cst_56 = arith.constant dense<0xFF800000> : vector<16xf32>
    %158 = vector.multi_reduction <maximumf>, %157, %cst_56 [1] : vector<16x16xf32> to vector<16xf32>
    %159 = vector.shape_cast %158 : vector<16xf32> to vector<16x1xf32>
    %160 = vector.broadcast %159 : vector<16x1xf32> to vector<16x16xf32>
    %161 = arith.subf %157, %160 : vector<16x16xf32>
    %162 = math.exp %161 : vector<16x16xf32>
    %cst_57 = arith.constant dense<0.000000e+00> : vector<16xf32>
    %163 = vector.multi_reduction <add>, %162, %cst_57 [1] : vector<16x16xf32> to vector<16xf32>
    %164 = vector.shape_cast %163 : vector<16xf32> to vector<16x1xf32>
    %165 = tpu.reciprocal %164 {approx = true} : vector<16x1xf32> -> vector<16x1xf32>
    %166 = vector.broadcast %165 : vector<16x1xf32> to vector<16x16xf32>
    %167 = arith.mulf %162, %166 : vector<16x16xf32>
    %cst_58 = arith.constant dense<0.000000e+00> : vector<16x16xf32>
    %168 = tpu.matmul %167, %156, %cst_58 {dimension_numbers = #tpu.dot_dimension_numbers<[1], [0], [0], [1], [0, 0, 1, 1], [], []>} : vector<16x16xf32>, vector<16x16xf32>, vector<16x16xf32> -> vector<16x16xf32>
    %169 = tpu.concatenate %123, %138, %153, %168 in 1 : vector<16x16xf32>, vector<16x16xf32>, vector<16x16xf32>, vector<16x16xf32> -> vector<16x64xf32>
    %170 = tpu.concatenate %108, %169 in 0 : vector<16x64xf32>, vector<16x64xf32> -> vector<32x64xf32>
    %c0_59 = arith.constant 0 : index
    %c0_60 = arith.constant 0 : index
    %c0_61 = arith.constant 0 : index
    %171 = vector.load %arg9[%c0_59, %c0_60, %c0_61] : memref<2x64x64xf32, #tpu.memory_space<vmem>>, vector<1x64x64xf32>
    %172 = vector.shape_cast %171 : vector<1x64x64xf32> to vector<64x64xf32>
    %cst_62 = arith.constant dense<0.000000e+00> : vector<32x64xf32>
    %173 = tpu.matmul %170, %172, %cst_62 {dimension_numbers = #tpu.dot_dimension_numbers<[1], [0], [0], [1], [0, 0, 1, 1], [], []>} : vector<32x64xf32>, vector<64x64xf32>, vector<32x64xf32> -> vector<32x64xf32>
    %c0_63 = arith.constant 0 : index
    %c0_64 = arith.constant 0 : index
    %c0_65 = arith.constant 0 : index
    %174 = vector.load %arg10[%c0_63, %c0_64, %c0_65] : memref<2x1x64xf32, #tpu.memory_space<vmem>>, vector<1x1x64xf32>
    %175 = vector.shape_cast %174 : vector<1x1x64xf32> to vector<1x64xf32>
    %176 = vector.broadcast %175 : vector<1x64xf32> to vector<32x64xf32>
    %177 = arith.addf %173, %176 : vector<32x64xf32>
    %178 = arith.addf %9, %177 : vector<32x64xf32>
    %c0_66 = arith.constant 0 : index
    %c0_67 = arith.constant 0 : index
    %c0_68 = arith.constant 0 : index
    %179 = vector.load %arg11[%c0_66, %c0_67, %c0_68] : memref<2x1x64xf32, #tpu.memory_space<vmem>>, vector<1x1x64xf32>
    %180 = vector.shape_cast %179 : vector<1x1x64xf32> to vector<1x64xf32>
    %c0_69 = arith.constant 0 : index
    %c0_70 = arith.constant 0 : index
    %c0_71 = arith.constant 0 : index
    %181 = vector.load %arg12[%c0_69, %c0_70, %c0_71] : memref<2x1x64xf32, #tpu.memory_space<vmem>>, vector<1x1x64xf32>
    %182 = vector.shape_cast %181 : vector<1x1x64xf32> to vector<1x64xf32>
    %cst_72 = arith.constant dense<0.000000e+00> : vector<32xf32>
    %183 = vector.multi_reduction <add>, %178, %cst_72 [1] : vector<32x64xf32> to vector<32xf32>
    %184 = vector.shape_cast %183 : vector<32xf32> to vector<32x1xf32>
    %cst_73 = arith.constant 6.400000e+01 : f32
    %185 = vector.broadcast %cst_73 : f32 to vector<32x1xf32>
    %186 = arith.divf %184, %185 : vector<32x1xf32>
    %187 = vector.broadcast %186 : vector<32x1xf32> to vector<32x64xf32>
    %188 = arith.subf %178, %187 : vector<32x64xf32>
    %189 = arith.mulf %188, %188 : vector<32x64xf32>
    %cst_74 = arith.constant dense<0.000000e+00> : vector<32xf32>
    %190 = vector.multi_reduction <add>, %189, %cst_74 [1] : vector<32x64xf32> to vector<32xf32>
    %191 = vector.shape_cast %190 : vector<32xf32> to vector<32x1xf32>
    %cst_75 = arith.constant 6.400000e+01 : f32
    %192 = vector.broadcast %cst_75 : f32 to vector<32x1xf32>
    %193 = arith.divf %191, %192 : vector<32x1xf32>
    %194 = vector.broadcast %186 : vector<32x1xf32> to vector<32x64xf32>
    %195 = arith.subf %178, %194 : vector<32x64xf32>
    %cst_76 = arith.constant 9.99999974E-6 : f32
    %196 = vector.broadcast %cst_76 : f32 to vector<32x1xf32>
    %197 = arith.addf %193, %196 : vector<32x1xf32>
    %198 = math.rsqrt %197 : vector<32x1xf32>
    %199 = vector.broadcast %198 : vector<32x1xf32> to vector<32x64xf32>
    %200 = arith.mulf %195, %199 : vector<32x64xf32>
    %201 = vector.broadcast %180 : vector<1x64xf32> to vector<32x64xf32>
    %202 = arith.mulf %200, %201 : vector<32x64xf32>
    %203 = vector.broadcast %182 : vector<1x64xf32> to vector<32x64xf32>
    %204 = arith.addf %202, %203 : vector<32x64xf32>
    %c0_77 = arith.constant 0 : index
    %c0_78 = arith.constant 0 : index
    %c0_79 = arith.constant 0 : index
    %205 = vector.load %arg13[%c0_77, %c0_78, %c0_79] : memref<2x64x256xf32, #tpu.memory_space<vmem>>, vector<1x64x256xf32>
    %206 = vector.shape_cast %205 : vector<1x64x256xf32> to vector<64x256xf32>
    %cst_80 = arith.constant dense<0.000000e+00> : vector<32x256xf32>
    %207 = tpu.matmul %204, %206, %cst_80 {dimension_numbers = #tpu.dot_dimension_numbers<[1], [0], [0], [1], [0, 0, 1, 1], [], []>} : vector<32x64xf32>, vector<64x256xf32>, vector<32x256xf32> -> vector<32x256xf32>
    %c0_81 = arith.constant 0 : index
    %c0_82 = arith.constant 0 : index
    %c0_83 = arith.constant 0 : index
    %208 = vector.load %arg14[%c0_81, %c0_82, %c0_83] : memref<2x1x256xf32, #tpu.memory_space<vmem>>, vector<1x1x256xf32>
    %209 = vector.shape_cast %208 : vector<1x1x256xf32> to vector<1x256xf32>
    %210 = vector.broadcast %209 : vector<1x256xf32> to vector<32x256xf32>
    %211 = arith.addf %207, %210 : vector<32x256xf32>
    %cst_84 = arith.constant 1.702000e+00 : f32
    %212 = vector.broadcast %cst_84 : f32 to vector<32x256xf32>
    %213 = arith.mulf %212, %211 : vector<32x256xf32>
    %214 = arith.negf %213 : vector<32x256xf32>
    %215 = math.exp %214 : vector<32x256xf32>
    %cst_85 = arith.constant 1.000000e+00 : f32
    %216 = vector.broadcast %cst_85 : f32 to vector<32x256xf32>
    %217 = arith.addf %216, %215 : vector<32x256xf32>
    %218 = arith.divf %216, %217 : vector<32x256xf32>
    %219 = arith.mulf %211, %218 : vector<32x256xf32>
    %c0_86 = arith.constant 0 : index
    %c0_87 = arith.constant 0 : index
    %c0_88 = arith.constant 0 : index
    %220 = vector.load %arg15[%c0_86, %c0_87, %c0_88] : memref<2x256x64xf32, #tpu.memory_space<vmem>>, vector<1x256x64xf32>
    %221 = vector.shape_cast %220 : vector<1x256x64xf32> to vector<256x64xf32>
    %cst_89 = arith.constant dense<0.000000e+00> : vector<32x64xf32>
    %222 = tpu.matmul %219, %221, %cst_89 {dimension_numbers = #tpu.dot_dimension_numbers<[1], [0], [0], [1], [0, 0, 1, 1], [], []>} : vector<32x256xf32>, vector<256x64xf32>, vector<32x64xf32> -> vector<32x64xf32>
    %c0_90 = arith.constant 0 : index
    %c0_91 = arith.constant 0 : index
    %c0_92 = arith.constant 0 : index
    %223 = vector.load %arg16[%c0_90, %c0_91, %c0_92] : memref<2x1x64xf32, #tpu.memory_space<vmem>>, vector<1x1x64xf32>
    %224 = vector.shape_cast %223 : vector<1x1x64xf32> to vector<1x64xf32>
    %225 = vector.broadcast %224 : vector<1x64xf32> to vector<32x64xf32>
    %226 = arith.addf %222, %225 : vector<32x64xf32>
    %227 = arith.addf %178, %226 : vector<32x64xf32>
    %c1 = arith.constant 1 : index
    %c0_93 = arith.constant 0 : index
    %c0_94 = arith.constant 0 : index
    %228 = vector.load %arg5[%c1, %c0_93, %c0_94] : memref<2x1x64xf32, #tpu.memory_space<vmem>>, vector<1x1x64xf32>
    %229 = vector.shape_cast %228 : vector<1x1x64xf32> to vector<1x64xf32>
    %c1_95 = arith.constant 1 : index
    %c0_96 = arith.constant 0 : index
    %c0_97 = arith.constant 0 : index
    %230 = vector.load %arg6[%c1_95, %c0_96, %c0_97] : memref<2x1x64xf32, #tpu.memory_space<vmem>>, vector<1x1x64xf32>
    %231 = vector.shape_cast %230 : vector<1x1x64xf32> to vector<1x64xf32>
    %cst_98 = arith.constant dense<0.000000e+00> : vector<32xf32>
    %232 = vector.multi_reduction <add>, %227, %cst_98 [1] : vector<32x64xf32> to vector<32xf32>
    %233 = vector.shape_cast %232 : vector<32xf32> to vector<32x1xf32>
    %cst_99 = arith.constant 6.400000e+01 : f32
    %234 = vector.broadcast %cst_99 : f32 to vector<32x1xf32>
    %235 = arith.divf %233, %234 : vector<32x1xf32>
    %236 = vector.broadcast %235 : vector<32x1xf32> to vector<32x64xf32>
    %237 = arith.subf %227, %236 : vector<32x64xf32>
    %238 = arith.mulf %237, %237 : vector<32x64xf32>
    %cst_100 = arith.constant dense<0.000000e+00> : vector<32xf32>
    %239 = vector.multi_reduction <add>, %238, %cst_100 [1] : vector<32x64xf32> to vector<32xf32>
    %240 = vector.shape_cast %239 : vector<32xf32> to vector<32x1xf32>
    %cst_101 = arith.constant 6.400000e+01 : f32
    %241 = vector.broadcast %cst_101 : f32 to vector<32x1xf32>
    %242 = arith.divf %240, %241 : vector<32x1xf32>
    %243 = vector.broadcast %235 : vector<32x1xf32> to vector<32x64xf32>
    %244 = arith.subf %227, %243 : vector<32x64xf32>
    %cst_102 = arith.constant 9.99999974E-6 : f32
    %245 = vector.broadcast %cst_102 : f32 to vector<32x1xf32>
    %246 = arith.addf %242, %245 : vector<32x1xf32>
    %247 = math.rsqrt %246 : vector<32x1xf32>
    %248 = vector.broadcast %247 : vector<32x1xf32> to vector<32x64xf32>
    %249 = arith.mulf %244, %248 : vector<32x64xf32>
    %250 = vector.broadcast %229 : vector<1x64xf32> to vector<32x64xf32>
    %251 = arith.mulf %249, %250 : vector<32x64xf32>
    %252 = vector.broadcast %231 : vector<1x64xf32> to vector<32x64xf32>
    %253 = arith.addf %251, %252 : vector<32x64xf32>
    %c1_103 = arith.constant 1 : index
    %c0_104 = arith.constant 0 : index
    %c0_105 = arith.constant 0 : index
    %254 = vector.load %arg7[%c1_103, %c0_104, %c0_105] : memref<2x64x192xf32, #tpu.memory_space<vmem>>, vector<1x64x192xf32>
    %255 = vector.shape_cast %254 : vector<1x64x192xf32> to vector<64x192xf32>
    %cst_106 = arith.constant dense<0.000000e+00> : vector<32x192xf32>
    %256 = tpu.matmul %253, %255, %cst_106 {dimension_numbers = #tpu.dot_dimension_numbers<[1], [0], [0], [1], [0, 0, 1, 1], [], []>} : vector<32x64xf32>, vector<64x192xf32>, vector<32x192xf32> -> vector<32x192xf32>
    %c1_107 = arith.constant 1 : index
    %c0_108 = arith.constant 0 : index
    %c0_109 = arith.constant 0 : index
    %257 = vector.load %arg8[%c1_107, %c0_108, %c0_109] : memref<2x1x192xf32, #tpu.memory_space<vmem>>, vector<1x1x192xf32>
    %258 = vector.shape_cast %257 : vector<1x1x192xf32> to vector<1x192xf32>
    %259 = vector.broadcast %258 : vector<1x192xf32> to vector<32x192xf32>
    %260 = arith.addf %256, %259 : vector<32x192xf32>
    %261 = vector.extract_strided_slice %260 {offsets = [0, 0], sizes = [32, 64], strides = [1, 1]} : vector<32x192xf32> to vector<32x64xf32>
    %cst_110 = arith.constant 2.500000e-01 : f32
    %262 = vector.broadcast %cst_110 : f32 to vector<32x64xf32>
    %263 = arith.mulf %261, %262 : vector<32x64xf32>
    %264 = vector.extract_strided_slice %260 {offsets = [0, 64], sizes = [32, 64], strides = [1, 1]} : vector<32x192xf32> to vector<32x64xf32>
    %265 = vector.extract_strided_slice %260 {offsets = [0, 128], sizes = [32, 64], strides = [1, 1]} : vector<32x192xf32> to vector<32x64xf32>
    %266 = vector.extract_strided_slice %263 {offsets = [0, 0], sizes = [16, 16], strides = [1, 1]} : vector<32x64xf32> to vector<16x16xf32>
    %267 = vector.extract_strided_slice %264 {offsets = [0, 0], sizes = [16, 16], strides = [1, 1]} : vector<32x64xf32> to vector<16x16xf32>
    %268 = vector.extract_strided_slice %265 {offsets = [0, 0], sizes = [16, 16], strides = [1, 1]} : vector<32x64xf32> to vector<16x16xf32>
    %cst_111 = arith.constant dense<0.000000e+00> : vector<16x16xf32>
    %269 = tpu.matmul %266, %267, %cst_111 {dimension_numbers = #tpu.dot_dimension_numbers<[1], [1], [0], [0], [0, 0, 1, 0], [], []>} : vector<16x16xf32>, vector<16x16xf32>, vector<16x16xf32> -> vector<16x16xf32>
    %cst_112 = arith.constant dense<0xFF800000> : vector<16xf32>
    %270 = vector.multi_reduction <maximumf>, %269, %cst_112 [1] : vector<16x16xf32> to vector<16xf32>
    %271 = vector.shape_cast %270 : vector<16xf32> to vector<16x1xf32>
    %272 = vector.broadcast %271 : vector<16x1xf32> to vector<16x16xf32>
    %273 = arith.subf %269, %272 : vector<16x16xf32>
    %274 = math.exp %273 : vector<16x16xf32>
    %cst_113 = arith.constant dense<0.000000e+00> : vector<16xf32>
    %275 = vector.multi_reduction <add>, %274, %cst_113 [1] : vector<16x16xf32> to vector<16xf32>
    %276 = vector.shape_cast %275 : vector<16xf32> to vector<16x1xf32>
    %277 = tpu.reciprocal %276 {approx = true} : vector<16x1xf32> -> vector<16x1xf32>
    %278 = vector.broadcast %277 : vector<16x1xf32> to vector<16x16xf32>
    %279 = arith.mulf %274, %278 : vector<16x16xf32>
    %cst_114 = arith.constant dense<0.000000e+00> : vector<16x16xf32>
    %280 = tpu.matmul %279, %268, %cst_114 {dimension_numbers = #tpu.dot_dimension_numbers<[1], [0], [0], [1], [0, 0, 1, 1], [], []>} : vector<16x16xf32>, vector<16x16xf32>, vector<16x16xf32> -> vector<16x16xf32>
    %281 = vector.extract_strided_slice %263 {offsets = [0, 16], sizes = [16, 16], strides = [1, 1]} : vector<32x64xf32> to vector<16x16xf32>
    %282 = vector.extract_strided_slice %264 {offsets = [0, 16], sizes = [16, 16], strides = [1, 1]} : vector<32x64xf32> to vector<16x16xf32>
    %283 = vector.extract_strided_slice %265 {offsets = [0, 16], sizes = [16, 16], strides = [1, 1]} : vector<32x64xf32> to vector<16x16xf32>
    %cst_115 = arith.constant dense<0.000000e+00> : vector<16x16xf32>
    %284 = tpu.matmul %281, %282, %cst_115 {dimension_numbers = #tpu.dot_dimension_numbers<[1], [1], [0], [0], [0, 0, 1, 0], [], []>} : vector<16x16xf32>, vector<16x16xf32>, vector<16x16xf32> -> vector<16x16xf32>
    %cst_116 = arith.constant dense<0xFF800000> : vector<16xf32>
    %285 = vector.multi_reduction <maximumf>, %284, %cst_116 [1] : vector<16x16xf32> to vector<16xf32>
    %286 = vector.shape_cast %285 : vector<16xf32> to vector<16x1xf32>
    %287 = vector.broadcast %286 : vector<16x1xf32> to vector<16x16xf32>
    %288 = arith.subf %284, %287 : vector<16x16xf32>
    %289 = math.exp %288 : vector<16x16xf32>
    %cst_117 = arith.constant dense<0.000000e+00> : vector<16xf32>
    %290 = vector.multi_reduction <add>, %289, %cst_117 [1] : vector<16x16xf32> to vector<16xf32>
    %291 = vector.shape_cast %290 : vector<16xf32> to vector<16x1xf32>
    %292 = tpu.reciprocal %291 {approx = true} : vector<16x1xf32> -> vector<16x1xf32>
    %293 = vector.broadcast %292 : vector<16x1xf32> to vector<16x16xf32>
    %294 = arith.mulf %289, %293 : vector<16x16xf32>
    %cst_118 = arith.constant dense<0.000000e+00> : vector<16x16xf32>
    %295 = tpu.matmul %294, %283, %cst_118 {dimension_numbers = #tpu.dot_dimension_numbers<[1], [0], [0], [1], [0, 0, 1, 1], [], []>} : vector<16x16xf32>, vector<16x16xf32>, vector<16x16xf32> -> vector<16x16xf32>
    %296 = vector.extract_strided_slice %263 {offsets = [0, 32], sizes = [16, 16], strides = [1, 1]} : vector<32x64xf32> to vector<16x16xf32>
    %297 = vector.extract_strided_slice %264 {offsets = [0, 32], sizes = [16, 16], strides = [1, 1]} : vector<32x64xf32> to vector<16x16xf32>
    %298 = vector.extract_strided_slice %265 {offsets = [0, 32], sizes = [16, 16], strides = [1, 1]} : vector<32x64xf32> to vector<16x16xf32>
    %cst_119 = arith.constant dense<0.000000e+00> : vector<16x16xf32>
    %299 = tpu.matmul %296, %297, %cst_119 {dimension_numbers = #tpu.dot_dimension_numbers<[1], [1], [0], [0], [0, 0, 1, 0], [], []>} : vector<16x16xf32>, vector<16x16xf32>, vector<16x16xf32> -> vector<16x16xf32>
    %cst_120 = arith.constant dense<0xFF800000> : vector<16xf32>
    %300 = vector.multi_reduction <maximumf>, %299, %cst_120 [1] : vector<16x16xf32> to vector<16xf32>
    %301 = vector.shape_cast %300 : vector<16xf32> to vector<16x1xf32>
    %302 = vector.broadcast %301 : vector<16x1xf32> to vector<16x16xf32>
    %303 = arith.subf %299, %302 : vector<16x16xf32>
    %304 = math.exp %303 : vector<16x16xf32>
    %cst_121 = arith.constant dense<0.000000e+00> : vector<16xf32>
    %305 = vector.multi_reduction <add>, %304, %cst_121 [1] : vector<16x16xf32> to vector<16xf32>
    %306 = vector.shape_cast %305 : vector<16xf32> to vector<16x1xf32>
    %307 = tpu.reciprocal %306 {approx = true} : vector<16x1xf32> -> vector<16x1xf32>
    %308 = vector.broadcast %307 : vector<16x1xf32> to vector<16x16xf32>
    %309 = arith.mulf %304, %308 : vector<16x16xf32>
    %cst_122 = arith.constant dense<0.000000e+00> : vector<16x16xf32>
    %310 = tpu.matmul %309, %298, %cst_122 {dimension_numbers = #tpu.dot_dimension_numbers<[1], [0], [0], [1], [0, 0, 1, 1], [], []>} : vector<16x16xf32>, vector<16x16xf32>, vector<16x16xf32> -> vector<16x16xf32>
    %311 = vector.extract_strided_slice %263 {offsets = [0, 48], sizes = [16, 16], strides = [1, 1]} : vector<32x64xf32> to vector<16x16xf32>
    %312 = vector.extract_strided_slice %264 {offsets = [0, 48], sizes = [16, 16], strides = [1, 1]} : vector<32x64xf32> to vector<16x16xf32>
    %313 = vector.extract_strided_slice %265 {offsets = [0, 48], sizes = [16, 16], strides = [1, 1]} : vector<32x64xf32> to vector<16x16xf32>
    %cst_123 = arith.constant dense<0.000000e+00> : vector<16x16xf32>
    %314 = tpu.matmul %311, %312, %cst_123 {dimension_numbers = #tpu.dot_dimension_numbers<[1], [1], [0], [0], [0, 0, 1, 0], [], []>} : vector<16x16xf32>, vector<16x16xf32>, vector<16x16xf32> -> vector<16x16xf32>
    %cst_124 = arith.constant dense<0xFF800000> : vector<16xf32>
    %315 = vector.multi_reduction <maximumf>, %314, %cst_124 [1] : vector<16x16xf32> to vector<16xf32>
    %316 = vector.shape_cast %315 : vector<16xf32> to vector<16x1xf32>
    %317 = vector.broadcast %316 : vector<16x1xf32> to vector<16x16xf32>
    %318 = arith.subf %314, %317 : vector<16x16xf32>
    %319 = math.exp %318 : vector<16x16xf32>
    %cst_125 = arith.constant dense<0.000000e+00> : vector<16xf32>
    %320 = vector.multi_reduction <add>, %319, %cst_125 [1] : vector<16x16xf32> to vector<16xf32>
    %321 = vector.shape_cast %320 : vector<16xf32> to vector<16x1xf32>
    %322 = tpu.reciprocal %321 {approx = true} : vector<16x1xf32> -> vector<16x1xf32>
    %323 = vector.broadcast %322 : vector<16x1xf32> to vector<16x16xf32>
    %324 = arith.mulf %319, %323 : vector<16x16xf32>
    %cst_126 = arith.constant dense<0.000000e+00> : vector<16x16xf32>
    %325 = tpu.matmul %324, %313, %cst_126 {dimension_numbers = #tpu.dot_dimension_numbers<[1], [0], [0], [1], [0, 0, 1, 1], [], []>} : vector<16x16xf32>, vector<16x16xf32>, vector<16x16xf32> -> vector<16x16xf32>
    %326 = tpu.concatenate %280, %295, %310, %325 in 1 : vector<16x16xf32>, vector<16x16xf32>, vector<16x16xf32>, vector<16x16xf32> -> vector<16x64xf32>
    %327 = vector.extract_strided_slice %263 {offsets = [16, 0], sizes = [16, 16], strides = [1, 1]} : vector<32x64xf32> to vector<16x16xf32>
    %328 = vector.extract_strided_slice %264 {offsets = [16, 0], sizes = [16, 16], strides = [1, 1]} : vector<32x64xf32> to vector<16x16xf32>
    %329 = vector.extract_strided_slice %265 {offsets = [16, 0], sizes = [16, 16], strides = [1, 1]} : vector<32x64xf32> to vector<16x16xf32>
    %cst_127 = arith.constant dense<0.000000e+00> : vector<16x16xf32>
    %330 = tpu.matmul %327, %328, %cst_127 {dimension_numbers = #tpu.dot_dimension_numbers<[1], [1], [0], [0], [0, 0, 1, 0], [], []>} : vector<16x16xf32>, vector<16x16xf32>, vector<16x16xf32> -> vector<16x16xf32>
    %cst_128 = arith.constant dense<0xFF800000> : vector<16xf32>
    %331 = vector.multi_reduction <maximumf>, %330, %cst_128 [1] : vector<16x16xf32> to vector<16xf32>
    %332 = vector.shape_cast %331 : vector<16xf32> to vector<16x1xf32>
    %333 = vector.broadcast %332 : vector<16x1xf32> to vector<16x16xf32>
    %334 = arith.subf %330, %333 : vector<16x16xf32>
    %335 = math.exp %334 : vector<16x16xf32>
    %cst_129 = arith.constant dense<0.000000e+00> : vector<16xf32>
    %336 = vector.multi_reduction <add>, %335, %cst_129 [1] : vector<16x16xf32> to vector<16xf32>
    %337 = vector.shape_cast %336 : vector<16xf32> to vector<16x1xf32>
    %338 = tpu.reciprocal %337 {approx = true} : vector<16x1xf32> -> vector<16x1xf32>
    %339 = vector.broadcast %338 : vector<16x1xf32> to vector<16x16xf32>
    %340 = arith.mulf %335, %339 : vector<16x16xf32>
    %cst_130 = arith.constant dense<0.000000e+00> : vector<16x16xf32>
    %341 = tpu.matmul %340, %329, %cst_130 {dimension_numbers = #tpu.dot_dimension_numbers<[1], [0], [0], [1], [0, 0, 1, 1], [], []>} : vector<16x16xf32>, vector<16x16xf32>, vector<16x16xf32> -> vector<16x16xf32>
    %342 = vector.extract_strided_slice %263 {offsets = [16, 16], sizes = [16, 16], strides = [1, 1]} : vector<32x64xf32> to vector<16x16xf32>
    %343 = vector.extract_strided_slice %264 {offsets = [16, 16], sizes = [16, 16], strides = [1, 1]} : vector<32x64xf32> to vector<16x16xf32>
    %344 = vector.extract_strided_slice %265 {offsets = [16, 16], sizes = [16, 16], strides = [1, 1]} : vector<32x64xf32> to vector<16x16xf32>
    %cst_131 = arith.constant dense<0.000000e+00> : vector<16x16xf32>
    %345 = tpu.matmul %342, %343, %cst_131 {dimension_numbers = #tpu.dot_dimension_numbers<[1], [1], [0], [0], [0, 0, 1, 0], [], []>} : vector<16x16xf32>, vector<16x16xf32>, vector<16x16xf32> -> vector<16x16xf32>
    %cst_132 = arith.constant dense<0xFF800000> : vector<16xf32>
    %346 = vector.multi_reduction <maximumf>, %345, %cst_132 [1] : vector<16x16xf32> to vector<16xf32>
    %347 = vector.shape_cast %346 : vector<16xf32> to vector<16x1xf32>
    %348 = vector.broadcast %347 : vector<16x1xf32> to vector<16x16xf32>
    %349 = arith.subf %345, %348 : vector<16x16xf32>
    %350 = math.exp %349 : vector<16x16xf32>
    %cst_133 = arith.constant dense<0.000000e+00> : vector<16xf32>
    %351 = vector.multi_reduction <add>, %350, %cst_133 [1] : vector<16x16xf32> to vector<16xf32>
    %352 = vector.shape_cast %351 : vector<16xf32> to vector<16x1xf32>
    %353 = tpu.reciprocal %352 {approx = true} : vector<16x1xf32> -> vector<16x1xf32>
    %354 = vector.broadcast %353 : vector<16x1xf32> to vector<16x16xf32>
    %355 = arith.mulf %350, %354 : vector<16x16xf32>
    %cst_134 = arith.constant dense<0.000000e+00> : vector<16x16xf32>
    %356 = tpu.matmul %355, %344, %cst_134 {dimension_numbers = #tpu.dot_dimension_numbers<[1], [0], [0], [1], [0, 0, 1, 1], [], []>} : vector<16x16xf32>, vector<16x16xf32>, vector<16x16xf32> -> vector<16x16xf32>
    %357 = vector.extract_strided_slice %263 {offsets = [16, 32], sizes = [16, 16], strides = [1, 1]} : vector<32x64xf32> to vector<16x16xf32>
    %358 = vector.extract_strided_slice %264 {offsets = [16, 32], sizes = [16, 16], strides = [1, 1]} : vector<32x64xf32> to vector<16x16xf32>
    %359 = vector.extract_strided_slice %265 {offsets = [16, 32], sizes = [16, 16], strides = [1, 1]} : vector<32x64xf32> to vector<16x16xf32>
    %cst_135 = arith.constant dense<0.000000e+00> : vector<16x16xf32>
    %360 = tpu.matmul %357, %358, %cst_135 {dimension_numbers = #tpu.dot_dimension_numbers<[1], [1], [0], [0], [0, 0, 1, 0], [], []>} : vector<16x16xf32>, vector<16x16xf32>, vector<16x16xf32> -> vector<16x16xf32>
    %cst_136 = arith.constant dense<0xFF800000> : vector<16xf32>
    %361 = vector.multi_reduction <maximumf>, %360, %cst_136 [1] : vector<16x16xf32> to vector<16xf32>
    %362 = vector.shape_cast %361 : vector<16xf32> to vector<16x1xf32>
    %363 = vector.broadcast %362 : vector<16x1xf32> to vector<16x16xf32>
    %364 = arith.subf %360, %363 : vector<16x16xf32>
    %365 = math.exp %364 : vector<16x16xf32>
    %cst_137 = arith.constant dense<0.000000e+00> : vector<16xf32>
    %366 = vector.multi_reduction <add>, %365, %cst_137 [1] : vector<16x16xf32> to vector<16xf32>
    %367 = vector.shape_cast %366 : vector<16xf32> to vector<16x1xf32>
    %368 = tpu.reciprocal %367 {approx = true} : vector<16x1xf32> -> vector<16x1xf32>
    %369 = vector.broadcast %368 : vector<16x1xf32> to vector<16x16xf32>
    %370 = arith.mulf %365, %369 : vector<16x16xf32>
    %cst_138 = arith.constant dense<0.000000e+00> : vector<16x16xf32>
    %371 = tpu.matmul %370, %359, %cst_138 {dimension_numbers = #tpu.dot_dimension_numbers<[1], [0], [0], [1], [0, 0, 1, 1], [], []>} : vector<16x16xf32>, vector<16x16xf32>, vector<16x16xf32> -> vector<16x16xf32>
    %372 = vector.extract_strided_slice %263 {offsets = [16, 48], sizes = [16, 16], strides = [1, 1]} : vector<32x64xf32> to vector<16x16xf32>
    %373 = vector.extract_strided_slice %264 {offsets = [16, 48], sizes = [16, 16], strides = [1, 1]} : vector<32x64xf32> to vector<16x16xf32>
    %374 = vector.extract_strided_slice %265 {offsets = [16, 48], sizes = [16, 16], strides = [1, 1]} : vector<32x64xf32> to vector<16x16xf32>
    %cst_139 = arith.constant dense<0.000000e+00> : vector<16x16xf32>
    %375 = tpu.matmul %372, %373, %cst_139 {dimension_numbers = #tpu.dot_dimension_numbers<[1], [1], [0], [0], [0, 0, 1, 0], [], []>} : vector<16x16xf32>, vector<16x16xf32>, vector<16x16xf32> -> vector<16x16xf32>
    %cst_140 = arith.constant dense<0xFF800000> : vector<16xf32>
    %376 = vector.multi_reduction <maximumf>, %375, %cst_140 [1] : vector<16x16xf32> to vector<16xf32>
    %377 = vector.shape_cast %376 : vector<16xf32> to vector<16x1xf32>
    %378 = vector.broadcast %377 : vector<16x1xf32> to vector<16x16xf32>
    %379 = arith.subf %375, %378 : vector<16x16xf32>
    %380 = math.exp %379 : vector<16x16xf32>
    %cst_141 = arith.constant dense<0.000000e+00> : vector<16xf32>
    %381 = vector.multi_reduction <add>, %380, %cst_141 [1] : vector<16x16xf32> to vector<16xf32>
    %382 = vector.shape_cast %381 : vector<16xf32> to vector<16x1xf32>
    %383 = tpu.reciprocal %382 {approx = true} : vector<16x1xf32> -> vector<16x1xf32>
    %384 = vector.broadcast %383 : vector<16x1xf32> to vector<16x16xf32>
    %385 = arith.mulf %380, %384 : vector<16x16xf32>
    %cst_142 = arith.constant dense<0.000000e+00> : vector<16x16xf32>
    %386 = tpu.matmul %385, %374, %cst_142 {dimension_numbers = #tpu.dot_dimension_numbers<[1], [0], [0], [1], [0, 0, 1, 1], [], []>} : vector<16x16xf32>, vector<16x16xf32>, vector<16x16xf32> -> vector<16x16xf32>
    %387 = tpu.concatenate %341, %356, %371, %386 in 1 : vector<16x16xf32>, vector<16x16xf32>, vector<16x16xf32>, vector<16x16xf32> -> vector<16x64xf32>
    %388 = tpu.concatenate %326, %387 in 0 : vector<16x64xf32>, vector<16x64xf32> -> vector<32x64xf32>
    %c1_143 = arith.constant 1 : index
    %c0_144 = arith.constant 0 : index
    %c0_145 = arith.constant 0 : index
    %389 = vector.load %arg9[%c1_143, %c0_144, %c0_145] : memref<2x64x64xf32, #tpu.memory_space<vmem>>, vector<1x64x64xf32>
    %390 = vector.shape_cast %389 : vector<1x64x64xf32> to vector<64x64xf32>
    %cst_146 = arith.constant dense<0.000000e+00> : vector<32x64xf32>
    %391 = tpu.matmul %388, %390, %cst_146 {dimension_numbers = #tpu.dot_dimension_numbers<[1], [0], [0], [1], [0, 0, 1, 1], [], []>} : vector<32x64xf32>, vector<64x64xf32>, vector<32x64xf32> -> vector<32x64xf32>
    %c1_147 = arith.constant 1 : index
    %c0_148 = arith.constant 0 : index
    %c0_149 = arith.constant 0 : index
    %392 = vector.load %arg10[%c1_147, %c0_148, %c0_149] : memref<2x1x64xf32, #tpu.memory_space<vmem>>, vector<1x1x64xf32>
    %393 = vector.shape_cast %392 : vector<1x1x64xf32> to vector<1x64xf32>
    %394 = vector.broadcast %393 : vector<1x64xf32> to vector<32x64xf32>
    %395 = arith.addf %391, %394 : vector<32x64xf32>
    %396 = arith.addf %227, %395 : vector<32x64xf32>
    %c1_150 = arith.constant 1 : index
    %c0_151 = arith.constant 0 : index
    %c0_152 = arith.constant 0 : index
    %397 = vector.load %arg11[%c1_150, %c0_151, %c0_152] : memref<2x1x64xf32, #tpu.memory_space<vmem>>, vector<1x1x64xf32>
    %398 = vector.shape_cast %397 : vector<1x1x64xf32> to vector<1x64xf32>
    %c1_153 = arith.constant 1 : index
    %c0_154 = arith.constant 0 : index
    %c0_155 = arith.constant 0 : index
    %399 = vector.load %arg12[%c1_153, %c0_154, %c0_155] : memref<2x1x64xf32, #tpu.memory_space<vmem>>, vector<1x1x64xf32>
    %400 = vector.shape_cast %399 : vector<1x1x64xf32> to vector<1x64xf32>
    %cst_156 = arith.constant dense<0.000000e+00> : vector<32xf32>
    %401 = vector.multi_reduction <add>, %396, %cst_156 [1] : vector<32x64xf32> to vector<32xf32>
    %402 = vector.shape_cast %401 : vector<32xf32> to vector<32x1xf32>
    %cst_157 = arith.constant 6.400000e+01 : f32
    %403 = vector.broadcast %cst_157 : f32 to vector<32x1xf32>
    %404 = arith.divf %402, %403 : vector<32x1xf32>
    %405 = vector.broadcast %404 : vector<32x1xf32> to vector<32x64xf32>
    %406 = arith.subf %396, %405 : vector<32x64xf32>
    %407 = arith.mulf %406, %406 : vector<32x64xf32>
    %cst_158 = arith.constant dense<0.000000e+00> : vector<32xf32>
    %408 = vector.multi_reduction <add>, %407, %cst_158 [1] : vector<32x64xf32> to vector<32xf32>
    %409 = vector.shape_cast %408 : vector<32xf32> to vector<32x1xf32>
    %cst_159 = arith.constant 6.400000e+01 : f32
    %410 = vector.broadcast %cst_159 : f32 to vector<32x1xf32>
    %411 = arith.divf %409, %410 : vector<32x1xf32>
    %412 = vector.broadcast %404 : vector<32x1xf32> to vector<32x64xf32>
    %413 = arith.subf %396, %412 : vector<32x64xf32>
    %cst_160 = arith.constant 9.99999974E-6 : f32
    %414 = vector.broadcast %cst_160 : f32 to vector<32x1xf32>
    %415 = arith.addf %411, %414 : vector<32x1xf32>
    %416 = math.rsqrt %415 : vector<32x1xf32>
    %417 = vector.broadcast %416 : vector<32x1xf32> to vector<32x64xf32>
    %418 = arith.mulf %413, %417 : vector<32x64xf32>
    %419 = vector.broadcast %398 : vector<1x64xf32> to vector<32x64xf32>
    %420 = arith.mulf %418, %419 : vector<32x64xf32>
    %421 = vector.broadcast %400 : vector<1x64xf32> to vector<32x64xf32>
    %422 = arith.addf %420, %421 : vector<32x64xf32>
    %c1_161 = arith.constant 1 : index
    %c0_162 = arith.constant 0 : index
    %c0_163 = arith.constant 0 : index
    %423 = vector.load %arg13[%c1_161, %c0_162, %c0_163] : memref<2x64x256xf32, #tpu.memory_space<vmem>>, vector<1x64x256xf32>
    %424 = vector.shape_cast %423 : vector<1x64x256xf32> to vector<64x256xf32>
    %cst_164 = arith.constant dense<0.000000e+00> : vector<32x256xf32>
    %425 = tpu.matmul %422, %424, %cst_164 {dimension_numbers = #tpu.dot_dimension_numbers<[1], [0], [0], [1], [0, 0, 1, 1], [], []>} : vector<32x64xf32>, vector<64x256xf32>, vector<32x256xf32> -> vector<32x256xf32>
    %c1_165 = arith.constant 1 : index
    %c0_166 = arith.constant 0 : index
    %c0_167 = arith.constant 0 : index
    %426 = vector.load %arg14[%c1_165, %c0_166, %c0_167] : memref<2x1x256xf32, #tpu.memory_space<vmem>>, vector<1x1x256xf32>
    %427 = vector.shape_cast %426 : vector<1x1x256xf32> to vector<1x256xf32>
    %428 = vector.broadcast %427 : vector<1x256xf32> to vector<32x256xf32>
    %429 = arith.addf %425, %428 : vector<32x256xf32>
    %cst_168 = arith.constant 1.702000e+00 : f32
    %430 = vector.broadcast %cst_168 : f32 to vector<32x256xf32>
    %431 = arith.mulf %430, %429 : vector<32x256xf32>
    %432 = arith.negf %431 : vector<32x256xf32>
    %433 = math.exp %432 : vector<32x256xf32>
    %cst_169 = arith.constant 1.000000e+00 : f32
    %434 = vector.broadcast %cst_169 : f32 to vector<32x256xf32>
    %435 = arith.addf %434, %433 : vector<32x256xf32>
    %436 = arith.divf %434, %435 : vector<32x256xf32>
    %437 = arith.mulf %429, %436 : vector<32x256xf32>
    %c1_170 = arith.constant 1 : index
    %c0_171 = arith.constant 0 : index
    %c0_172 = arith.constant 0 : index
    %438 = vector.load %arg15[%c1_170, %c0_171, %c0_172] : memref<2x256x64xf32, #tpu.memory_space<vmem>>, vector<1x256x64xf32>
    %439 = vector.shape_cast %438 : vector<1x256x64xf32> to vector<256x64xf32>
    %cst_173 = arith.constant dense<0.000000e+00> : vector<32x64xf32>
    %440 = tpu.matmul %437, %439, %cst_173 {dimension_numbers = #tpu.dot_dimension_numbers<[1], [0], [0], [1], [0, 0, 1, 1], [], []>} : vector<32x256xf32>, vector<256x64xf32>, vector<32x64xf32> -> vector<32x64xf32>
    %c1_174 = arith.constant 1 : index
    %c0_175 = arith.constant 0 : index
    %c0_176 = arith.constant 0 : index
    %441 = vector.load %arg16[%c1_174, %c0_175, %c0_176] : memref<2x1x64xf32, #tpu.memory_space<vmem>>, vector<1x1x64xf32>
    %442 = vector.shape_cast %441 : vector<1x1x64xf32> to vector<1x64xf32>
    %443 = vector.broadcast %442 : vector<1x64xf32> to vector<32x64xf32>
    %444 = arith.addf %440, %443 : vector<32x64xf32>
    %445 = arith.addf %396, %444 : vector<32x64xf32>
    %c0_177 = arith.constant 0 : index
    %c0_178 = arith.constant 0 : index
    %446 = vector.load %arg17[%c0_177, %c0_178] : memref<1x64xf32, #tpu.memory_space<vmem>>, vector<1x64xf32>
    %c0_179 = arith.constant 0 : index
    %c0_180 = arith.constant 0 : index
    %447 = vector.load %arg18[%c0_179, %c0_180] : memref<1x64xf32, #tpu.memory_space<vmem>>, vector<1x64xf32>
    %cst_181 = arith.constant dense<0.000000e+00> : vector<32xf32>
    %448 = vector.multi_reduction <add>, %445, %cst_181 [1] : vector<32x64xf32> to vector<32xf32>
    %449 = vector.shape_cast %448 : vector<32xf32> to vector<32x1xf32>
    %cst_182 = arith.constant 6.400000e+01 : f32
    %450 = vector.broadcast %cst_182 : f32 to vector<32x1xf32>
    %451 = arith.divf %449, %450 : vector<32x1xf32>
    %452 = vector.broadcast %451 : vector<32x1xf32> to vector<32x64xf32>
    %453 = arith.subf %445, %452 : vector<32x64xf32>
    %454 = arith.mulf %453, %453 : vector<32x64xf32>
    %cst_183 = arith.constant dense<0.000000e+00> : vector<32xf32>
    %455 = vector.multi_reduction <add>, %454, %cst_183 [1] : vector<32x64xf32> to vector<32xf32>
    %456 = vector.shape_cast %455 : vector<32xf32> to vector<32x1xf32>
    %cst_184 = arith.constant 6.400000e+01 : f32
    %457 = vector.broadcast %cst_184 : f32 to vector<32x1xf32>
    %458 = arith.divf %456, %457 : vector<32x1xf32>
    %459 = vector.broadcast %451 : vector<32x1xf32> to vector<32x64xf32>
    %460 = arith.subf %445, %459 : vector<32x64xf32>
    %cst_185 = arith.constant 9.99999974E-6 : f32
    %461 = vector.broadcast %cst_185 : f32 to vector<32x1xf32>
    %462 = arith.addf %458, %461 : vector<32x1xf32>
    %463 = math.rsqrt %462 : vector<32x1xf32>
    %464 = vector.broadcast %463 : vector<32x1xf32> to vector<32x64xf32>
    %465 = arith.mulf %460, %464 : vector<32x64xf32>
    %466 = vector.broadcast %446 : vector<1x64xf32> to vector<32x64xf32>
    %467 = arith.mulf %465, %466 : vector<32x64xf32>
    %468 = vector.broadcast %447 : vector<1x64xf32> to vector<32x64xf32>
    %469 = arith.addf %467, %468 : vector<32x64xf32>
    %c0_186 = arith.constant 0 : index
    %c0_187 = arith.constant 0 : index
    %470 = vector.load %arg19[%c0_186, %c0_187] : memref<64x128xf32, #tpu.memory_space<vmem>>, vector<64x128xf32>
    %cst_188 = arith.constant dense<0.000000e+00> : vector<32x128xf32>
    %471 = tpu.matmul %469, %470, %cst_188 {dimension_numbers = #tpu.dot_dimension_numbers<[1], [0], [0], [1], [0, 0, 1, 1], [], []>} : vector<32x64xf32>, vector<64x128xf32>, vector<32x128xf32> -> vector<32x128xf32>
    %c0_189 = arith.constant 0 : index
    %c0_190 = arith.constant 0 : index
    %472 = vector.load %arg20[%c0_189, %c0_190] : memref<1x128xf32, #tpu.memory_space<vmem>>, vector<1x128xf32>
    %473 = vector.broadcast %472 : vector<1x128xf32> to vector<32x128xf32>
    %474 = arith.addf %471, %473 : vector<32x128xf32>
    %475 = vector.shape_cast %474 : vector<32x128xf32> to vector<2x16x128xf32>
    %c0_191 = arith.constant 0 : index
    %c0_192 = arith.constant 0 : index
    %c0_193 = arith.constant 0 : index
    %476 = vector.load %arg21[%c0_191, %c0_192, %c0_193] : memref<2x16x128xf32, #tpu.memory_space<vmem>>, vector<2x16x128xf32>
    tpu.vector_store %arg21[%c0_191, %c0_192, %c0_193], %475 {strides = array<i32>} : memref<2x16x128xf32, #tpu.memory_space<vmem>>, vector<2x16x128xf32>,
    return
  }
  func.func @transform_0(%arg0: i32) -> (i32, i32, i32) {
    %c0_i32 = arith.constant 0 : i32
    %c0_i32_0 = arith.constant 0 : i32
    %c0_i32_1 = arith.constant 0 : i32
    return %arg0, %c0_i32, %c0_i32_0 : i32, i32, i32
  }
  func.func @transform_1(%arg0: i32) -> (i32, i32) {
    %c0_i32 = arith.constant 0 : i32
    %c0_i32_0 = arith.constant 0 : i32
    %c0_i32_1 = arith.constant 0 : i32
    return %c0_i32, %c0_i32_0 : i32, i32
  }
  func.func @transform_2(%arg0: i32) -> (i32, i32) {
    %c0_i32 = arith.constant 0 : i32
    %c0_i32_0 = arith.constant 0 : i32
    %c0_i32_1 = arith.constant 0 : i32
    return %c0_i32, %c0_i32_0 : i32, i32
  }
  func.func @transform_3(%arg0: i32) -> (i32, i32) {
    %c0_i32 = arith.constant 0 : i32
    %c0_i32_0 = arith.constant 0 : i32
    %c0_i32_1 = arith.constant 0 : i32
    return %c0_i32, %c0_i32_0 : i32, i32
  }
  func.func @transform_4(%arg0: i32) -> (i32, i32, i32) {
    %c0_i32 = arith.constant 0 : i32
    %c0_i32_0 = arith.constant 0 : i32
    %c0_i32_1 = arith.constant 0 : i32
    %c0_i32_2 = arith.constant 0 : i32
    return %c0_i32, %c0_i32_0, %c0_i32_1 : i32, i32, i32
  }
  func.func @transform_5(%arg0: i32) -> (i32, i32, i32) {
    %c0_i32 = arith.constant 0 : i32
    %c0_i32_0 = arith.constant 0 : i32
    %c0_i32_1 = arith.constant 0 : i32
    %c0_i32_2 = arith.constant 0 : i32
    return %c0_i32, %c0_i32_0, %c0_i32_1 : i32, i32, i32
  }
  func.func @transform_6(%arg0: i32) -> (i32, i32, i32) {
    %c0_i32 = arith.constant 0 : i32
    %c0_i32_0 = arith.constant 0 : i32
    %c0_i32_1 = arith.constant 0 : i32
    %c0_i32_2 = arith.constant 0 : i32
    return %c0_i32, %c0_i32_0, %c0_i32_1 : i32, i32, i32
  }
  func.func @transform_7(%arg0: i32) -> (i32, i32, i32) {
    %c0_i32 = arith.constant 0 : i32
    %c0_i32_0 = arith.constant 0 : i32
    %c0_i32_1 = arith.constant 0 : i32
    %c0_i32_2 = arith.constant 0 : i32
    return %c0_i32, %c0_i32_0, %c0_i32_1 : i32, i32, i32
  }
  func.func @transform_8(%arg0: i32) -> (i32, i32, i32) {
    %c0_i32 = arith.constant 0 : i32
    %c0_i32_0 = arith.constant 0 : i32
    %c0_i32_1 = arith.constant 0 : i32
    %c0_i32_2 = arith.constant 0 : i32
    return %c0_i32, %c0_i32_0, %c0_i32_1 : i32, i32, i32
  }
  func.func @transform_9(%arg0: i32) -> (i32, i32, i32) {
    %c0_i32 = arith.constant 0 : i32
    %c0_i32_0 = arith.constant 0 : i32
    %c0_i32_1 = arith.constant 0 : i32
    %c0_i32_2 = arith.constant 0 : i32
    return %c0_i32, %c0_i32_0, %c0_i32_1 : i32, i32, i32
  }
  func.func @transform_10(%arg0: i32) -> (i32, i32, i32) {
    %c0_i32 = arith.constant 0 : i32
    %c0_i32_0 = arith.constant 0 : i32
    %c0_i32_1 = arith.constant 0 : i32
    %c0_i32_2 = arith.constant 0 : i32
    return %c0_i32, %c0_i32_0, %c0_i32_1 : i32, i32, i32
  }
  func.func @transform_11(%arg0: i32) -> (i32, i32, i32) {
    %c0_i32 = arith.constant 0 : i32
    %c0_i32_0 = arith.constant 0 : i32
    %c0_i32_1 = arith.constant 0 : i32
    %c0_i32_2 = arith.constant 0 : i32
    return %c0_i32, %c0_i32_0, %c0_i32_1 : i32, i32, i32
  }
  func.func @transform_12(%arg0: i32) -> (i32, i32, i32) {
    %c0_i32 = arith.constant 0 : i32
    %c0_i32_0 = arith.constant 0 : i32
    %c0_i32_1 = arith.constant 0 : i32
    %c0_i32_2 = arith.constant 0 : i32
    return %c0_i32, %c0_i32_0, %c0_i32_1 : i32, i32, i32
  }
  func.func @transform_13(%arg0: i32) -> (i32, i32, i32) {
    %c0_i32 = arith.constant 0 : i32
    %c0_i32_0 = arith.constant 0 : i32
    %c0_i32_1 = arith.constant 0 : i32
    %c0_i32_2 = arith.constant 0 : i32
    return %c0_i32, %c0_i32_0, %c0_i32_1 : i32, i32, i32
  }
  func.func @transform_14(%arg0: i32) -> (i32, i32, i32) {
    %c0_i32 = arith.constant 0 : i32
    %c0_i32_0 = arith.constant 0 : i32
    %c0_i32_1 = arith.constant 0 : i32
    %c0_i32_2 = arith.constant 0 : i32
    return %c0_i32, %c0_i32_0, %c0_i32_1 : i32, i32, i32
  }
  func.func @transform_15(%arg0: i32) -> (i32, i32, i32) {
    %c0_i32 = arith.constant 0 : i32
    %c0_i32_0 = arith.constant 0 : i32
    %c0_i32_1 = arith.constant 0 : i32
    %c0_i32_2 = arith.constant 0 : i32
    return %c0_i32, %c0_i32_0, %c0_i32_1 : i32, i32, i32
  }
  func.func @transform_16(%arg0: i32) -> (i32, i32) {
    %c0_i32 = arith.constant 0 : i32
    %c0_i32_0 = arith.constant 0 : i32
    %c0_i32_1 = arith.constant 0 : i32
    return %c0_i32, %c0_i32_0 : i32, i32
  }
  func.func @transform_17(%arg0: i32) -> (i32, i32) {
    %c0_i32 = arith.constant 0 : i32
    %c0_i32_0 = arith.constant 0 : i32
    %c0_i32_1 = arith.constant 0 : i32
    return %c0_i32, %c0_i32_0 : i32, i32
  }
  func.func @transform_18(%arg0: i32) -> (i32, i32) {
    %c0_i32 = arith.constant 0 : i32
    %c0_i32_0 = arith.constant 0 : i32
    %c0_i32_1 = arith.constant 0 : i32
    return %c0_i32, %c0_i32_0 : i32, i32
  }
  func.func @transform_19(%arg0: i32) -> (i32, i32) {
    %c0_i32 = arith.constant 0 : i32
    %c0_i32_0 = arith.constant 0 : i32
    %c0_i32_1 = arith.constant 0 : i32
    return %c0_i32, %c0_i32_0 : i32, i32
  }
  func.func @transform_20(%arg0: i32) -> (i32, i32, i32) {
    %c0_i32 = arith.constant 0 : i32
    %c0_i32_0 = arith.constant 0 : i32
    %c0_i32_1 = arith.constant 0 : i32
    return %arg0, %c0_i32, %c0_i32_0 : i32, i32, i32
  }
}

</mosaic_0001>

<llo_original>
// kernel: tpu_custom_call.1
$region0: #{tpu_custom_call.1}
  #allocation0 [shape = 'u32[]', space=smem, size = 0x4, offset = 0x4, fixed_abs, tag = 'smem constant byte address 0x4 - core index']
  #allocation1 [shape = 'u32[144,128]{1,0:T(1,128)}', space=vmem, size = 0x12000, scoped, tag = 'internal scratch']
  %s0 = inlined_call_operand.vmem [shape: f32[2,16,8], index: 0, kind: input, shape index: {}]
  %s1 = inlined_call_operand.vmem [shape: f32[8,64], index: 1, kind: input, shape index: {}]
  %s2 = inlined_call_operand.vmem [shape: f32[1,64], index: 2, kind: input, shape index: {}]
  %s3 = inlined_call_operand.vmem [shape: f32[16,64], index: 3, kind: input, shape index: {}]
  %s4 = inlined_call_operand.vmem [shape: f32[2,1,64], index: 4, kind: input, shape index: {}]
  %s5 = inlined_call_operand.vmem [shape: f32[2,1,64], index: 5, kind: input, shape index: {}]
  %s6 = inlined_call_operand.vmem [shape: f32[2,64,192], index: 6, kind: input, shape index: {}]
  %s7 = inlined_call_operand.vmem [shape: f32[2,1,192], index: 7, kind: input, shape index: {}]
  %s8 = inlined_call_operand.vmem [shape: f32[2,64,64], index: 8, kind: input, shape index: {}]
  %s9 = inlined_call_operand.vmem [shape: f32[2,1,64], index: 9, kind: input, shape index: {}]
  %s10 = inlined_call_operand.vmem [shape: f32[2,1,64], index: 10, kind: input, shape index: {}]
  %s11 = inlined_call_operand.vmem [shape: f32[2,1,64], index: 11, kind: input, shape index: {}]
  %s12 = inlined_call_operand.vmem [shape: f32[2,64,256], index: 12, kind: input, shape index: {}]
  %s13 = inlined_call_operand.vmem [shape: f32[2,1,256], index: 13, kind: input, shape index: {}]
  %s14 = inlined_call_operand.vmem [shape: f32[2,256,64], index: 14, kind: input, shape index: {}]
  %s15 = inlined_call_operand.vmem [shape: f32[2,1,64], index: 15, kind: input, shape index: {}]
  %s16 = inlined_call_operand.vmem [shape: f32[1,64], index: 16, kind: input, shape index: {}]
  %s17 = inlined_call_operand.vmem [shape: f32[1,64], index: 17, kind: input, shape index: {}]
  %s18 = inlined_call_operand.vmem [shape: f32[64,128], index: 18, kind: input, shape index: {}]
  %s19 = inlined_call_operand.vmem [shape: f32[1,128], index: 19, kind: input, shape index: {}]
  %s20 = inlined_call_operand.hbm [shape: f32[2,16,128], index: 20, kind: output, shape index: {}]
  %s21 = sld [smem:[#allocation0]]
  $region90: #{tpu_custom_call.1} parent=0
    _
  %s23 = ssub.s32 1, %s21
  %s24 = scalar_select 0, %s23, %s21
  $region1: #{tpu_custom_call.1} parent=0
    #allocation2 [shape = 'u8[16384]{0}', space=vmem, size = 0x4000, scoped, tag = 'output window, operand 0, single buffered']
    #allocation3 [shape = 's32[1]{0}', space=sflag, size = 0x4, scoped, tag = 'scoped memory for tpu_custom_call.1']
    %25 = vsyncpa [#allocation3], 0
    // Predicated region
    $region2: #{tpu_custom_call.1} parent=1 // pred_check
      _
    $region3: #{tpu_custom_call.1} parent=1 // pred_check_branch
      %27 = sbr.rel (0) target = $region5
    $region4: #{tpu_custom_call.1} parent=1 // pred_region
      _
    $region5: #{tpu_custom_call.1} parent=1 // pred_fallthru
      _
    // Predicated region
    $region6: #{tpu_custom_call.1} parent=1 // pred_check
      _
    $region7: #{tpu_custom_call.1} parent=1 // pred_check_branch
      %29 = sbr.rel (0) target = $region9
    $region8: #{tpu_custom_call.1} parent=1 // pred_region
      _
    $region9: #{tpu_custom_call.1} parent=1 // pred_fallthru
      _
    // Predicated region
    $region10: #{tpu_custom_call.1} parent=1 // pred_check
      _
    $region11: #{tpu_custom_call.1} parent=1 // pred_check_branch
      %31 = sbr.rel (0) target = $region13
    $region12: #{tpu_custom_call.1} parent=1 // pred_region
      _
    $region13: #{tpu_custom_call.1} parent=1 // pred_fallthru
      _
    // Predicated region
    $region14: #{tpu_custom_call.1} parent=1 // pred_check
      _
    $region15: #{tpu_custom_call.1} parent=1 // pred_check_branch
      %33 = sbr.rel (0) target = $region17
    $region16: #{tpu_custom_call.1} parent=1 // pred_region
      _
    $region17: #{tpu_custom_call.1} parent=1 // pred_fallthru
      _
    // Predicated region
    $region18: #{tpu_custom_call.1} parent=1 // pred_check
      _
    $region19: #{tpu_custom_call.1} parent=1 // pred_check_branch
      %35 = sbr.rel (0) target = $region21
    $region20: #{tpu_custom_call.1} parent=1 // pred_region
      _
    $region21: #{tpu_custom_call.1} parent=1 // pred_fallthru
      _
    // Predicated region
    $region22: #{tpu_custom_call.1} parent=1 // pred_check
      _
    $region23: #{tpu_custom_call.1} parent=1 // pred_check_branch
      %37 = sbr.rel (0) target = $region25
    $region24: #{tpu_custom_call.1} parent=1 // pred_region
      _
    $region25: #{tpu_custom_call.1} parent=1 // pred_fallthru
      _
    // Predicated region
    $region26: #{tpu_custom_call.1} parent=1 // pred_check
      _
    $region27: #{tpu_custom_call.1} parent=1 // pred_check_branch
      %39 = sbr.rel (0) target = $region29
    $region28: #{tpu_custom_call.1} parent=1 // pred_region
      _
    $region29: #{tpu_custom_call.1} parent=1 // pred_fallthru
      _
    // Predicated region
    $region30: #{tpu_custom_call.1} parent=1 // pred_check
      _
    $region31: #{tpu_custom_call.1} parent=1 // pred_check_branch
      %41 = sbr.rel (0) target = $region33
    $region32: #{tpu_custom_call.1} parent=1 // pred_region
      _
    $region33: #{tpu_custom_call.1} parent=1 // pred_fallthru
      _
    // Predicated region
    $region34: #{tpu_custom_call.1} parent=1 // pred_check
      _
    $region35: #{tpu_custom_call.1} parent=1 // pred_check_branch
      %43 = sbr.rel (0) target = $region37
    $region36: #{tpu_custom_call.1} parent=1 // pred_region
      _
    $region37: #{tpu_custom_call.1} parent=1 // pred_fallthru
      _
    // Predicated region
    $region38: #{tpu_custom_call.1} parent=1 // pred_check
      _
    $region39: #{tpu_custom_call.1} parent=1 // pred_check_branch
      %45 = sbr.rel (0) target = $region41
    $region40: #{tpu_custom_call.1} parent=1 // pred_region
      _
    $region41: #{tpu_custom_call.1} parent=1 // pred_fallthru
      _
    // Predicated region
    $region42: #{tpu_custom_call.1} parent=1 // pred_check
      _
    $region43: #{tpu_custom_call.1} parent=1 // pred_check_branch
      %47 = sbr.rel (0) target = $region45
    $region44: #{tpu_custom_call.1} parent=1 // pred_region
      _
    $region45: #{tpu_custom_call.1} parent=1 // pred_fallthru
      _
    // Predicated region
    $region46: #{tpu_custom_call.1} parent=1 // pred_check
      _
    $region47: #{tpu_custom_call.1} parent=1 // pred_check_branch
      %49 = sbr.rel (0) target = $region49
    $region48: #{tpu_custom_call.1} parent=1 // pred_region
      _
    $region49: #{tpu_custom_call.1} parent=1 // pred_fallthru
      _
    // Predicated region
    $region50: #{tpu_custom_call.1} parent=1 // pred_check
      _
    $region51: #{tpu_custom_call.1} parent=1 // pred_check_branch
      %51 = sbr.rel (0) target = $region53
    $region52: #{tpu_custom_call.1} parent=1 // pred_region
      _
    $region53: #{tpu_custom_call.1} parent=1 // pred_fallthru
      _
    // Predicated region
    $region54: #{tpu_custom_call.1} parent=1 // pred_check
      _
    $region55: #{tpu_custom_call.1} parent=1 // pred_check_branch
      %53 = sbr.rel (0) target = $region57
    $region56: #{tpu_custom_call.1} parent=1 // pred_region
      _
    $region57: #{tpu_custom_call.1} parent=1 // pred_fallthru
      _
    // Predicated region
    $region58: #{tpu_custom_call.1} parent=1 // pred_check
      _
    $region59: #{tpu_custom_call.1} parent=1 // pred_check_branch
      %55 = sbr.rel (0) target = $region61
    $region60: #{tpu_custom_call.1} parent=1 // pred_region
      _
    $region61: #{tpu_custom_call.1} parent=1 // pred_fallthru
      _
    // Predicated region
    $region62: #{tpu_custom_call.1} parent=1 // pred_check
      _
    $region63: #{tpu_custom_call.1} parent=1 // pred_check_branch
      %57 = sbr.rel (0) target = $region65
    $region64: #{tpu_custom_call.1} parent=1 // pred_region
      _
    $region65: #{tpu_custom_call.1} parent=1 // pred_fallthru
      _
    // Predicated region
    $region66: #{tpu_custom_call.1} parent=1 // pred_check
      _
    $region67: #{tpu_custom_call.1} parent=1 // pred_check_branch
      %59 = sbr.rel (0) target = $region69
    $region68: #{tpu_custom_call.1} parent=1 // pred_region
      _
    $region69: #{tpu_custom_call.1} parent=1 // pred_fallthru
      _
    // Predicated region
    $region70: #{tpu_custom_call.1} parent=1 // pred_check
      _
    $region71: #{tpu_custom_call.1} parent=1 // pred_check_branch
      %61 = sbr.rel (0) target = $region73
    $region72: #{tpu_custom_call.1} parent=1 // pred_region
      _
    $region73: #{tpu_custom_call.1} parent=1 // pred_fallthru
      _
    // Predicated region
    $region74: #{tpu_custom_call.1} parent=1 // pred_check
      _
    $region75: #{tpu_custom_call.1} parent=1 // pred_check_branch
      %63 = sbr.rel (0) target = $region77
    $region76: #{tpu_custom_call.1} parent=1 // pred_region
      _
    $region77: #{tpu_custom_call.1} parent=1 // pred_fallthru
      _
    // Predicated region
    $region78: #{tpu_custom_call.1} parent=1 // pred_check
      _
    $region79: #{tpu_custom_call.1} parent=1 // pred_check_branch
      %65 = sbr.rel (0) target = $region81
    $region80: #{tpu_custom_call.1} parent=1 // pred_region
      _
    $region81: #{tpu_custom_call.1} parent=1 // pred_fallthru
      _
    %v66 = vld [vmem:[%s0] sm:$0xff]
    %v67 = vld [vmem:[%s0 + $0x8] sm:$0xff]
    %v68 = vld [vmem:[%s0 + $0x10] sm:$0xff]
    %v69 = vld [vmem:[%s0 + $0x18] sm:$0xff]
    %v70 = vld [vmem:[%s1] sm:$0xff]
    %v71 = vld [vmem:[%s2] sm:$0x1]
    %v73 = vlaneseq
    %v74 = vshrl.u32 %v73, 7
    %v75 = vsub.s32 0, %v74
    %v76 = vrot.slane %v71, %v75
    %vm78 = vcmask 64512
    %v80 = vsel %vm78, %v66, 0
    %v83 = vsel %vm78, %v67, 0
    %v86 = vsel %vm78, %v68, 0
    %v89 = vsel %vm78, %v69, 0
    %91 = vmatprep.subr.mxu0 0.0
    %92 = vmatpush1.msra.mxu0 %v70
    %93 = vmatprep.subr.mxu0 0.0
    %94 = vmatpush1.msra.mxu0 0.0
    %95 = vmatprep.subr.mxu0 0.0
    %96 = vmatpush1.msra.mxu0 0.0
    %97 = vmatprep.subr.mxu0 0.0
    %98 = vmatpush1.msra.mxu0 0.0
    %99 = vmatprep.subr.mxu0 0.0
    %100 = vmatpush1.msra.mxu0 0.0
    %101 = vmatprep.subr.mxu0 0.0
    %102 = vmatpush1.msra.mxu0 0.0
    %103 = vmatprep.subr.mxu0 0.0
    %104 = vmatpush1.msra.mxu0 0.0
    %105 = vmatprep.subr.mxu0 0.0
    %106 = vmatpush1.msra.mxu0 0.0
    %107 = vmatprep.subr.mxu0 0.0
    %108 = vmatpush1.msra.mxu0 0.0
    %109 = vmatprep.subr.mxu0 0.0
    %110 = vmatpush1.msra.mxu0 0.0
    %111 = vmatprep.subr.mxu0 0.0
    %112 = vmatpush1.msra.mxu0 0.0
    %113 = vmatprep.subr.mxu0 0.0
    %114 = vmatpush1.msra.mxu0 0.0
    %115 = vmatprep.subr.mxu0 0.0
    %116 = vmatpush1.msra.mxu0 0.0
    %117 = vmatprep.subr.mxu0 0.0
    %118 = vmatpush1.msra.mxu0 0.0
    %119 = vmatprep.subr.mxu0 0.0
    %120 = vmatpush1.msra.mxu0 0.0
    %121 = vmatprep.subr.mxu0 0.0
    %122 = vmatpush1.msra.mxu0 0.0
    %123 = vmatprep.subr.mxu0 0.0
    %124 = vmatpush1.msra.mxu0 0.0
    %125 = vmatprep.subr.mxu0 0.0
    %126 = vmatpush1.msra.mxu0 0.0
    %127 = vmatprep.subr.mxu0 0.0
    %128 = vmatpush1.msra.mxu0 0.0
    %129 = vmatprep.subr.mxu0 0.0
    %130 = vmatpush1.msra.mxu0 0.0
    %131 = vmatprep.subr.mxu0 0.0
    %132 = vmatpush1.msra.mxu0 0.0
    %133 = vmatprep.subr.mxu0 0.0
    %134 = vmatpush1.msra.mxu0 0.0
    %135 = vmatprep.subr.mxu0 0.0
    %136 = vmatpush1.msra.mxu0 0.0
    %137 = vmatprep.subr.mxu0 0.0
    %138 = vmatpush1.msra.mxu0 0.0
    %139 = vmatprep.subr.mxu0 0.0
    %140 = vmatpush1.msra.mxu0 0.0
    %141 = vmatprep.subr.mxu0 0.0
    %142 = vmatpush1.msra.mxu0 0.0
    %143 = vmatprep.subr.mxu0 0.0
    %144 = vmatpush1.msra.mxu0 0.0
    %145 = vmatprep.subr.mxu0 0.0
    %146 = vmatpush1.msra.mxu0 0.0
    %147 = vmatprep.subr.mxu0 0.0
    %148 = vmatpush1.msra.mxu0 0.0
    %149 = vmatprep.subr.mxu0 0.0
    %150 = vmatpush1.msra.mxu0 0.0
    %151 = vmatprep.subr.mxu0 0.0
    %152 = vmatpush1.msra.mxu0 0.0
    %153 = vmatprep.subr.mxu0 0.0
    %154 = vmatpush1.msra.mxu0 0.0
    %155 = vmatprep.mubr.f32.mxu0 0.0
    %156 = vmatmul.mubr.f32.gmra.mrb[0].mxu0 %v80
    %v157 = vpop.f32.mrb[0].mxu0
    %v158 = vadd.f32 %v76, %v157
    %v159 = vpop.f32.mrb[0].mxu0
    %160 = vmatprep.mubr.f32.mxu0 0.0
    %161 = vmatmul.mubr.f32.gmra.mrb[0].mxu0 %v83
    %v162 = vpop.f32.mrb[0].mxu0
    %v163 = vadd.f32 %v76, %v162
    %v164 = vpop.f32.mrb[0].mxu0
    %165 = vmatprep.mubr.f32.mxu0 0.0
    %166 = vmatmul.mubr.f32.gmra.mrb[0].mxu0 %v86
    %v167 = vpop.f32.mrb[0].mxu0
    %v168 = vadd.f32 %v76, %v167
    %v169 = vpop.f32.mrb[0].mxu0
    %170 = vmatprep.mubr.f32.mxu0 0.0
    %171 = vmatmul.mubr.f32.gmra.mrb[0].mxu0 %v89
    %v172 = vpop.f32.mrb[0].mxu0
    %v173 = vadd.f32 %v76, %v172
    %v174 = vpop.f32.mrb[0].mxu0
    %175 = vdwg.mxu0
    %v176 = vld [vmem:[%s3] sm:$0xff]
    %v177 = vld [vmem:[%s3 + $0x8] sm:$0xff]
    %v178 = vadd.f32 %v158, %v176
    %v179 = vadd.f32 %v163, %v177
    %v180 = vadd.f32 %v168, %v176
    %v181 = vadd.f32 %v173, %v177
    %v182 = vld [vmem:[%s4] sm:$0x1]
    %v183 = vld [vmem:[%s5] sm:$0x1]
    %vm184 = vcmask 523264
    %v185 = vsel %vm184, %v178, 0.0
    %186 = vadd.xlane.f32.xlu0 %v185
    %v187 = vpop.xlane.xlu0 %186
    %v188 = vsel %vm184, %v179, 0.0
    %189 = vadd.xlane.f32.xlu0 %v188
    %v190 = vpop.xlane.xlu0 %189
    %v191 = vsel %vm184, %v180, 0.0
    %192 = vadd.xlane.f32.xlu0 %v191
    %v193 = vpop.xlane.xlu0 %192
    %v194 = vsel %vm184, %v181, 0.0
    %195 = vadd.xlane.f32.xlu0 %v194
    %v196 = vpop.xlane.xlu0 %195
    %v197 = vrcp.pop 64.0
    %v198 = vmul.f32 %v187, %v197
    %v199 = vmul.f32 %v190, %v197
    %v200 = vmul.f32 %v193, %v197
    %v201 = vmul.f32 %v196, %v197
    %v202 = vsub.f32 %v178, %v198
    %v203 = vsub.f32 %v179, %v199
    %v204 = vsub.f32 %v180, %v200
    %v205 = vsub.f32 %v181, %v201
    %v206 = vmul.f32 %v202, %v202
    %v207 = vmul.f32 %v203, %v203
    %v208 = vmul.f32 %v204, %v204
    %v209 = vmul.f32 %v205, %v205
    %v210 = vsel %vm184, %v206, 0.0
    %211 = vadd.xlane.f32.xlu0 %v210
    %v212 = vpop.xlane.xlu0 %211
    %v213 = vsel %vm184, %v207, 0.0
    %214 = vadd.xlane.f32.xlu0 %v213
    %v215 = vpop.xlane.xlu0 %214
    %v216 = vsel %vm184, %v208, 0.0
    %217 = vadd.xlane.f32.xlu0 %v216
    %v218 = vpop.xlane.xlu0 %217
    %v219 = vsel %vm184, %v209, 0.0
    %220 = vadd.xlane.f32.xlu0 %v219
    %v221 = vpop.xlane.xlu0 %220
    %v222 = vmul.f32 %v212, %v197
    %v223 = vmul.f32 %v215, %v197
    %v224 = vmul.f32 %v218, %v197
    %v225 = vmul.f32 %v221, %v197
    %v226 = vadd.f32 %v222, 1e-05
    %v227 = vadd.f32 %v223, 1e-05
    %v228 = vadd.f32 %v224, 1e-05
    %v229 = vadd.f32 %v225, 1e-05
    %v230 = vrsqrt.pop %v226
    %v231 = vrsqrt.pop %v227
    %v232 = vrsqrt.pop %v228
    %v233 = vrsqrt.pop %v229
    %v234 = vmul.f32 %v202, %v230
    %v235 = vmul.f32 %v203, %v231
    %v236 = vmul.f32 %v204, %v232
    %v237 = vmul.f32 %v205, %v233
    %v239 = vlaneseq
    %v240 = vshrl.u32 %v239, 7
    %v241 = vsub.s32 0, %v240
    %v242 = vrot.slane %v182, %v241
    %v244 = vmul.f32 %v234, %v242
    %v245 = vmul.f32 %v235, %v242
    %v246 = vmul.f32 %v236, %v242
    %v247 = vmul.f32 %v237, %v242
    %v249 = vlaneseq
    %v250 = vshrl.u32 %v249, 7
    %v251 = vsub.s32 0, %v250
    %v252 = vrot.slane %v183, %v251
    %v254 = vadd.f32 %v244, %v252
    %v255 = vadd.f32 %v245, %v252
    %v256 = vadd.f32 %v246, %v252
    %v257 = vadd.f32 %v247, %v252
    %v258 = vld [vmem:[%s6] sm:$0xff]
    %v259 = vld [vmem:[%s6 + $0x8] sm:$0xff]
    %v260 = vld [vmem:[%s6 + $0x10] sm:$0xff]
    %v261 = vld [vmem:[%s6 + $0x18] sm:$0xff]
    %v262 = vld [vmem:[%s6 + $0x20] sm:$0xff]
    %v263 = vld [vmem:[%s6 + $0x28] sm:$0xff]
    %v264 = vld [vmem:[%s6 + $0x30] sm:$0xff]
    %v265 = vld [vmem:[%s6 + $0x38] sm:$0xff]
    %v266 = vld [vmem:[%s6 + $0x40] sm:$0xff]
    %v267 = vld [vmem:[%s6 + $0x48] sm:$0xff]
    %v268 = vld [vmem:[%s6 + $0x50] sm:$0xff]
    %v269 = vld [vmem:[%s6 + $0x58] sm:$0xff]
    %v270 = vld [vmem:[%s6 + $0x60] sm:$0xff]
    %v271 = vld [vmem:[%s6 + $0x68] sm:$0xff]
    %v272 = vld [vmem:[%s6 + $0x70] sm:$0xff]
    %v273 = vld [vmem:[%s6 + $0x78] sm:$0xff]
    %v274 = vld [vmem:[%s7] sm:$0x3]
    %v276 = vlaneseq
    %v277 = vshrl.u32 %v276, 7
    %v278 = vsub.s32 0, %v277
    %v279 = vrot.slane %v274, %v278
    %v280 = vlaneseq
    %v281 = vshrl.u32 %v280, 7
    %v282 = vsub.s32 1, %v281
    %v283 = vrot.slane %v274, %v282
    %v287 = vsel %vm184, %v254, 0
    %v290 = vsel %vm184, %v255, 0
    %v293 = vsel %vm184, %v256, 0
    %v296 = vsel %vm184, %v257, 0
    %298 = vmatprep.subr.mxu0 %v259
    %299 = vmatpush1.msra.mxu0 %v258
    %300 = vmatprep.subr.mxu0 %v261
    %301 = vmatpush1.msra.mxu0 %v260
    %302 = vmatprep.subr.mxu0 %v263
    %303 = vmatpush1.msra.mxu0 %v262
    %304 = vmatprep.subr.mxu0 %v265
    %305 = vmatpush1.msra.mxu0 %v264
    %306 = vmatprep.subr.mxu0 %v267
    %307 = vmatpush1.msra.mxu0 %v266
    %308 = vmatprep.subr.mxu0 %v269
    %309 = vmatpush1.msra.mxu0 %v268
    %310 = vmatprep.subr.mxu0 %v271
    %311 = vmatpush1.msra.mxu0 %v270
    %312 = vmatprep.subr.mxu0 %v273
    %313 = vmatpush1.msra.mxu0 %v272
    %314 = vmatprep.subr.mxu0 0.0
    %315 = vmatpush1.msra.mxu0 0.0
    %316 = vmatprep.subr.mxu0 0.0
    %317 = vmatpush1.msra.mxu0 0.0
    %318 = vmatprep.subr.mxu0 0.0
    %319 = vmatpush1.msra.mxu0 0.0
    %320 = vmatprep.subr.mxu0 0.0
    %321 = vmatpush1.msra.mxu0 0.0
    %322 = vmatprep.subr.mxu0 0.0
    %323 = vmatpush1.msra.mxu0 0.0
    %324 = vmatprep.subr.mxu0 0.0
    %325 = vmatpush1.msra.mxu0 0.0
    %326 = vmatprep.subr.mxu0 0.0
    %327 = vmatpush1.msra.mxu0 0.0
    %328 = vmatprep.subr.mxu0 0.0
    %329 = vmatpush1.msra.mxu0 0.0
    %330 = vmatprep.subr.mxu0 0.0
    %331 = vmatpush1.msra.mxu0 0.0
    %332 = vmatprep.subr.mxu0 0.0
    %333 = vmatpush1.msra.mxu0 0.0
    %334 = vmatprep.subr.mxu0 0.0
    %335 = vmatpush1.msra.mxu0 0.0
    %336 = vmatprep.subr.mxu0 0.0
    %337 = vmatpush1.msra.mxu0 0.0
    %338 = vmatprep.subr.mxu0 0.0
    %339 = vmatpush1.msra.mxu0 0.0
    %340 = vmatprep.subr.mxu0 0.0
    %341 = vmatpush1.msra.mxu0 0.0
    %342 = vmatprep.subr.mxu0 0.0
    %343 = vmatpush1.msra.mxu0 0.0
    %344 = vmatprep.subr.mxu0 0.0
    %345 = vmatpush1.msra.mxu0 0.0
    %346 = vmatprep.subr.mxu0 0.0
    %347 = vmatpush1.msra.mxu0 0.0
    %348 = vmatprep.subr.mxu0 0.0
    %349 = vmatpush1.msra.mxu0 0.0
    %350 = vmatprep.subr.mxu0 0.0
    %351 = vmatpush1.msra.mxu0 0.0
    %352 = vmatprep.subr.mxu0 0.0
    %353 = vmatpush1.msra.mxu0 0.0
    %354 = vmatprep.subr.mxu0 0.0
    %355 = vmatpush1.msra.mxu0 0.0
    %356 = vmatprep.subr.mxu0 0.0
    %357 = vmatpush1.msra.mxu0 0.0
    %358 = vmatprep.subr.mxu0 0.0
    %359 = vmatpush1.msra.mxu0 0.0
    %360 = vmatprep.subr.mxu0 0.0
    %361 = vmatpush1.msra.mxu0 0.0
    %362 = vmatprep.mubr.f32.mxu0 0.0
    %363 = vmatmul.mubr.f32.gmra.mrb[0].mxu0 %v287
    %v364 = vpop.f32.mrb[0].mxu0
    %v365 = vadd.f32 %v279, %v364
    %v366 = vpop.f32.mrb[0].mxu0
    %v367 = vadd.f32 %v283, %v366
    %368 = vmatprep.mubr.f32.mxu0 0.0
    %369 = vmatmul.mubr.f32.gmra.mrb[0].mxu0 %v290
    %v370 = vpop.f32.mrb[0].mxu0
    %v371 = vadd.f32 %v279, %v370
    %v372 = vpop.f32.mrb[0].mxu0
    %v373 = vadd.f32 %v283, %v372
    %374 = vmatprep.mubr.f32.mxu0 0.0
    %375 = vmatmul.mubr.f32.gmra.mrb[0].mxu0 %v293
    %v376 = vpop.f32.mrb[0].mxu0
    %v377 = vadd.f32 %v279, %v376
    %v378 = vpop.f32.mrb[0].mxu0
    %v379 = vadd.f32 %v283, %v378
    %380 = vmatprep.mubr.f32.mxu0 0.0
    %381 = vmatmul.mubr.f32.gmra.mrb[0].mxu0 %v296
    %v382 = vpop.f32.mrb[0].mxu0
    %v383 = vadd.f32 %v279, %v382
    %v384 = vpop.f32.mrb[0].mxu0
    %v385 = vadd.f32 %v283, %v384
    %386 = vdwg.mxu0
    %v387 = vmul.f32 %v365, 0.25
    %v388 = vmul.f32 %v371, 0.25
    %v389 = vmul.f32 %v377, 0.25
    %v390 = vmul.f32 %v383, 0.25
    %393 = vrot.lane.b32.xlu0 %v365, 64
    %v394 = vpop.permute.xlu0 %393
    %395 = vrot.lane.b32.xlu0 %v371, 64
    %v396 = vpop.permute.xlu0 %395
    %vm397 = vcmask 130048
    %v399 = vsel %vm397, %v387, 0
    %v402 = vsel %vm397, %v388, 0
    %v404 = vsel %vm397, %v394, 0
    %v406 = vsel %vm397, %v396, 0
    %408 = vmatprep.subr.mxu0 0.0
    %409 = vmatpush1.xpose.msra.mxu0 %v404
    %410 = vmatprep.subr.mxu0 0.0
    %411 = vmatpush1.xpose.msra.mxu0 %v406
    %412 = vmatprep.subr.mxu0 0.0
    %413 = vmatpush1.xpose.msra.mxu0 0.0
    %414 = vmatprep.subr.mxu0 0.0
    %415 = vmatpush1.xpose.msra.mxu0 0.0
    %416 = vmatprep.subr.mxu0 0.0
    %417 = vmatpush1.xpose.msra.mxu0 0.0
    %418 = vmatprep.subr.mxu0 0.0
    %419 = vmatpush1.xpose.msra.mxu0 0.0
    %420 = vmatprep.subr.mxu0 0.0
    %421 = vmatpush1.xpose.msra.mxu0 0.0
    %422 = vmatprep.subr.mxu0 0.0
    %423 = vmatpush1.xpose.msra.mxu0 0.0
    %424 = vmatprep.subr.mxu0 0.0
    %425 = vmatpush1.xpose.msra.mxu0 0.0
    %426 = vmatprep.subr.mxu0 0.0
    %427 = vmatpush1.xpose.msra.mxu0 0.0
    %428 = vmatprep.subr.mxu0 0.0
    %429 = vmatpush1.xpose.msra.mxu0 0.0
    %430 = vmatprep.subr.mxu0 0.0
    %431 = vmatpush1.xpose.msra.mxu0 0.0
    %432 = vmatprep.subr.mxu0 0.0
    %433 = vmatpush1.xpose.msra.mxu0 0.0
    %434 = vmatprep.subr.mxu0 0.0
    %435 = vmatpush1.xpose.msra.mxu0 0.0
    %436 = vmatprep.subr.mxu0 0.0
    %437 = vmatpush1.xpose.msra.mxu0 0.0
    %438 = vmatprep.subr.mxu0 0.0
    %439 = vmatpush1.xpose.msra.mxu0 0.0
    %440 = vmatprep.subr.mxu0 0.0
    %441 = vmatpush1.xpose.msra.mxu0 0.0
    %442 = vmatprep.subr.mxu0 0.0
    %443 = vmatpush1.xpose.msra.mxu0 0.0
    %444 = vmatprep.subr.mxu0 0.0
    %445 = vmatpush1.xpose.msra.mxu0 0.0
    %446 = vmatprep.subr.mxu0 0.0
    %447 = vmatpush1.xpose.msra.mxu0 0.0
    %448 = vmatprep.subr.mxu0 0.0
    %449 = vmatpush1.xpose.msra.mxu0 0.0
    %450 = vmatprep.subr.mxu0 0.0
    %451 = vmatpush1.xpose.msra.mxu0 0.0
    %452 = vmatprep.subr.mxu0 0.0
    %453 = vmatpush1.xpose.msra.mxu0 0.0
    %454 = vmatprep.subr.mxu0 0.0
    %455 = vmatpush1.xpose.msra.mxu0 0.0
    %456 = vmatprep.subr.mxu0 0.0
    %457 = vmatpush1.xpose.msra.mxu0 0.0
    %458 = vmatprep.subr.mxu0 0.0
    %459 = vmatpush1.xpose.msra.mxu0 0.0
    %460 = vmatprep.subr.mxu0 0.0
    %461 = vmatpush1.xpose.msra.mxu0 0.0
    %462 = vmatprep.subr.mxu0 0.0
    %463 = vmatpush1.xpose.msra.mxu0 0.0
    %464 = vmatprep.subr.mxu0 0.0
    %465 = vmatpush1.xpose.msra.mxu0 0.0
    %466 = vmatprep.subr.mxu0 0.0
    %467 = vmatpush1.xpose.msra.mxu0 0.0
    %468 = vmatprep.subr.mxu0 0.0
    %469 = vmatpush1.xpose.msra.mxu0 0.0
    %470 = vmatprep.subr.mxu0 0.0
    %471 = vmatpush1.xpose.msra.mxu0 0.0
    %472 = vmatprep.mubr.f32.mxu0 0.0
    %473 = vmatmul.mubr.f32.gmra.mrb[0].mxu0 %v399
    %v474 = vpop.f32.mrb[0].mxu0
    %v475 = vadd.f32 0.0, %v474
    %v476 = vpop.f32.mrb[0].mxu0
    %477 = vmatprep.mubr.f32.mxu0 0.0
    %478 = vmatmul.mubr.f32.gmra.mrb[0].mxu0 %v402
    %v479 = vpop.f32.mrb[0].mxu0
    %v480 = vadd.f32 0.0, %v479
    %v481 = vpop.f32.mrb[0].mxu0
    %482 = vdwg.mxu0
    %v483 = vsel %vm397, %v475, -inf
    %484 = vmax.xlane.f32.xlu0 %v483
    %v485 = vpop.xlane.xlu0 %484
    %v486 = vsel %vm397, %v480, -inf
    %487 = vmax.xlane.f32.xlu0 %v486
    %v488 = vpop.xlane.xlu0 %487
    %v489 = vsub.f32 %v475, %v485
    %v490 = vsub.f32 %v480, %v488
    %v491 = vmul.f32 %v489, 1.442695
    %v492 = vpow.pop %v491
    %v493 = vmul.f32 %v490, 1.442695
    %v494 = vpow.pop %v493
    %v495 = vsel %vm397, %v492, 0.0
    %496 = vadd.xlane.f32.xlu0 %v495
    %v497 = vpop.xlane.xlu0 %496
    %v498 = vsel %vm397, %v494, 0.0
    %499 = vadd.xlane.f32.xlu0 %v498
    %v500 = vpop.xlane.xlu0 %499
    %v501 = vrcp.pop %v497
    %v502 = vrcp.pop %v500
    %v503 = vmul.f32 %v492, %v501
    %v504 = vmul.f32 %v494, %v502
    %v506 = vsel %vm397, %v503, 0
    %v509 = vsel %vm397, %v504, 0
    %511 = vmatprep.subr.mxu0 0.0
    %512 = vmatpush1.msra.mxu0 %v367
    %513 = vmatprep.subr.mxu0 0.0
    %514 = vmatpush1.msra.mxu0 %v373
    %515 = vmatprep.subr.mxu0 0.0
    %516 = vmatpush1.msra.mxu0 0.0
    %517 = vmatprep.subr.mxu0 0.0
    %518 = vmatpush1.msra.mxu0 0.0
    %519 = vmatprep.subr.mxu0 0.0
    %520 = vmatpush1.msra.mxu0 0.0
    %521 = vmatprep.subr.mxu0 0.0
    %522 = vmatpush1.msra.mxu0 0.0
    %523 = vmatprep.subr.mxu0 0.0
    %524 = vmatpush1.msra.mxu0 0.0
    %525 = vmatprep.subr.mxu0 0.0
    %526 = vmatpush1.msra.mxu0 0.0
    %527 = vmatprep.subr.mxu0 0.0
    %528 = vmatpush1.msra.mxu0 0.0
    %529 = vmatprep.subr.mxu0 0.0
    %530 = vmatpush1.msra.mxu0 0.0
    %531 = vmatprep.subr.mxu0 0.0
    %532 = vmatpush1.msra.mxu0 0.0
    %533 = vmatprep.subr.mxu0 0.0
    %534 = vmatpush1.msra.mxu0 0.0
    %535 = vmatprep.subr.mxu0 0.0
    %536 = vmatpush1.msra.mxu0 0.0
    %537 = vmatprep.subr.mxu0 0.0
    %538 = vmatpush1.msra.mxu0 0.0
    %539 = vmatprep.subr.mxu0 0.0
    %540 = vmatpush1.msra.mxu0 0.0
    %541 = vmatprep.subr.mxu0 0.0
    %542 = vmatpush1.msra.mxu0 0.0
    %543 = vmatprep.subr.mxu0 0.0
    %544 = vmatpush1.msra.mxu0 0.0
    %545 = vmatprep.subr.mxu0 0.0
    %546 = vmatpush1.msra.mxu0 0.0
    %547 = vmatprep.subr.mxu0 0.0
    %548 = vmatpush1.msra.mxu0 0.0
    %549 = vmatprep.subr.mxu0 0.0
    %550 = vmatpush1.msra.mxu0 0.0
    %551 = vmatprep.subr.mxu0 0.0
    %552 = vmatpush1.msra.mxu0 0.0
    %553 = vmatprep.subr.mxu0 0.0
    %554 = vmatpush1.msra.mxu0 0.0
    %555 = vmatprep.subr.mxu0 0.0
    %556 = vmatpush1.msra.mxu0 0.0
    %557 = vmatprep.subr.mxu0 0.0
    %558 = vmatpush1.msra.mxu0 0.0
    %559 = vmatprep.subr.mxu0 0.0
    %560 = vmatpush1.msra.mxu0 0.0
    %561 = vmatprep.subr.mxu0 0.0
    %562 = vmatpush1.msra.mxu0 0.0
    %563 = vmatprep.subr.mxu0 0.0
    %564 = vmatpush1.msra.mxu0 0.0
    %565 = vmatprep.subr.mxu0 0.0
    %566 = vmatpush1.msra.mxu0 0.0
    %567 = vmatprep.subr.mxu0 0.0
    %568 = vmatpush1.msra.mxu0 0.0
    %569 = vmatprep.subr.mxu0 0.0
    %570 = vmatpush1.msra.mxu0 0.0
    %571 = vmatprep.subr.mxu0 0.0
    %572 = vmatpush1.msra.mxu0 0.0
    %573 = vmatprep.subr.mxu0 0.0
    %574 = vmatpush1.msra.mxu0 0.0
    %575 = vmatprep.mubr.f32.mxu0 0.0
    %576 = vmatmul.mubr.f32.gmra.mrb[0].mxu0 %v506
    %v577 = vpop.f32.mrb[0].mxu0
    %v578 = vadd.f32 0.0, %v577
    %v579 = vpop.f32.mrb[0].mxu0
    %580 = vmatprep.mubr.f32.mxu0 0.0
    %581 = vmatmul.mubr.f32.gmra.mrb[0].mxu0 %v509
    %v582 = vpop.f32.mrb[0].mxu0
    %v583 = vadd.f32 0.0, %v582
    %v584 = vpop.f32.mrb[0].mxu0
    %585 = vdwg.mxu0
    %586 = vrot.lane.b32.xlu0 %v387, 112
    %v587 = vpop.permute.xlu0 %586
    %588 = vrot.lane.b32.xlu0 %v388, 112
    %v589 = vpop.permute.xlu0 %588
    %590 = vrot.lane.b32.xlu0 %v365, 48
    %v591 = vpop.permute.xlu0 %590
    %592 = vrot.lane.b32.xlu0 %v371, 48
    %v593 = vpop.permute.xlu0 %592
    %v594 = vsel %vm397, %v587, 0
    %v596 = vsel %vm397, %v589, 0
    %v598 = vsel %vm397, %v591, 0
    %v600 = vsel %vm397, %v593, 0
    %602 = vmatprep.subr.mxu0 0.0
    %603 = vmatpush1.xpose.msra.mxu0 %v598
    %604 = vmatprep.subr.mxu0 0.0
    %605 = vmatpush1.xpose.msra.mxu0 %v600
    %606 = vmatprep.subr.mxu0 0.0
    %607 = vmatpush1.xpose.msra.mxu0 0.0
    %608 = vmatprep.subr.mxu0 0.0
    %609 = vmatpush1.xpose.msra.mxu0 0.0
    %610 = vmatprep.subr.mxu0 0.0
    %611 = vmatpush1.xpose.msra.mxu0 0.0
    %612 = vmatprep.subr.mxu0 0.0
    %613 = vmatpush1.xpose.msra.mxu0 0.0
    %614 = vmatprep.subr.mxu0 0.0
    %615 = vmatpush1.xpose.msra.mxu0 0.0
    %616 = vmatprep.subr.mxu0 0.0
    %617 = vmatpush1.xpose.msra.mxu0 0.0
    %618 = vmatprep.subr.mxu0 0.0
    %619 = vmatpush1.xpose.msra.mxu0 0.0
    %620 = vmatprep.subr.mxu0 0.0
    %621 = vmatpush1.xpose.msra.mxu0 0.0
    %622 = vmatprep.subr.mxu0 0.0
    %623 = vmatpush1.xpose.msra.mxu0 0.0
    %624 = vmatprep.subr.mxu0 0.0
    %625 = vmatpush1.xpose.msra.mxu0 0.0
    %626 = vmatprep.subr.mxu0 0.0
    %627 = vmatpush1.xpose.msra.mxu0 0.0
    %628 = vmatprep.subr.mxu0 0.0
    %629 = vmatpush1.xpose.msra.mxu0 0.0
    %630 = vmatprep.subr.mxu0 0.0
    %631 = vmatpush1.xpose.msra.mxu0 0.0
    %632 = vmatprep.subr.mxu0 0.0
    %633 = vmatpush1.xpose.msra.mxu0 0.0
    %634 = vmatprep.subr.mxu0 0.0
    %635 = vmatpush1.xpose.msra.mxu0 0.0
    %636 = vmatprep.subr.mxu0 0.0
    %637 = vmatpush1.xpose.msra.mxu0 0.0
    %638 = vmatprep.subr.mxu0 0.0
    %639 = vmatpush1.xpose.msra.mxu0 0.0
    %640 = vmatprep.subr.mxu0 0.0
    %641 = vmatpush1.xpose.msra.mxu0 0.0
    %642 = vmatprep.subr.mxu0 0.0
    %643 = vmatpush1.xpose.msra.mxu0 0.0
    %644 = vmatprep.subr.mxu0 0.0
    %645 = vmatpush1.xpose.msra.mxu0 0.0
    %646 = vmatprep.subr.mxu0 0.0
    %647 = vmatpush1.xpose.msra.mxu0 0.0
    %648 = vmatprep.subr.mxu0 0.0
    %649 = vmatpush1.xpose.msra.mxu0 0.0
    %650 = vmatprep.subr.mxu0 0.0
    %651 = vmatpush1.xpose.msra.mxu0 0.0
    %652 = vmatprep.subr.mxu0 0.0
    %653 = vmatpush1.xpose.msra.mxu0 0.0
    %654 = vmatprep.subr.mxu0 0.0
    %655 = vmatpush1.xpose.msra.mxu0 0.0
    %656 = vmatprep.subr.mxu0 0.0
    %657 = vmatpush1.xpose.msra.mxu0 0.0
    %658 = vmatprep.subr.mxu0 0.0
    %659 = vmatpush1.xpose.msra.mxu0 0.0
    %660 = vmatprep.subr.mxu0 0.0
    %661 = vmatpush1.xpose.msra.mxu0 0.0
    %662 = vmatprep.subr.mxu0 0.0
    %663 = vmatpush1.xpose.msra.mxu0 0.0
    %664 = vmatprep.subr.mxu0 0.0
    %665 = vmatpush1.xpose.msra.mxu0 0.0
    %666 = vmatprep.mubr.f32.mxu0 0.0
    %667 = vmatmul.mubr.f32.gmra.mrb[0].mxu0 %v594
    %v668 = vpop.f32.mrb[0].mxu0
    %v669 = vadd.f32 0.0, %v668
    %v670 = vpop.f32.mrb[0].mxu0
    %671 = vmatprep.mubr.f32.mxu0 0.0
    %672 = vmatmul.mubr.f32.gmra.mrb[0].mxu0 %v596
    %v673 = vpop.f32.mrb[0].mxu0
    %v674 = vadd.f32 0.0, %v673
    %v675 = vpop.f32.mrb[0].mxu0
    %676 = vdwg.mxu0
    %v677 = vsel %vm397, %v669, -inf
    %678 = vmax.xlane.f32.xlu0 %v677
    %v679 = vpop.xlane.xlu0 %678
    %v680 = vsel %vm397, %v674, -inf
    %681 = vmax.xlane.f32.xlu0 %v680
    %v682 = vpop.xlane.xlu0 %681
    %v683 = vsub.f32 %v669, %v679
    %v684 = vsub.f32 %v674, %v682
    %v685 = vmul.f32 %v683, 1.442695
    %v686 = vpow.pop %v685
    %v687 = vmul.f32 %v684, 1.442695
    %v688 = vpow.pop %v687
    %v689 = vsel %vm397, %v686, 0.0
    %690 = vadd.xlane.f32.xlu0 %v689
    %v691 = vpop.xlane.xlu0 %690
    %v692 = vsel %vm397, %v688, 0.0
    %693 = vadd.xlane.f32.xlu0 %v692
    %v694 = vpop.xlane.xlu0 %693
    %v695 = vrcp.pop %v691
    %v696 = vrcp.pop %v694
    %v697 = vmul.f32 %v686, %v695
    %v698 = vmul.f32 %v688, %v696
    %701 = vrot.lane.b32.xlu0 %v367, 112
    %v702 = vpop.permute.xlu0 %701
    %703 = vrot.lane.b32.xlu0 %v373, 112
    %v704 = vpop.permute.xlu0 %703
    %v708 = vsel %vm397, %v697, 0
    %v711 = vsel %vm397, %v698, 0
    %713 = vmatprep.subr.mxu0 0.0
    %714 = vmatpush1.msra.mxu0 %v702
    %715 = vmatprep.subr.mxu0 0.0
    %716 = vmatpush1.msra.mxu0 %v704
    %717 = vmatprep.subr.mxu0 0.0
    %718 = vmatpush1.msra.mxu0 0.0
    %719 = vmatprep.subr.mxu0 0.0
    %720 = vmatpush1.msra.mxu0 0.0
    %721 = vmatprep.subr.mxu0 0.0
    %722 = vmatpush1.msra.mxu0 0.0
    %723 = vmatprep.subr.mxu0 0.0
    %724 = vmatpush1.msra.mxu0 0.0
    %725 = vmatprep.subr.mxu0 0.0
    %726 = vmatpush1.msra.mxu0 0.0
    %727 = vmatprep.subr.mxu0 0.0
    %728 = vmatpush1.msra.mxu0 0.0
    %729 = vmatprep.subr.mxu0 0.0
    %730 = vmatpush1.msra.mxu0 0.0
    %731 = vmatprep.subr.mxu0 0.0
    %732 = vmatpush1.msra.mxu0 0.0
    %733 = vmatprep.subr.mxu0 0.0
    %734 = vmatpush1.msra.mxu0 0.0
    %735 = vmatprep.subr.mxu0 0.0
    %736 = vmatpush1.msra.mxu0 0.0
    %737 = vmatprep.subr.mxu0 0.0
    %738 = vmatpush1.msra.mxu0 0.0
    %739 = vmatprep.subr.mxu0 0.0
    %740 = vmatpush1.msra.mxu0 0.0
    %741 = vmatprep.subr.mxu0 0.0
    %742 = vmatpush1.msra.mxu0 0.0
    %743 = vmatprep.subr.mxu0 0.0
    %744 = vmatpush1.msra.mxu0 0.0
    %745 = vmatprep.subr.mxu0 0.0
    %746 = vmatpush1.msra.mxu0 0.0
    %747 = vmatprep.subr.mxu0 0.0
    %748 = vmatpush1.msra.mxu0 0.0
    %749 = vmatprep.subr.mxu0 0.0
    %750 = vmatpush1.msra.mxu0 0.0
    %751 = vmatprep.subr.mxu0 0.0
    %752 = vmatpush1.msra.mxu0 0.0
    %753 = vmatprep.subr.mxu0 0.0
    %754 = vmatpush1.msra.mxu0 0.0
    %755 = vmatprep.subr.mxu0 0.0
    %756 = vmatpush1.msra.mxu0 0.0
    %757 = vmatprep.subr.mxu0 0.0
    %758 = vmatpush1.msra.mxu0 0.0
    %759 = vmatprep.subr.mxu0 0.0
    %760 = vmatpush1.msra.mxu0 0.0
    %761 = vmatprep.subr.mxu0 0.0
    %762 = vmatpush1.msra.mxu0 0.0
    %763 = vmatprep.subr.mxu0 0.0
    %764 = vmatpush1.msra.mxu0 0.0
    %765 = vmatprep.subr.mxu0 0.0
    %766 = vmatpush1.msra.mxu0 0.0
    %767 = vmatprep.subr.mxu0 0.0
    %768 = vmatpush1.msra.mxu0 0.0
    %769 = vmatprep.subr.mxu0 0.0
    %770 = vmatpush1.msra.mxu0 0.0
    %771 = vmatprep.subr.mxu0 0.0
    %772 = vmatpush1.msra.mxu0 0.0
    %773 = vmatprep.subr.mxu0 0.0
    %774 = vmatpush1.msra.mxu0 0.0
    %775 = vmatprep.subr.mxu0 0.0
    %776 = vmatpush1.msra.mxu0 0.0
    %777 = vmatprep.mubr.f32.mxu0 0.0
    %778 = vmatmul.mubr.f32.gmra.mrb[0].mxu0 %v708
    %v779 = vpop.f32.mrb[0].mxu0
    %v780 = vadd.f32 0.0, %v779
    %v781 = vpop.f32.mrb[0].mxu0
    %782 = vmatprep.mubr.f32.mxu0 0.0
    %783 = vmatmul.mubr.f32.gmra.mrb[0].mxu0 %v711
    %v784 = vpop.f32.mrb[0].mxu0
    %v785 = vadd.f32 0.0, %v784
    %v786 = vpop.f32.mrb[0].mxu0
    %787 = vdwg.mxu0
    %788 = vrot.lane.b32.xlu0 %v387, 96
    %v789 = vpop.permute.xlu0 %788
    %790 = vrot.lane.b32.xlu0 %v388, 96
    %v791 = vpop.permute.xlu0 %790
    %792 = vrot.lane.b32.xlu0 %v365, 32
    %v793 = vpop.permute.xlu0 %792
    %794 = vrot.lane.b32.xlu0 %v371, 32
    %v795 = vpop.permute.xlu0 %794
    %v796 = vsel %vm397, %v789, 0
    %v798 = vsel %vm397, %v791, 0
    %v800 = vsel %vm397, %v793, 0
    %v802 = vsel %vm397, %v795, 0
    %804 = vmatprep.subr.mxu0 0.0
    %805 = vmatpush1.xpose.msra.mxu0 %v800
    %806 = vmatprep.subr.mxu0 0.0
    %807 = vmatpush1.xpose.msra.mxu0 %v802
    %808 = vmatprep.subr.mxu0 0.0
    %809 = vmatpush1.xpose.msra.mxu0 0.0
    %810 = vmatprep.subr.mxu0 0.0
    %811 = vmatpush1.xpose.msra.mxu0 0.0
    %812 = vmatprep.subr.mxu0 0.0
    %813 = vmatpush1.xpose.msra.mxu0 0.0
    %814 = vmatprep.subr.mxu0 0.0
    %815 = vmatpush1.xpose.msra.mxu0 0.0
    %816 = vmatprep.subr.mxu0 0.0
    %817 = vmatpush1.xpose.msra.mxu0 0.0
    %818 = vmatprep.subr.mxu0 0.0
    %819 = vmatpush1.xpose.msra.mxu0 0.0
    %820 = vmatprep.subr.mxu0 0.0
    %821 = vmatpush1.xpose.msra.mxu0 0.0
    %822 = vmatprep.subr.mxu0 0.0
    %823 = vmatpush1.xpose.msra.mxu0 0.0
    %824 = vmatprep.subr.mxu0 0.0
    %825 = vmatpush1.xpose.msra.mxu0 0.0
    %826 = vmatprep.subr.mxu0 0.0
    %827 = vmatpush1.xpose.msra.mxu0 0.0
    %828 = vmatprep.subr.mxu0 0.0
    %829 = vmatpush1.xpose.msra.mxu0 0.0
    %830 = vmatprep.subr.mxu0 0.0
    %831 = vmatpush1.xpose.msra.mxu0 0.0
    %832 = vmatprep.subr.mxu0 0.0
    %833 = vmatpush1.xpose.msra.mxu0 0.0
    %834 = vmatprep.subr.mxu0 0.0
    %835 = vmatpush1.xpose.msra.mxu0 0.0
    %836 = vmatprep.subr.mxu0 0.0
    %837 = vmatpush1.xpose.msra.mxu0 0.0
    %838 = vmatprep.subr.mxu0 0.0
    %839 = vmatpush1.xpose.msra.mxu0 0.0
    %840 = vmatprep.subr.mxu0 0.0
    %841 = vmatpush1.xpose.msra.mxu0 0.0
    %842 = vmatprep.subr.mxu0 0.0
    %843 = vmatpush1.xpose.msra.mxu0 0.0
    %844 = vmatprep.subr.mxu0 0.0
    %845 = vmatpush1.xpose.msra.mxu0 0.0
    %846 = vmatprep.subr.mxu0 0.0
    %847 = vmatpush1.xpose.msra.mxu0 0.0
    %848 = vmatprep.subr.mxu0 0.0
    %849 = vmatpush1.xpose.msra.mxu0 0.0
    %850 = vmatprep.subr.mxu0 0.0
    %851 = vmatpush1.xpose.msra.mxu0 0.0
    %852 = vmatprep.subr.mxu0 0.0
    %853 = vmatpush1.xpose.msra.mxu0 0.0
    %854 = vmatprep.subr.mxu0 0.0
    %855 = vmatpush1.xpose.msra.mxu0 0.0
    %856 = vmatprep.subr.mxu0 0.0
    %857 = vmatpush1.xpose.msra.mxu0 0.0
    %858 = vmatprep.subr.mxu0 0.0
    %859 = vmatpush1.xpose.msra.mxu0 0.0
    %860 = vmatprep.subr.mxu0 0.0
    %861 = vmatpush1.xpose.msra.mxu0 0.0
    %862 = vmatprep.subr.mxu0 0.0
    %863 = vmatpush1.xpose.msra.mxu0 0.0
    %864 = vmatprep.subr.mxu0 0.0
    %865 = vmatpush1.xpose.msra.mxu0 0.0
    %866 = vmatprep.subr.mxu0 0.0
    %867 = vmatpush1.xpose.msra.mxu0 0.0
    %868 = vmatprep.mubr.f32.mxu0 0.0
    %869 = vmatmul.mubr.f32.gmra.mrb[0].mxu0 %v796
    %v870 = vpop.f32.mrb[0].mxu0
    %v871 = vadd.f32 0.0, %v870
    %v872 = vpop.f32.mrb[0].mxu0
    %873 = vmatprep.mubr.f32.mxu0 0.0
    %874 = vmatmul.mubr.f32.gmra.mrb[0].mxu0 %v798
    %v875 = vpop.f32.mrb[0].mxu0
    %v876 = vadd.f32 0.0, %v875
    %v877 = vpop.f32.mrb[0].mxu0
    %878 = vdwg.mxu0
    %v879 = vsel %vm397, %v871, -inf
    %880 = vmax.xlane.f32.xlu0 %v879
    %v881 = vpop.xlane.xlu0 %880
    %v882 = vsel %vm397, %v876, -inf
    %883 = vmax.xlane.f32.xlu0 %v882
    %v884 = vpop.xlane.xlu0 %883
    %v885 = vsub.f32 %v871, %v881
    %v886 = vsub.f32 %v876, %v884
    %v887 = vmul.f32 %v885, 1.442695
    %v888 = vpow.pop %v887
    %v889 = vmul.f32 %v886, 1.442695
    %v890 = vpow.pop %v889
    %v891 = vsel %vm397, %v888, 0.0
    %892 = vadd.xlane.f32.xlu0 %v891
    %v893 = vpop.xlane.xlu0 %892
    %v894 = vsel %vm397, %v890, 0.0
    %895 = vadd.xlane.f32.xlu0 %v894
    %v896 = vpop.xlane.xlu0 %895
    %v897 = vrcp.pop %v893
    %v898 = vrcp.pop %v896
    %v899 = vmul.f32 %v888, %v897
    %v900 = vmul.f32 %v890, %v898
    %901 = vrot.lane.b32.xlu0 %v367, 96
    %v902 = vpop.permute.xlu0 %901
    %903 = vrot.lane.b32.xlu0 %v373, 96
    %v904 = vpop.permute.xlu0 %903
    %v908 = vsel %vm397, %v899, 0
    %v911 = vsel %vm397, %v900, 0
    %913 = vmatprep.subr.mxu0 0.0
    %914 = vmatpush1.msra.mxu0 %v902
    %915 = vmatprep.subr.mxu0 0.0
    %916 = vmatpush1.msra.mxu0 %v904
    %917 = vmatprep.subr.mxu0 0.0
    %918 = vmatpush1.msra.mxu0 0.0
    %919 = vmatprep.subr.mxu0 0.0
    %920 = vmatpush1.msra.mxu0 0.0
    %921 = vmatprep.subr.mxu0 0.0
    %922 = vmatpush1.msra.mxu0 0.0
    %923 = vmatprep.subr.mxu0 0.0
    %924 = vmatpush1.msra.mxu0 0.0
    %925 = vmatprep.subr.mxu0 0.0
    %926 = vmatpush1.msra.mxu0 0.0
    %927 = vmatprep.subr.mxu0 0.0
    %928 = vmatpush1.msra.mxu0 0.0
    %929 = vmatprep.subr.mxu0 0.0
    %930 = vmatpush1.msra.mxu0 0.0
    %931 = vmatprep.subr.mxu0 0.0
    %932 = vmatpush1.msra.mxu0 0.0
    %933 = vmatprep.subr.mxu0 0.0
    %934 = vmatpush1.msra.mxu0 0.0
    %935 = vmatprep.subr.mxu0 0.0
    %936 = vmatpush1.msra.mxu0 0.0
    %937 = vmatprep.subr.mxu0 0.0
    %938 = vmatpush1.msra.mxu0 0.0
    %939 = vmatprep.subr.mxu0 0.0
    %940 = vmatpush1.msra.mxu0 0.0
    %941 = vmatprep.subr.mxu0 0.0
    %942 = vmatpush1.msra.mxu0 0.0
    %943 = vmatprep.subr.mxu0 0.0
    %944 = vmatpush1.msra.mxu0 0.0
    %945 = vmatprep.subr.mxu0 0.0
    %946 = vmatpush1.msra.mxu0 0.0
    %947 = vmatprep.subr.mxu0 0.0
    %948 = vmatpush1.msra.mxu0 0.0
    %949 = vmatprep.subr.mxu0 0.0
    %950 = vmatpush1.msra.mxu0 0.0
    %951 = vmatprep.subr.mxu0 0.0
    %952 = vmatpush1.msra.mxu0 0.0
    %953 = vmatprep.subr.mxu0 0.0
    %954 = vmatpush1.msra.mxu0 0.0
    %955 = vmatprep.subr.mxu0 0.0
    %956 = vmatpush1.msra.mxu0 0.0
    %957 = vmatprep.subr.mxu0 0.0
    %958 = vmatpush1.msra.mxu0 0.0
    %959 = vmatprep.subr.mxu0 0.0
    %960 = vmatpush1.msra.mxu0 0.0
    %961 = vmatprep.subr.mxu0 0.0
    %962 = vmatpush1.msra.mxu0 0.0
    %963 = vmatprep.subr.mxu0 0.0
    %964 = vmatpush1.msra.mxu0 0.0
    %965 = vmatprep.subr.mxu0 0.0
    %966 = vmatpush1.msra.mxu0 0.0
    %967 = vmatprep.subr.mxu0 0.0
    %968 = vmatpush1.msra.mxu0 0.0
    %969 = vmatprep.subr.mxu0 0.0
    %970 = vmatpush1.msra.mxu0 0.0
    %971 = vmatprep.subr.mxu0 0.0
    %972 = vmatpush1.msra.mxu0 0.0
    %973 = vmatprep.subr.mxu0 0.0
    %974 = vmatpush1.msra.mxu0 0.0
    %975 = vmatprep.subr.mxu0 0.0
    %976 = vmatpush1.msra.mxu0 0.0
    %977 = vmatprep.mubr.f32.mxu0 0.0
    %978 = vmatmul.mubr.f32.gmra.mrb[0].mxu0 %v908
    %v979 = vpop.f32.mrb[0].mxu0
    %v980 = vadd.f32 0.0, %v979
    %v981 = vpop.f32.mrb[0].mxu0
    %982 = vmatprep.mubr.f32.mxu0 0.0
    %983 = vmatmul.mubr.f32.gmra.mrb[0].mxu0 %v911
    %v984 = vpop.f32.mrb[0].mxu0
    %v985 = vadd.f32 0.0, %v984
    %v986 = vpop.f32.mrb[0].mxu0
    %987 = vdwg.mxu0
    %988 = vrot.lane.b32.xlu0 %v387, 80
    %v989 = vpop.permute.xlu0 %988
    %990 = vrot.lane.b32.xlu0 %v388, 80
    %v991 = vpop.permute.xlu0 %990
    %992 = vrot.lane.b32.xlu0 %v365, 16
    %v993 = vpop.permute.xlu0 %992
    %994 = vrot.lane.b32.xlu0 %v371, 16
    %v995 = vpop.permute.xlu0 %994
    %v996 = vsel %vm397, %v989, 0
    %v998 = vsel %vm397, %v991, 0
    %v1000 = vsel %vm397, %v993, 0
    %v1002 = vsel %vm397, %v995, 0
    %1004 = vmatprep.subr.mxu0 0.0
    %1005 = vmatpush1.xpose.msra.mxu0 %v1000
    %1006 = vmatprep.subr.mxu0 0.0
    %1007 = vmatpush1.xpose.msra.mxu0 %v1002
    %1008 = vmatprep.subr.mxu0 0.0
    %1009 = vmatpush1.xpose.msra.mxu0 0.0
    %1010 = vmatprep.subr.mxu0 0.0
    %1011 = vmatpush1.xpose.msra.mxu0 0.0
    %1012 = vmatprep.subr.mxu0 0.0
    %1013 = vmatpush1.xpose.msra.mxu0 0.0
    %1014 = vmatprep.subr.mxu0 0.0
    %1015 = vmatpush1.xpose.msra.mxu0 0.0
    %1016 = vmatprep.subr.mxu0 0.0
    %1017 = vmatpush1.xpose.msra.mxu0 0.0
    %1018 = vmatprep.subr.mxu0 0.0
    %1019 = vmatpush1.xpose.msra.mxu0 0.0
    %1020 = vmatprep.subr.mxu0 0.0
    %1021 = vmatpush1.xpose.msra.mxu0 0.0
    %1022 = vmatprep.subr.mxu0 0.0
    %1023 = vmatpush1.xpose.msra.mxu0 0.0
    %1024 = vmatprep.subr.mxu0 0.0
    %1025 = vmatpush1.xpose.msra.mxu0 0.0
    %1026 = vmatprep.subr.mxu0 0.0
    %1027 = vmatpush1.xpose.msra.mxu0 0.0
    %1028 = vmatprep.subr.mxu0 0.0
    %1029 = vmatpush1.xpose.msra.mxu0 0.0
    %1030 = vmatprep.subr.mxu0 0.0
    %1031 = vmatpush1.xpose.msra.mxu0 0.0
    %1032 = vmatprep.subr.mxu0 0.0
    %1033 = vmatpush1.xpose.msra.mxu0 0.0
    %1034 = vmatprep.subr.mxu0 0.0
    %1035 = vmatpush1.xpose.msra.mxu0 0.0
    %1036 = vmatprep.subr.mxu0 0.0
    %1037 = vmatpush1.xpose.msra.mxu0 0.0
    %1038 = vmatprep.subr.mxu0 0.0
    %1039 = vmatpush1.xpose.msra.mxu0 0.0
    %1040 = vmatprep.subr.mxu0 0.0
    %1041 = vmatpush1.xpose.msra.mxu0 0.0
    %1042 = vmatprep.subr.mxu0 0.0
    %1043 = vmatpush1.xpose.msra.mxu0 0.0
    %1044 = vmatprep.subr.mxu0 0.0
    %1045 = vmatpush1.xpose.msra.mxu0 0.0
    %1046 = vmatprep.subr.mxu0 0.0
    %1047 = vmatpush1.xpose.msra.mxu0 0.0
    %1048 = vmatprep.subr.mxu0 0.0
    %1049 = vmatpush1.xpose.msra.mxu0 0.0
    %1050 = vmatprep.subr.mxu0 0.0
    %1051 = vmatpush1.xpose.msra.mxu0 0.0
    %1052 = vmatprep.subr.mxu0 0.0
    %1053 = vmatpush1.xpose.msra.mxu0 0.0
    %1054 = vmatprep.subr.mxu0 0.0
    %1055 = vmatpush1.xpose.msra.mxu0 0.0
    %1056 = vmatprep.subr.mxu0 0.0
    %1057 = vmatpush1.xpose.msra.mxu0 0.0
    %1058 = vmatprep.subr.mxu0 0.0
    %1059 = vmatpush1.xpose.msra.mxu0 0.0
    %1060 = vmatprep.subr.mxu0 0.0
    %1061 = vmatpush1.xpose.msra.mxu0 0.0
    %1062 = vmatprep.subr.mxu0 0.0
    %1063 = vmatpush1.xpose.msra.mxu0 0.0
    %1064 = vmatprep.subr.mxu0 0.0
    %1065 = vmatpush1.xpose.msra.mxu0 0.0
    %1066 = vmatprep.subr.mxu0 0.0
    %1067 = vmatpush1.xpose.msra.mxu0 0.0
    %1068 = vmatprep.mubr.f32.mxu0 0.0
    %1069 = vmatmul.mubr.f32.gmra.mrb[0].mxu0 %v996
    %v1070 = vpop.f32.mrb[0].mxu0
    %v1071 = vadd.f32 0.0, %v1070
    %v1072 = vpop.f32.mrb[0].mxu0
    %1073 = vmatprep.mubr.f32.mxu0 0.0
    %1074 = vmatmul.mubr.f32.gmra.mrb[0].mxu0 %v998
    %v1075 = vpop.f32.mrb[0].mxu0
    %v1076 = vadd.f32 0.0, %v1075
    %v1077 = vpop.f32.mrb[0].mxu0
    %1078 = vdwg.mxu0
    %v1079 = vsel %vm397, %v1071, -inf
    %1080 = vmax.xlane.f32.xlu0 %v1079
    %v1081 = vpop.xlane.xlu0 %1080
    %v1082 = vsel %vm397, %v1076, -inf
    %1083 = vmax.xlane.f32.xlu0 %v1082
    %v1084 = vpop.xlane.xlu0 %1083
    %v1085 = vsub.f32 %v1071, %v1081
    %v1086 = vsub.f32 %v1076, %v1084
    %v1087 = vmul.f32 %v1085, 1.442695
    %v1088 = vpow.pop %v1087
    %v1089 = vmul.f32 %v1086, 1.442695
    %v1090 = vpow.pop %v1089
    %v1091 = vsel %vm397, %v1088, 0.0
    %1092 = vadd.xlane.f32.xlu0 %v1091
    %v1093 = vpop.xlane.xlu0 %1092
    %v1094 = vsel %vm397, %v1090, 0.0
    %1095 = vadd.xlane.f32.xlu0 %v1094
    %v1096 = vpop.xlane.xlu0 %1095
    %v1097 = vrcp.pop %v1093
    %v1098 = vrcp.pop %v1096
    %v1099 = vmul.f32 %v1088, %v1097
    %v1100 = vmul.f32 %v1090, %v1098
    %1101 = vrot.lane.b32.xlu0 %v367, 80
    %v1102 = vpop.permute.xlu0 %1101
    %1103 = vrot.lane.b32.xlu0 %v373, 80
    %v1104 = vpop.permute.xlu0 %1103
    %v1108 = vsel %vm397, %v1099, 0
    %v1111 = vsel %vm397, %v1100, 0
    %1113 = vmatprep.subr.mxu0 0.0
    %1114 = vmatpush1.msra.mxu0 %v1102
    %1115 = vmatprep.subr.mxu0 0.0
    %1116 = vmatpush1.msra.mxu0 %v1104
    %1117 = vmatprep.subr.mxu0 0.0
    %1118 = vmatpush1.msra.mxu0 0.0
    %1119 = vmatprep.subr.mxu0 0.0
    %1120 = vmatpush1.msra.mxu0 0.0
    %1121 = vmatprep.subr.mxu0 0.0
    %1122 = vmatpush1.msra.mxu0 0.0
    %1123 = vmatprep.subr.mxu0 0.0
    %1124 = vmatpush1.msra.mxu0 0.0
    %1125 = vmatprep.subr.mxu0 0.0
    %1126 = vmatpush1.msra.mxu0 0.0
    %1127 = vmatprep.subr.mxu0 0.0
    %1128 = vmatpush1.msra.mxu0 0.0
    %1129 = vmatprep.subr.mxu0 0.0
    %1130 = vmatpush1.msra.mxu0 0.0
    %1131 = vmatprep.subr.mxu0 0.0
    %1132 = vmatpush1.msra.mxu0 0.0
    %1133 = vmatprep.subr.mxu0 0.0
    %1134 = vmatpush1.msra.mxu0 0.0
    %1135 = vmatprep.subr.mxu0 0.0
    %1136 = vmatpush1.msra.mxu0 0.0
    %1137 = vmatprep.subr.mxu0 0.0
    %1138 = vmatpush1.msra.mxu0 0.0
    %1139 = vmatprep.subr.mxu0 0.0
    %1140 = vmatpush1.msra.mxu0 0.0
    %1141 = vmatprep.subr.mxu0 0.0
    %1142 = vmatpush1.msra.mxu0 0.0
    %1143 = vmatprep.subr.mxu0 0.0
    %1144 = vmatpush1.msra.mxu0 0.0
    %1145 = vmatprep.subr.mxu0 0.0
    %1146 = vmatpush1.msra.mxu0 0.0
    %1147 = vmatprep.subr.mxu0 0.0
    %1148 = vmatpush1.msra.mxu0 0.0
    %1149 = vmatprep.subr.mxu0 0.0
    %1150 = vmatpush1.msra.mxu0 0.0
    %1151 = vmatprep.subr.mxu0 0.0
    %1152 = vmatpush1.msra.mxu0 0.0
    %1153 = vmatprep.subr.mxu0 0.0
    %1154 = vmatpush1.msra.mxu0 0.0
    %1155 = vmatprep.subr.mxu0 0.0
    %1156 = vmatpush1.msra.mxu0 0.0
    %1157 = vmatprep.subr.mxu0 0.0
    %1158 = vmatpush1.msra.mxu0 0.0
    %1159 = vmatprep.subr.mxu0 0.0
    %1160 = vmatpush1.msra.mxu0 0.0
    %1161 = vmatprep.subr.mxu0 0.0
    %1162 = vmatpush1.msra.mxu0 0.0
    %1163 = vmatprep.subr.mxu0 0.0
    %1164 = vmatpush1.msra.mxu0 0.0
    %1165 = vmatprep.subr.mxu0 0.0
    %1166 = vmatpush1.msra.mxu0 0.0
    %1167 = vmatprep.subr.mxu0 0.0
    %1168 = vmatpush1.msra.mxu0 0.0
    %1169 = vmatprep.subr.mxu0 0.0
    %1170 = vmatpush1.msra.mxu0 0.0
    %1171 = vmatprep.subr.mxu0 0.0
    %1172 = vmatpush1.msra.mxu0 0.0
    %1173 = vmatprep.subr.mxu0 0.0
    %1174 = vmatpush1.msra.mxu0 0.0
    %1175 = vmatprep.subr.mxu0 0.0
    %1176 = vmatpush1.msra.mxu0 0.0
    %1177 = vmatprep.mubr.f32.mxu0 0.0
    %1178 = vmatmul.mubr.f32.gmra.mrb[0].mxu0 %v1108
    %v1179 = vpop.f32.mrb[0].mxu0
    %v1180 = vadd.f32 0.0, %v1179
    %v1181 = vpop.f32.mrb[0].mxu0
    %1182 = vmatprep.mubr.f32.mxu0 0.0
    %1183 = vmatmul.mubr.f32.gmra.mrb[0].mxu0 %v1111
    %v1184 = vpop.f32.mrb[0].mxu0
    %v1185 = vadd.f32 0.0, %v1184
    %v1186 = vpop.f32.mrb[0].mxu0
    %1187 = vdwg.mxu0
    %1190 = vrot.lane.b32.xlu0 %v780, 16
    %v1191 = vpop.permute.xlu0 %1190
    %1192 = vrot.lane.b32.xlu0 %v785, 16
    %v1193 = vpop.permute.xlu0 %1192
    %1198 = vrot.lane.b32.xlu0 %v980, 32
    %v1199 = vpop.permute.xlu0 %1198
    %1200 = vrot.lane.b32.xlu0 %v985, 32
    %v1201 = vpop.permute.xlu0 %1200
    %1206 = vrot.lane.b32.xlu0 %v1180, 48
    %v1207 = vpop.permute.xlu0 %1206
    %1208 = vrot.lane.b32.xlu0 %v1185, 48
    %v1209 = vpop.permute.xlu0 %1208
    %v1212 = vsel %vm397, %v578, %v1191
    %v1213 = vsel %vm397, %v583, %v1193
    %vm1214 = vcmask 261120
    %v1215 = vsel %vm1214, %v1212, %v1199
    %v1216 = vsel %vm1214, %v1213, %v1201
    %vm1217 = vcmask 392192
    %v1218 = vsel %vm1217, %v1215, %v1207
    %v1219 = vsel %vm1217, %v1216, %v1209
    %1222 = vrot.lane.b32.xlu0 %v377, 64
    %v1223 = vpop.permute.xlu0 %1222
    %1224 = vrot.lane.b32.xlu0 %v383, 64
    %v1225 = vpop.permute.xlu0 %1224
    %v1227 = vsel %vm397, %v389, 0
    %v1230 = vsel %vm397, %v390, 0
    %v1232 = vsel %vm397, %v1223, 0
    %v1234 = vsel %vm397, %v1225, 0
    %1236 = vmatprep.subr.mxu0 0.0
    %1237 = vmatpush1.xpose.msra.mxu0 %v1232
    %1238 = vmatprep.subr.mxu0 0.0
    %1239 = vmatpush1.xpose.msra.mxu0 %v1234
    %1240 = vmatprep.subr.mxu0 0.0
    %1241 = vmatpush1.xpose.msra.mxu0 0.0
    %1242 = vmatprep.subr.mxu0 0.0
    %1243 = vmatpush1.xpose.msra.mxu0 0.0
    %1244 = vmatprep.subr.mxu0 0.0
    %1245 = vmatpush1.xpose.msra.mxu0 0.0
    %1246 = vmatprep.subr.mxu0 0.0
    %1247 = vmatpush1.xpose.msra.mxu0 0.0
    %1248 = vmatprep.subr.mxu0 0.0
    %1249 = vmatpush1.xpose.msra.mxu0 0.0
    %1250 = vmatprep.subr.mxu0 0.0
    %1251 = vmatpush1.xpose.msra.mxu0 0.0
    %1252 = vmatprep.subr.mxu0 0.0
    %1253 = vmatpush1.xpose.msra.mxu0 0.0
    %1254 = vmatprep.subr.mxu0 0.0
    %1255 = vmatpush1.xpose.msra.mxu0 0.0
    %1256 = vmatprep.subr.mxu0 0.0
    %1257 = vmatpush1.xpose.msra.mxu0 0.0
    %1258 = vmatprep.subr.mxu0 0.0
    %1259 = vmatpush1.xpose.msra.mxu0 0.0
    %1260 = vmatprep.subr.mxu0 0.0
    %1261 = vmatpush1.xpose.msra.mxu0 0.0
    %1262 = vmatprep.subr.mxu0 0.0
    %1263 = vmatpush1.xpose.msra.mxu0 0.0
    %1264 = vmatprep.subr.mxu0 0.0
    %1265 = vmatpush1.xpose.msra.mxu0 0.0
    %1266 = vmatprep.subr.mxu0 0.0
    %1267 = vmatpush1.xpose.msra.mxu0 0.0
    %1268 = vmatprep.subr.mxu0 0.0
    %1269 = vmatpush1.xpose.msra.mxu0 0.0
    %1270 = vmatprep.subr.mxu0 0.0
    %1271 = vmatpush1.xpose.msra.mxu0 0.0
    %1272 = vmatprep.subr.mxu0 0.0
    %1273 = vmatpush1.xpose.msra.mxu0 0.0
    %1274 = vmatprep.subr.mxu0 0.0
    %1275 = vmatpush1.xpose.msra.mxu0 0.0
    %1276 = vmatprep.subr.mxu0 0.0
    %1277 = vmatpush1.xpose.msra.mxu0 0.0
    %1278 = vmatprep.subr.mxu0 0.0
    %1279 = vmatpush1.xpose.msra.mxu0 0.0
    %1280 = vmatprep.subr.mxu0 0.0
    %1281 = vmatpush1.xpose.msra.mxu0 0.0
    %1282 = vmatprep.subr.mxu0 0.0
    %1283 = vmatpush1.xpose.msra.mxu0 0.0
    %1284 = vmatprep.subr.mxu0 0.0
    %1285 = vmatpush1.xpose.msra.mxu0 0.0
    %1286 = vmatprep.subr.mxu0 0.0
    %1287 = vmatpush1.xpose.msra.mxu0 0.0
    %1288 = vmatprep.subr.mxu0 0.0
    %1289 = vmatpush1.xpose.msra.mxu0 0.0
    %1290 = vmatprep.subr.mxu0 0.0
    %1291 = vmatpush1.xpose.msra.mxu0 0.0
    %1292 = vmatprep.subr.mxu0 0.0
    %1293 = vmatpush1.xpose.msra.mxu0 0.0
    %1294 = vmatprep.subr.mxu0 0.0
    %1295 = vmatpush1.xpose.msra.mxu0 0.0
    %1296 = vmatprep.subr.mxu0 0.0
    %1297 = vmatpush1.xpose.msra.mxu0 0.0
    %1298 = vmatprep.subr.mxu0 0.0
    %1299 = vmatpush1.xpose.msra.mxu0 0.0
    %1300 = vmatprep.mubr.f32.mxu0 0.0
    %1301 = vmatmul.mubr.f32.gmra.mrb[0].mxu0 %v1227
    %v1302 = vpop.f32.mrb[0].mxu0
    %v1303 = vadd.f32 0.0, %v1302
    %v1304 = vpop.f32.mrb[0].mxu0
    %1305 = vmatprep.mubr.f32.mxu0 0.0
    %1306 = vmatmul.mubr.f32.gmra.mrb[0].mxu0 %v1230
    %v1307 = vpop.f32.mrb[0].mxu0
    %v1308 = vadd.f32 0.0, %v1307
    %v1309 = vpop.f32.mrb[0].mxu0
    %1310 = vdwg.mxu0
    %v1311 = vsel %vm397, %v1303, -inf
    %1312 = vmax.xlane.f32.xlu0 %v1311
    %v1313 = vpop.xlane.xlu0 %1312
    %v1314 = vsel %vm397, %v1308, -inf
    %1315 = vmax.xlane.f32.xlu0 %v1314
    %v1316 = vpop.xlane.xlu0 %1315
    %v1317 = vsub.f32 %v1303, %v1313
    %v1318 = vsub.f32 %v1308, %v1316
    %v1319 = vmul.f32 %v1317, 1.442695
    %v1320 = vpow.pop %v1319
    %v1321 = vmul.f32 %v1318, 1.442695
    %v1322 = vpow.pop %v1321
    %v1323 = vsel %vm397, %v1320, 0.0
    %1324 = vadd.xlane.f32.xlu0 %v1323
    %v1325 = vpop.xlane.xlu0 %1324
    %v1326 = vsel %vm397, %v1322, 0.0
    %1327 = vadd.xlane.f32.xlu0 %v1326
    %v1328 = vpop.xlane.xlu0 %1327
    %v1329 = vrcp.pop %v1325
    %v1330 = vrcp.pop %v1328
    %v1331 = vmul.f32 %v1320, %v1329
    %v1332 = vmul.f32 %v1322, %v1330
    %v1334 = vsel %vm397, %v1331, 0
    %v1337 = vsel %vm397, %v1332, 0
    %1339 = vmatprep.subr.mxu0 0.0
    %1340 = vmatpush1.msra.mxu0 %v379
    %1341 = vmatprep.subr.mxu0 0.0
    %1342 = vmatpush1.msra.mxu0 %v385
    %1343 = vmatprep.subr.mxu0 0.0
    %1344 = vmatpush1.msra.mxu0 0.0
    %1345 = vmatprep.subr.mxu0 0.0
    %1346 = vmatpush1.msra.mxu0 0.0
    %1347 = vmatprep.subr.mxu0 0.0
    %1348 = vmatpush1.msra.mxu0 0.0
    %1349 = vmatprep.subr.mxu0 0.0
    %1350 = vmatpush1.msra.mxu0 0.0
    %1351 = vmatprep.subr.mxu0 0.0
    %1352 = vmatpush1.msra.mxu0 0.0
    %1353 = vmatprep.subr.mxu0 0.0
    %1354 = vmatpush1.msra.mxu0 0.0
    %1355 = vmatprep.subr.mxu0 0.0
    %1356 = vmatpush1.msra.mxu0 0.0
    %1357 = vmatprep.subr.mxu0 0.0
    %1358 = vmatpush1.msra.mxu0 0.0
    %1359 = vmatprep.subr.mxu0 0.0
    %1360 = vmatpush1.msra.mxu0 0.0
    %1361 = vmatprep.subr.mxu0 0.0
    %1362 = vmatpush1.msra.mxu0 0.0
    %1363 = vmatprep.subr.mxu0 0.0
    %1364 = vmatpush1.msra.mxu0 0.0
    %1365 = vmatprep.subr.mxu0 0.0
    %1366 = vmatpush1.msra.mxu0 0.0
    %1367 = vmatprep.subr.mxu0 0.0
    %1368 = vmatpush1.msra.mxu0 0.0
    %1369 = vmatprep.subr.mxu0 0.0
    %1370 = vmatpush1.msra.mxu0 0.0
    %1371 = vmatprep.subr.mxu0 0.0
    %1372 = vmatpush1.msra.mxu0 0.0
    %1373 = vmatprep.subr.mxu0 0.0
    %1374 = vmatpush1.msra.mxu0 0.0
    %1375 = vmatprep.subr.mxu0 0.0
    %1376 = vmatpush1.msra.mxu0 0.0
    %1377 = vmatprep.subr.mxu0 0.0
    %1378 = vmatpush1.msra.mxu0 0.0
    %1379 = vmatprep.subr.mxu0 0.0
    %1380 = vmatpush1.msra.mxu0 0.0
    %1381 = vmatprep.subr.mxu0 0.0
    %1382 = vmatpush1.msra.mxu0 0.0
    %1383 = vmatprep.subr.mxu0 0.0
    %1384 = vmatpush1.msra.mxu0 0.0
    %1385 = vmatprep.subr.mxu0 0.0
    %1386 = vmatpush1.msra.mxu0 0.0
    %1387 = vmatprep.subr.mxu0 0.0
    %1388 = vmatpush1.msra.mxu0 0.0
    %1389 = vmatprep.subr.mxu0 0.0
    %1390 = vmatpush1.msra.mxu0 0.0
    %1391 = vmatprep.subr.mxu0 0.0
    %1392 = vmatpush1.msra.mxu0 0.0
    %1393 = vmatprep.subr.mxu0 0.0
    %1394 = vmatpush1.msra.mxu0 0.0
    %1395 = vmatprep.subr.mxu0 0.0
    %1396 = vmatpush1.msra.mxu0 0.0
    %1397 = vmatprep.subr.mxu0 0.0
    %1398 = vmatpush1.msra.mxu0 0.0
    %1399 = vmatprep.subr.mxu0 0.0
    %1400 = vmatpush1.msra.mxu0 0.0
    %1401 = vmatprep.subr.mxu0 0.0
    %1402 = vmatpush1.msra.mxu0 0.0
    %1403 = vmatprep.mubr.f32.mxu0 0.0
    %1404 = vmatmul.mubr.f32.gmra.mrb[0].mxu0 %v1334
    %v1405 = vpop.f32.mrb[0].mxu0
    %v1406 = vadd.f32 0.0, %v1405
    %v1407 = vpop.f32.mrb[0].mxu0
    %1408 = vmatprep.mubr.f32.mxu0 0.0
    %1409 = vmatmul.mubr.f32.gmra.mrb[0].mxu0 %v1337
    %v1410 = vpop.f32.mrb[0].mxu0
    %v1411 = vadd.f32 0.0, %v1410
    %v1412 = vpop.f32.mrb[0].mxu0
    %1413 = vdwg.mxu0
    %1414 = vrot.lane.b32.xlu0 %v389, 112
    %v1415 = vpop.permute.xlu0 %1414
    %1416 = vrot.lane.b32.xlu0 %v390, 112
    %v1417 = vpop.permute.xlu0 %1416
    %1418 = vrot.lane.b32.xlu0 %v377, 48
    %v1419 = vpop.permute.xlu0 %1418
    %1420 = vrot.lane.b32.xlu0 %v383, 48
    %v1421 = vpop.permute.xlu0 %1420
    %v1422 = vsel %vm397, %v1415, 0
    %v1424 = vsel %vm397, %v1417, 0
    %v1426 = vsel %vm397, %v1419, 0
    %v1428 = vsel %vm397, %v1421, 0
    %1430 = vmatprep.subr.mxu0 0.0
    %1431 = vmatpush1.xpose.msra.mxu0 %v1426
    %1432 = vmatprep.subr.mxu0 0.0
    %1433 = vmatpush1.xpose.msra.mxu0 %v1428
    %1434 = vmatprep.subr.mxu0 0.0
    %1435 = vmatpush1.xpose.msra.mxu0 0.0
    %1436 = vmatprep.subr.mxu0 0.0
    %1437 = vmatpush1.xpose.msra.mxu0 0.0
    %1438 = vmatprep.subr.mxu0 0.0
    %1439 = vmatpush1.xpose.msra.mxu0 0.0
    %1440 = vmatprep.subr.mxu0 0.0
    %1441 = vmatpush1.xpose.msra.mxu0 0.0
    %1442 = vmatprep.subr.mxu0 0.0
    %1443 = vmatpush1.xpose.msra.mxu0 0.0
    %1444 = vmatprep.subr.mxu0 0.0
    %1445 = vmatpush1.xpose.msra.mxu0 0.0
    %1446 = vmatprep.subr.mxu0 0.0
    %1447 = vmatpush1.xpose.msra.mxu0 0.0
    %1448 = vmatprep.subr.mxu0 0.0
    %1449 = vmatpush1.xpose.msra.mxu0 0.0
    %1450 = vmatprep.subr.mxu0 0.0
    %1451 = vmatpush1.xpose.msra.mxu0 0.0
    %1452 = vmatprep.subr.mxu0 0.0
    %1453 = vmatpush1.xpose.msra.mxu0 0.0
    %1454 = vmatprep.subr.mxu0 0.0
    %1455 = vmatpush1.xpose.msra.mxu0 0.0
    %1456 = vmatprep.subr.mxu0 0.0
    %1457 = vmatpush1.xpose.msra.mxu0 0.0
    %1458 = vmatprep.subr.mxu0 0.0
    %1459 = vmatpush1.xpose.msra.mxu0 0.0
    %1460 = vmatprep.subr.mxu0 0.0
    %1461 = vmatpush1.xpose.msra.mxu0 0.0
    %1462 = vmatprep.subr.mxu0 0.0
    %1463 = vmatpush1.xpose.msra.mxu0 0.0
    %1464 = vmatprep.subr.mxu0 0.0
    %1465 = vmatpush1.xpose.msra.mxu0 0.0
    %1466 = vmatprep.subr.mxu0 0.0
    %1467 = vmatpush1.xpose.msra.mxu0 0.0
    %1468 = vmatprep.subr.mxu0 0.0
    %1469 = vmatpush1.xpose.msra.mxu0 0.0
    %1470 = vmatprep.subr.mxu0 0.0
    %1471 = vmatpush1.xpose.msra.mxu0 0.0
    %1472 = vmatprep.subr.mxu0 0.0
    %1473 = vmatpush1.xpose.msra.mxu0 0.0
    %1474 = vmatprep.subr.mxu0 0.0
    %1475 = vmatpush1.xpose.msra.mxu0 0.0
    %1476 = vmatprep.subr.mxu0 0.0
    %1477 = vmatpush1.xpose.msra.mxu0 0.0
    %1478 = vmatprep.subr.mxu0 0.0
    %1479 = vmatpush1.xpose.msra.mxu0 0.0
    %1480 = vmatprep.subr.mxu0 0.0
    %1481 = vmatpush1.xpose.msra.mxu0 0.0
    %1482 = vmatprep.subr.mxu0 0.0
    %1483 = vmatpush1.xpose.msra.mxu0 0.0
    %1484 = vmatprep.subr.mxu0 0.0
    %1485 = vmatpush1.xpose.msra.mxu0 0.0
    %1486 = vmatprep.subr.mxu0 0.0
    %1487 = vmatpush1.xpose.msra.mxu0 0.0
    %1488 = vmatprep.subr.mxu0 0.0
    %1489 = vmatpush1.xpose.msra.mxu0 0.0
    %1490 = vmatprep.subr.mxu0 0.0
    %1491 = vmatpush1.xpose.msra.mxu0 0.0
    %1492 = vmatprep.subr.mxu0 0.0
    %1493 = vmatpush1.xpose.msra.mxu0 0.0
    %1494 = vmatprep.mubr.f32.mxu0 0.0
    %1495 = vmatmul.mubr.f32.gmra.mrb[0].mxu0 %v1422
    %v1496 = vpop.f32.mrb[0].mxu0
    %v1497 = vadd.f32 0.0, %v1496
    %v1498 = vpop.f32.mrb[0].mxu0
    %1499 = vmatprep.mubr.f32.mxu0 0.0
    %1500 = vmatmul.mubr.f32.gmra.mrb[0].mxu0 %v1424
    %v1501 = vpop.f32.mrb[0].mxu0
    %v1502 = vadd.f32 0.0, %v1501
    %v1503 = vpop.f32.mrb[0].mxu0
    %1504 = vdwg.mxu0
    %v1505 = vsel %vm397, %v1497, -inf
    %1506 = vmax.xlane.f32.xlu0 %v1505
    %v1507 = vpop.xlane.xlu0 %1506
    %v1508 = vsel %vm397, %v1502, -inf
    %1509 = vmax.xlane.f32.xlu0 %v1508
    %v1510 = vpop.xlane.xlu0 %1509
    %v1511 = vsub.f32 %v1497, %v1507
    %v1512 = vsub.f32 %v1502, %v1510
    %v1513 = vmul.f32 %v1511, 1.442695
    %v1514 = vpow.pop %v1513
    %v1515 = vmul.f32 %v1512, 1.442695
    %v1516 = vpow.pop %v1515
    %v1517 = vsel %vm397, %v1514, 0.0
    %1518 = vadd.xlane.f32.xlu0 %v1517
    %v1519 = vpop.xlane.xlu0 %1518
    %v1520 = vsel %vm397, %v1516, 0.0
    %1521 = vadd.xlane.f32.xlu0 %v1520
    %v1522 = vpop.xlane.xlu0 %1521
    %v1523 = vrcp.pop %v1519
    %v1524 = vrcp.pop %v1522
    %v1525 = vmul.f32 %v1514, %v1523
    %v1526 = vmul.f32 %v1516, %v1524
    %1529 = vrot.lane.b32.xlu0 %v379, 112
    %v1530 = vpop.permute.xlu0 %1529
    %1531 = vrot.lane.b32.xlu0 %v385, 112
    %v1532 = vpop.permute.xlu0 %1531
    %v1536 = vsel %vm397, %v1525, 0
    %v1539 = vsel %vm397, %v1526, 0
    %1541 = vmatprep.subr.mxu0 0.0
    %1542 = vmatpush1.msra.mxu0 %v1530
    %1543 = vmatprep.subr.mxu0 0.0
    %1544 = vmatpush1.msra.mxu0 %v1532
    %1545 = vmatprep.subr.mxu0 0.0
    %1546 = vmatpush1.msra.mxu0 0.0
    %1547 = vmatprep.subr.mxu0 0.0
    %1548 = vmatpush1.msra.mxu0 0.0
    %1549 = vmatprep.subr.mxu0 0.0
    %1550 = vmatpush1.msra.mxu0 0.0
    %1551 = vmatprep.subr.mxu0 0.0
    %1552 = vmatpush1.msra.mxu0 0.0
    %1553 = vmatprep.subr.mxu0 0.0
    %1554 = vmatpush1.msra.mxu0 0.0
    %1555 = vmatprep.subr.mxu0 0.0
    %1556 = vmatpush1.msra.mxu0 0.0
    %1557 = vmatprep.subr.mxu0 0.0
    %1558 = vmatpush1.msra.mxu0 0.0
    %1559 = vmatprep.subr.mxu0 0.0
    %1560 = vmatpush1.msra.mxu0 0.0
    %1561 = vmatprep.subr.mxu0 0.0
    %1562 = vmatpush1.msra.mxu0 0.0
    %1563 = vmatprep.subr.mxu0 0.0
    %1564 = vmatpush1.msra.mxu0 0.0
    %1565 = vmatprep.subr.mxu0 0.0
    %1566 = vmatpush1.msra.mxu0 0.0
    %1567 = vmatprep.subr.mxu0 0.0
    %1568 = vmatpush1.msra.mxu0 0.0
    %1569 = vmatprep.subr.mxu0 0.0
    %1570 = vmatpush1.msra.mxu0 0.0
    %1571 = vmatprep.subr.mxu0 0.0
    %1572 = vmatpush1.msra.mxu0 0.0
    %1573 = vmatprep.subr.mxu0 0.0
    %1574 = vmatpush1.msra.mxu0 0.0
    %1575 = vmatprep.subr.mxu0 0.0
    %1576 = vmatpush1.msra.mxu0 0.0
    %1577 = vmatprep.subr.mxu0 0.0
    %1578 = vmatpush1.msra.mxu0 0.0
    %1579 = vmatprep.subr.mxu0 0.0
    %1580 = vmatpush1.msra.mxu0 0.0
    %1581 = vmatprep.subr.mxu0 0.0
    %1582 = vmatpush1.msra.mxu0 0.0
    %1583 = vmatprep.subr.mxu0 0.0
    %1584 = vmatpush1.msra.mxu0 0.0
    %1585 = vmatprep.subr.mxu0 0.0
    %1586 = vmatpush1.msra.mxu0 0.0
    %1587 = vmatprep.subr.mxu0 0.0
    %1588 = vmatpush1.msra.mxu0 0.0
    %1589 = vmatprep.subr.mxu0 0.0
    %1590 = vmatpush1.msra.mxu0 0.0
    %1591 = vmatprep.subr.mxu0 0.0
    %1592 = vmatpush1.msra.mxu0 0.0
    %1593 = vmatprep.subr.mxu0 0.0
    %1594 = vmatpush1.msra.mxu0 0.0
    %1595 = vmatprep.subr.mxu0 0.0
    %1596 = vmatpush1.msra.mxu0 0.0
    %1597 = vmatprep.subr.mxu0 0.0
    %1598 = vmatpush1.msra.mxu0 0.0
    %1599 = vmatprep.subr.mxu0 0.0
    %1600 = vmatpush1.msra.mxu0 0.0
    %1601 = vmatprep.subr.mxu0 0.0
    %1602 = vmatpush1.msra.mxu0 0.0
    %1603 = vmatprep.subr.mxu0 0.0
    %1604 = vmatpush1.msra.mxu0 0.0
    %1605 = vmatprep.mubr.f32.mxu0 0.0
    %1606 = vmatmul.mubr.f32.gmra.mrb[0].mxu0 %v1536
    %v1607 = vpop.f32.mrb[0].mxu0
    %v1608 = vadd.f32 0.0, %v1607
    %v1609 = vpop.f32.mrb[0].mxu0
    %1610 = vmatprep.mubr.f32.mxu0 0.0
    %1611 = vmatmul.mubr.f32.gmra.mrb[0].mxu0 %v1539
    %v1612 = vpop.f32.mrb[0].mxu0
    %v1613 = vadd.f32 0.0, %v1612
    %v1614 = vpop.f32.mrb[0].mxu0
    %1615 = vdwg.mxu0
    %1616 = vrot.lane.b32.xlu0 %v389, 96
    %v1617 = vpop.permute.xlu0 %1616
    %1618 = vrot.lane.b32.xlu0 %v390, 96
    %v1619 = vpop.permute.xlu0 %1618
    %1620 = vrot.lane.b32.xlu0 %v377, 32
    %v1621 = vpop.permute.xlu0 %1620
    %1622 = vrot.lane.b32.xlu0 %v383, 32
    %v1623 = vpop.permute.xlu0 %1622
    %v1624 = vsel %vm397, %v1617, 0
    %v1626 = vsel %vm397, %v1619, 0
    %v1628 = vsel %vm397, %v1621, 0
    %v1630 = vsel %vm397, %v1623, 0
    %1632 = vmatprep.subr.mxu0 0.0
    %1633 = vmatpush1.xpose.msra.mxu0 %v1628
    %1634 = vmatprep.subr.mxu0 0.0
    %1635 = vmatpush1.xpose.msra.mxu0 %v1630
    %1636 = vmatprep.subr.mxu0 0.0
    %1637 = vmatpush1.xpose.msra.mxu0 0.0
    %1638 = vmatprep.subr.mxu0 0.0
    %1639 = vmatpush1.xpose.msra.mxu0 0.0
    %1640 = vmatprep.subr.mxu0 0.0
    %1641 = vmatpush1.xpose.msra.mxu0 0.0
    %1642 = vmatprep.subr.mxu0 0.0
    %1643 = vmatpush1.xpose.msra.mxu0 0.0
    %1644 = vmatprep.subr.mxu0 0.0
    %1645 = vmatpush1.xpose.msra.mxu0 0.0
    %1646 = vmatprep.subr.mxu0 0.0
    %1647 = vmatpush1.xpose.msra.mxu0 0.0
    %1648 = vmatprep.subr.mxu0 0.0
    %1649 = vmatpush1.xpose.msra.mxu0 0.0
    %1650 = vmatprep.subr.mxu0 0.0
    %1651 = vmatpush1.xpose.msra.mxu0 0.0
    %1652 = vmatprep.subr.mxu0 0.0
    %1653 = vmatpush1.xpose.msra.mxu0 0.0
    %1654 = vmatprep.subr.mxu0 0.0
    %1655 = vmatpush1.xpose.msra.mxu0 0.0
    %1656 = vmatprep.subr.mxu0 0.0
    %1657 = vmatpush1.xpose.msra.mxu0 0.0
    %1658 = vmatprep.subr.mxu0 0.0
    %1659 = vmatpush1.xpose.msra.mxu0 0.0
    %1660 = vmatprep.subr.mxu0 0.0
    %1661 = vmatpush1.xpose.msra.mxu0 0.0
    %1662 = vmatprep.subr.mxu0 0.0
    %1663 = vmatpush1.xpose.msra.mxu0 0.0
    %1664 = vmatprep.subr.mxu0 0.0
    %1665 = vmatpush1.xpose.msra.mxu0 0.0
    %1666 = vmatprep.subr.mxu0 0.0
    %1667 = vmatpush1.xpose.msra.mxu0 0.0
    %1668 = vmatprep.subr.mxu0 0.0
    %1669 = vmatpush1.xpose.msra.mxu0 0.0
    %1670 = vmatprep.subr.mxu0 0.0
    %1671 = vmatpush1.xpose.msra.mxu0 0.0
    %1672 = vmatprep.subr.mxu0 0.0
    %1673 = vmatpush1.xpose.msra.mxu0 0.0
    %1674 = vmatprep.subr.mxu0 0.0
    %1675 = vmatpush1.xpose.msra.mxu0 0.0
    %1676 = vmatprep.subr.mxu0 0.0
    %1677 = vmatpush1.xpose.msra.mxu0 0.0
    %1678 = vmatprep.subr.mxu0 0.0
    %1679 = vmatpush1.xpose.msra.mxu0 0.0
    %1680 = vmatprep.subr.mxu0 0.0
    %1681 = vmatpush1.xpose.msra.mxu0 0.0
    %1682 = vmatprep.subr.mxu0 0.0
    %1683 = vmatpush1.xpose.msra.mxu0 0.0
    %1684 = vmatprep.subr.mxu0 0.0
    %1685 = vmatpush1.xpose.msra.mxu0 0.0
    %1686 = vmatprep.subr.mxu0 0.0
    %1687 = vmatpush1.xpose.msra.mxu0 0.0
    %1688 = vmatprep.subr.mxu0 0.0
    %1689 = vmatpush1.xpose.msra.mxu0 0.0
    %1690 = vmatprep.subr.mxu0 0.0
    %1691 = vmatpush1.xpose.msra.mxu0 0.0
    %1692 = vmatprep.subr.mxu0 0.0
    %1693 = vmatpush1.xpose.msra.mxu0 0.0
    %1694 = vmatprep.subr.mxu0 0.0
    %1695 = vmatpush1.xpose.msra.mxu0 0.0
    %1696 = vmatprep.mubr.f32.mxu0 0.0
    %1697 = vmatmul.mubr.f32.gmra.mrb[0].mxu0 %v1624
    %v1698 = vpop.f32.mrb[0].mxu0
    %v1699 = vadd.f32 0.0, %v1698
    %v1700 = vpop.f32.mrb[0].mxu0
    %1701 = vmatprep.mubr.f32.mxu0 0.0
    %1702 = vmatmul.mubr.f32.gmra.mrb[0].mxu0 %v1626
    %v1703 = vpop.f32.mrb[0].mxu0
    %v1704 = vadd.f32 0.0, %v1703
    %v1705 = vpop.f32.mrb[0].mxu0
    %1706 = vdwg.mxu0
    %v1707 = vsel %vm397, %v1699, -inf
    %1708 = vmax.xlane.f32.xlu0 %v1707
    %v1709 = vpop.xlane.xlu0 %1708
    %v1710 = vsel %vm397, %v1704, -inf
    %1711 = vmax.xlane.f32.xlu0 %v1710
    %v1712 = vpop.xlane.xlu0 %1711
    %v1713 = vsub.f32 %v1699, %v1709
    %v1714 = vsub.f32 %v1704, %v1712
    %v1715 = vmul.f32 %v1713, 1.442695
    %v1716 = vpow.pop %v1715
    %v1717 = vmul.f32 %v1714, 1.442695
    %v1718 = vpow.pop %v1717
    %v1719 = vsel %vm397, %v1716, 0.0
    %1720 = vadd.xlane.f32.xlu0 %v1719
    %v1721 = vpop.xlane.xlu0 %1720
    %v1722 = vsel %vm397, %v1718, 0.0
    %1723 = vadd.xlane.f32.xlu0 %v1722
    %v1724 = vpop.xlane.xlu0 %1723
    %v1725 = vrcp.pop %v1721
    %v1726 = vrcp.pop %v1724
    %v1727 = vmul.f32 %v1716, %v1725
    %v1728 = vmul.f32 %v1718, %v1726
    %1729 = vrot.lane.b32.xlu0 %v379, 96
    %v1730 = vpop.permute.xlu0 %1729
    %1731 = vrot.lane.b32.xlu0 %v385, 96
    %v1732 = vpop.permute.xlu0 %1731
    %v1736 = vsel %vm397, %v1727, 0
    %v1739 = vsel %vm397, %v1728, 0
    %1741 = vmatprep.subr.mxu0 0.0
    %1742 = vmatpush1.msra.mxu0 %v1730
    %1743 = vmatprep.subr.mxu0 0.0
    %1744 = vmatpush1.msra.mxu0 %v1732
    %1745 = vmatprep.subr.mxu0 0.0
    %1746 = vmatpush1.msra.mxu0 0.0
    %1747 = vmatprep.subr.mxu0 0.0
    %1748 = vmatpush1.msra.mxu0 0.0
    %1749 = vmatprep.subr.mxu0 0.0
    %1750 = vmatpush1.msra.mxu0 0.0
    %1751 = vmatprep.subr.mxu0 0.0
    %1752 = vmatpush1.msra.mxu0 0.0
    %1753 = vmatprep.subr.mxu0 0.0
    %1754 = vmatpush1.msra.mxu0 0.0
    %1755 = vmatprep.subr.mxu0 0.0
    %1756 = vmatpush1.msra.mxu0 0.0
    %1757 = vmatprep.subr.mxu0 0.0
    %1758 = vmatpush1.msra.mxu0 0.0
    %1759 = vmatprep.subr.mxu0 0.0
    %1760 = vmatpush1.msra.mxu0 0.0
    %1761 = vmatprep.subr.mxu0 0.0
    %1762 = vmatpush1.msra.mxu0 0.0
    %1763 = vmatprep.subr.mxu0 0.0
    %1764 = vmatpush1.msra.mxu0 0.0
    %1765 = vmatprep.subr.mxu0 0.0
    %1766 = vmatpush1.msra.mxu0 0.0
    %1767 = vmatprep.subr.mxu0 0.0
    %1768 = vmatpush1.msra.mxu0 0.0
    %1769 = vmatprep.subr.mxu0 0.0
    %1770 = vmatpush1.msra.mxu0 0.0
    %1771 = vmatprep.subr.mxu0 0.0
    %1772 = vmatpush1.msra.mxu0 0.0
    %1773 = vmatprep.subr.mxu0 0.0
    %1774 = vmatpush1.msra.mxu0 0.0
    %1775 = vmatprep.subr.mxu0 0.0
    %1776 = vmatpush1.msra.mxu0 0.0
    %1777 = vmatprep.subr.mxu0 0.0
    %1778 = vmatpush1.msra.mxu0 0.0
    %1779 = vmatprep.subr.mxu0 0.0
    %1780 = vmatpush1.msra.mxu0 0.0
    %1781 = vmatprep.subr.mxu0 0.0
    %1782 = vmatpush1.msra.mxu0 0.0
    %1783 = vmatprep.subr.mxu0 0.0
    %1784 = vmatpush1.msra.mxu0 0.0
    %1785 = vmatprep.subr.mxu0 0.0
    %1786 = vmatpush1.msra.mxu0 0.0
    %1787 = vmatprep.subr.mxu0 0.0
    %1788 = vmatpush1.msra.mxu0 0.0
    %1789 = vmatprep.subr.mxu0 0.0
    %1790 = vmatpush1.msra.mxu0 0.0
    %1791 = vmatprep.subr.mxu0 0.0
    %1792 = vmatpush1.msra.mxu0 0.0
    %1793 = vmatprep.subr.mxu0 0.0
    %1794 = vmatpush1.msra.mxu0 0.0
    %1795 = vmatprep.subr.mxu0 0.0
    %1796 = vmatpush1.msra.mxu0 0.0
    %1797 = vmatprep.subr.mxu0 0.0
    %1798 = vmatpush1.msra.mxu0 0.0
    %1799 = vmatprep.subr.mxu0 0.0
    %1800 = vmatpush1.msra.mxu0 0.0
    %1801 = vmatprep.subr.mxu0 0.0
    %1802 = vmatpush1.msra.mxu0 0.0
    %1803 = vmatprep.subr.mxu0 0.0
    %1804 = vmatpush1.msra.mxu0 0.0
    %1805 = vmatprep.mubr.f32.mxu0 0.0
    %1806 = vmatmul.mubr.f32.gmra.mrb[0].mxu0 %v1736
    %v1807 = vpop.f32.mrb[0].mxu0
    %v1808 = vadd.f32 0.0, %v1807
    %v1809 = vpop.f32.mrb[0].mxu0
    %1810 = vmatprep.mubr.f32.mxu0 0.0
    %1811 = vmatmul.mubr.f32.gmra.mrb[0].mxu0 %v1739
    %v1812 = vpop.f32.mrb[0].mxu0
    %v1813 = vadd.f32 0.0, %v1812
    %v1814 = vpop.f32.mrb[0].mxu0
    %1815 = vdwg.mxu0
    %1816 = vrot.lane.b32.xlu0 %v389, 80
    %v1817 = vpop.permute.xlu0 %1816
    %1818 = vrot.lane.b32.xlu0 %v390, 80
    %v1819 = vpop.permute.xlu0 %1818
    %1820 = vrot.lane.b32.xlu0 %v377, 16
    %v1821 = vpop.permute.xlu0 %1820
    %1822 = vrot.lane.b32.xlu0 %v383, 16
    %v1823 = vpop.permute.xlu0 %1822
    %v1824 = vsel %vm397, %v1817, 0
    %v1826 = vsel %vm397, %v1819, 0
    %v1828 = vsel %vm397, %v1821, 0
    %v1830 = vsel %vm397, %v1823, 0
    %1832 = vmatprep.subr.mxu0 0.0
    %1833 = vmatpush1.xpose.msra.mxu0 %v1828
    %1834 = vmatprep.subr.mxu0 0.0
    %1835 = vmatpush1.xpose.msra.mxu0 %v1830
    %1836 = vmatprep.subr.mxu0 0.0
    %1837 = vmatpush1.xpose.msra.mxu0 0.0
    %1838 = vmatprep.subr.mxu0 0.0
    %1839 = vmatpush1.xpose.msra.mxu0 0.0
    %1840 = vmatprep.subr.mxu0 0.0
    %1841 = vmatpush1.xpose.msra.mxu0 0.0
    %1842 = vmatprep.subr.mxu0 0.0
    %1843 = vmatpush1.xpose.msra.mxu0 0.0
    %1844 = vmatprep.subr.mxu0 0.0
    %1845 = vmatpush1.xpose.msra.mxu0 0.0
    %1846 = vmatprep.subr.mxu0 0.0
    %1847 = vmatpush1.xpose.msra.mxu0 0.0
    %1848 = vmatprep.subr.mxu0 0.0
    %1849 = vmatpush1.xpose.msra.mxu0 0.0
    %1850 = vmatprep.subr.mxu0 0.0
    %1851 = vmatpush1.xpose.msra.mxu0 0.0
    %1852 = vmatprep.subr.mxu0 0.0
    %1853 = vmatpush1.xpose.msra.mxu0 0.0
    %1854 = vmatprep.subr.mxu0 0.0
    %1855 = vmatpush1.xpose.msra.mxu0 0.0
    %1856 = vmatprep.subr.mxu0 0.0
    %1857 = vmatpush1.xpose.msra.mxu0 0.0
    %1858 = vmatprep.subr.mxu0 0.0
    %1859 = vmatpush1.xpose.msra.mxu0 0.0
    %1860 = vmatprep.subr.mxu0 0.0
    %1861 = vmatpush1.xpose.msra.mxu0 0.0
    %1862 = vmatprep.subr.mxu0 0.0
    %1863 = vmatpush1.xpose.msra.mxu0 0.0
    %1864 = vmatprep.subr.mxu0 0.0
    %1865 = vmatpush1.xpose.msra.mxu0 0.0
    %1866 = vmatprep.subr.mxu0 0.0
    %1867 = vmatpush1.xpose.msra.mxu0 0.0
    %1868 = vmatprep.subr.mxu0 0.0
    %1869 = vmatpush1.xpose.msra.mxu0 0.0
    %1870 = vmatprep.subr.mxu0 0.0
    %1871 = vmatpush1.xpose.msra.mxu0 0.0
    %1872 = vmatprep.subr.mxu0 0.0
    %1873 = vmatpush1.xpose.msra.mxu0 0.0
    %1874 = vmatprep.subr.mxu0 0.0
    %1875 = vmatpush1.xpose.msra.mxu0 0.0
    %1876 = vmatprep.subr.mxu0 0.0
    %1877 = vmatpush1.xpose.msra.mxu0 0.0
    %1878 = vmatprep.subr.mxu0 0.0
    %1879 = vmatpush1.xpose.msra.mxu0 0.0
    %1880 = vmatprep.subr.mxu0 0.0
    %1881 = vmatpush1.xpose.msra.mxu0 0.0
    %1882 = vmatprep.subr.mxu0 0.0
    %1883 = vmatpush1.xpose.msra.mxu0 0.0
    %1884 = vmatprep.subr.mxu0 0.0
    %1885 = vmatpush1.xpose.msra.mxu0 0.0
    %1886 = vmatprep.subr.mxu0 0.0
    %1887 = vmatpush1.xpose.msra.mxu0 0.0
    %1888 = vmatprep.subr.mxu0 0.0
    %1889 = vmatpush1.xpose.msra.mxu0 0.0
    %1890 = vmatprep.subr.mxu0 0.0
    %1891 = vmatpush1.xpose.msra.mxu0 0.0
    %1892 = vmatprep.subr.mxu0 0.0
    %1893 = vmatpush1.xpose.msra.mxu0 0.0
    %1894 = vmatprep.subr.mxu0 0.0
    %1895 = vmatpush1.xpose.msra.mxu0 0.0
    %1896 = vmatprep.mubr.f32.mxu0 0.0
    %1897 = vmatmul.mubr.f32.gmra.mrb[0].mxu0 %v1824
    %v1898 = vpop.f32.mrb[0].mxu0
    %v1899 = vadd.f32 0.0, %v1898
    %v1900 = vpop.f32.mrb[0].mxu0
    %1901 = vmatprep.mubr.f32.mxu0 0.0
    %1902 = vmatmul.mubr.f32.gmra.mrb[0].mxu0 %v1826
    %v1903 = vpop.f32.mrb[0].mxu0
    %v1904 = vadd.f32 0.0, %v1903
    %v1905 = vpop.f32.mrb[0].mxu0
    %1906 = vdwg.mxu0
    %v1907 = vsel %vm397, %v1899, -inf
    %1908 = vmax.xlane.f32.xlu0 %v1907
    %v1909 = vpop.xlane.xlu0 %1908
    %v1910 = vsel %vm397, %v1904, -inf
    %1911 = vmax.xlane.f32.xlu0 %v1910
    %v1912 = vpop.xlane.xlu0 %1911
    %v1913 = vsub.f32 %v1899, %v1909
    %v1914 = vsub.f32 %v1904, %v1912
    %v1915 = vmul.f32 %v1913, 1.442695
    %v1916 = vpow.pop %v1915
    %v1917 = vmul.f32 %v1914, 1.442695
    %v1918 = vpow.pop %v1917
    %v1919 = vsel %vm397, %v1916, 0.0
    %1920 = vadd.xlane.f32.xlu0 %v1919
    %v1921 = vpop.xlane.xlu0 %1920
    %v1922 = vsel %vm397, %v1918, 0.0
    %1923 = vadd.xlane.f32.xlu0 %v1922
    %v1924 = vpop.xlane.xlu0 %1923
    %v1925 = vrcp.pop %v1921
    %v1926 = vrcp.pop %v1924
    %v1927 = vmul.f32 %v1916, %v1925
    %v1928 = vmul.f32 %v1918, %v1926
    %1929 = vrot.lane.b32.xlu0 %v379, 80
    %v1930 = vpop.permute.xlu0 %1929
    %1931 = vrot.lane.b32.xlu0 %v385, 80
    %v1932 = vpop.permute.xlu0 %1931
    %v1936 = vsel %vm397, %v1927, 0
    %v1939 = vsel %vm397, %v1928, 0
    %1941 = vmatprep.subr.mxu0 0.0
    %1942 = vmatpush1.msra.mxu0 %v1930
    %1943 = vmatprep.subr.mxu0 0.0
    %1944 = vmatpush1.msra.mxu0 %v1932
    %1945 = vmatprep.subr.mxu0 0.0
    %1946 = vmatpush1.msra.mxu0 0.0
    %1947 = vmatprep.subr.mxu0 0.0
    %1948 = vmatpush1.msra.mxu0 0.0
    %1949 = vmatprep.subr.mxu0 0.0
    %1950 = vmatpush1.msra.mxu0 0.0
    %1951 = vmatprep.subr.mxu0 0.0
    %1952 = vmatpush1.msra.mxu0 0.0
    %1953 = vmatprep.subr.mxu0 0.0
    %1954 = vmatpush1.msra.mxu0 0.0
    %1955 = vmatprep.subr.mxu0 0.0
    %1956 = vmatpush1.msra.mxu0 0.0
    %1957 = vmatprep.subr.mxu0 0.0
    %1958 = vmatpush1.msra.mxu0 0.0
    %1959 = vmatprep.subr.mxu0 0.0
    %1960 = vmatpush1.msra.mxu0 0.0
    %1961 = vmatprep.subr.mxu0 0.0
    %1962 = vmatpush1.msra.mxu0 0.0
    %1963 = vmatprep.subr.mxu0 0.0
    %1964 = vmatpush1.msra.mxu0 0.0
    %1965 = vmatprep.subr.mxu0 0.0
    %1966 = vmatpush1.msra.mxu0 0.0
    %1967 = vmatprep.subr.mxu0 0.0
    %1968 = vmatpush1.msra.mxu0 0.0
    %1969 = vmatprep.subr.mxu0 0.0
    %1970 = vmatpush1.msra.mxu0 0.0
    %1971 = vmatprep.subr.mxu0 0.0
    %1972 = vmatpush1.msra.mxu0 0.0
    %1973 = vmatprep.subr.mxu0 0.0
    %1974 = vmatpush1.msra.mxu0 0.0
    %1975 = vmatprep.subr.mxu0 0.0
    %1976 = vmatpush1.msra.mxu0 0.0
    %1977 = vmatprep.subr.mxu0 0.0
    %1978 = vmatpush1.msra.mxu0 0.0
    %1979 = vmatprep.subr.mxu0 0.0
    %1980 = vmatpush1.msra.mxu0 0.0
    %1981 = vmatprep.subr.mxu0 0.0
    %1982 = vmatpush1.msra.mxu0 0.0
    %1983 = vmatprep.subr.mxu0 0.0
    %1984 = vmatpush1.msra.mxu0 0.0
    %1985 = vmatprep.subr.mxu0 0.0
    %1986 = vmatpush1.msra.mxu0 0.0
    %1987 = vmatprep.subr.mxu0 0.0
    %1988 = vmatpush1.msra.mxu0 0.0
    %1989 = vmatprep.subr.mxu0 0.0
    %1990 = vmatpush1.msra.mxu0 0.0
    %1991 = vmatprep.subr.mxu0 0.0
    %1992 = vmatpush1.msra.mxu0 0.0
    %1993 = vmatprep.subr.mxu0 0.0
    %1994 = vmatpush1.msra.mxu0 0.0
    %1995 = vmatprep.subr.mxu0 0.0
    %1996 = vmatpush1.msra.mxu0 0.0
    %1997 = vmatprep.subr.mxu0 0.0
    %1998 = vmatpush1.msra.mxu0 0.0
    %1999 = vmatprep.subr.mxu0 0.0
    %2000 = vmatpush1.msra.mxu0 0.0
    %2001 = vmatprep.subr.mxu0 0.0
    %2002 = vmatpush1.msra.mxu0 0.0
    %2003 = vmatprep.subr.mxu0 0.0
    %2004 = vmatpush1.msra.mxu0 0.0
    %2005 = vmatprep.mubr.f32.mxu0 0.0
    %2006 = vmatmul.mubr.f32.gmra.mrb[0].mxu0 %v1936
    %v2007 = vpop.f32.mrb[0].mxu0
    %v2008 = vadd.f32 0.0, %v2007
    %v2009 = vpop.f32.mrb[0].mxu0
    %2010 = vmatprep.mubr.f32.mxu0 0.0
    %2011 = vmatmul.mubr.f32.gmra.mrb[0].mxu0 %v1939
    %v2012 = vpop.f32.mrb[0].mxu0
    %v2013 = vadd.f32 0.0, %v2012
    %v2014 = vpop.f32.mrb[0].mxu0
    %2015 = vdwg.mxu0
    %2018 = vrot.lane.b32.xlu0 %v1608, 16
    %v2019 = vpop.permute.xlu0 %2018
    %2020 = vrot.lane.b32.xlu0 %v1613, 16
    %v2021 = vpop.permute.xlu0 %2020
    %2026 = vrot.lane.b32.xlu0 %v1808, 32
    %v2027 = vpop.permute.xlu0 %2026
    %2028 = vrot.lane.b32.xlu0 %v1813, 32
    %v2029 = vpop.permute.xlu0 %2028
    %2034 = vrot.lane.b32.xlu0 %v2008, 48
    %v2035 = vpop.permute.xlu0 %2034
    %2036 = vrot.lane.b32.xlu0 %v2013, 48
    %v2037 = vpop.permute.xlu0 %2036
    %v2040 = vsel %vm397, %v1406, %v2019
    %v2041 = vsel %vm397, %v1411, %v2021
    %v2042 = vsel %vm1214, %v2040, %v2027
    %v2043 = vsel %vm1214, %v2041, %v2029
    %v2044 = vsel %vm1217, %v2042, %v2035
    %v2045 = vsel %vm1217, %v2043, %v2037
    %v2046 = vld [vmem:[%s8] sm:$0xff]
    %v2047 = vld [vmem:[%s8 + $0x8] sm:$0xff]
    %v2048 = vld [vmem:[%s8 + $0x10] sm:$0xff]
    %v2049 = vld [vmem:[%s8 + $0x18] sm:$0xff]
    %v2050 = vld [vmem:[%s8 + $0x20] sm:$0xff]
    %v2051 = vld [vmem:[%s8 + $0x28] sm:$0xff]
    %v2052 = vld [vmem:[%s8 + $0x30] sm:$0xff]
    %v2053 = vld [vmem:[%s8 + $0x38] sm:$0xff]
    %v2054 = vld [vmem:[%s9] sm:$0x1]
    %v2056 = vlaneseq
    %v2057 = vshrl.u32 %v2056, 7
    %v2058 = vsub.s32 0, %v2057
    %v2059 = vrot.slane %v2054, %v2058
    %v2062 = vsel %vm184, %v1218, 0
    %v2065 = vsel %vm184, %v1219, 0
    %v2068 = vsel %vm184, %v2044, 0
    %v2071 = vsel %vm184, %v2045, 0
    %2073 = vmatprep.subr.mxu0 0.0
    %2074 = vmatpush1.msra.mxu0 %v2046
    %2075 = vmatprep.subr.mxu0 0.0
    %2076 = vmatpush1.msra.mxu0 %v2047
    %2077 = vmatprep.subr.mxu0 0.0
    %2078 = vmatpush1.msra.mxu0 %v2048
    %2079 = vmatprep.subr.mxu0 0.0
    %2080 = vmatpush1.msra.mxu0 %v2049
    %2081 = vmatprep.subr.mxu0 0.0
    %2082 = vmatpush1.msra.mxu0 %v2050
    %2083 = vmatprep.subr.mxu0 0.0
    %2084 = vmatpush1.msra.mxu0 %v2051
    %2085 = vmatprep.subr.mxu0 0.0
    %2086 = vmatpush1.msra.mxu0 %v2052
    %2087 = vmatprep.subr.mxu0 0.0
    %2088 = vmatpush1.msra.mxu0 %v2053
    %2089 = vmatprep.subr.mxu0 0.0
    %2090 = vmatpush1.msra.mxu0 0.0
    %2091 = vmatprep.subr.mxu0 0.0
    %2092 = vmatpush1.msra.mxu0 0.0
    %2093 = vmatprep.subr.mxu0 0.0
    %2094 = vmatpush1.msra.mxu0 0.0
    %2095 = vmatprep.subr.mxu0 0.0
    %2096 = vmatpush1.msra.mxu0 0.0
    %2097 = vmatprep.subr.mxu0 0.0
    %2098 = vmatpush1.msra.mxu0 0.0
    %2099 = vmatprep.subr.mxu0 0.0
    %2100 = vmatpush1.msra.mxu0 0.0
    %2101 = vmatprep.subr.mxu0 0.0
    %2102 = vmatpush1.msra.mxu0 0.0
    %2103 = vmatprep.subr.mxu0 0.0
    %2104 = vmatpush1.msra.mxu0 0.0
    %2105 = vmatprep.subr.mxu0 0.0
    %2106 = vmatpush1.msra.mxu0 0.0
    %2107 = vmatprep.subr.mxu0 0.0
    %2108 = vmatpush1.msra.mxu0 0.0
    %2109 = vmatprep.subr.mxu0 0.0
    %2110 = vmatpush1.msra.mxu0 0.0
    %2111 = vmatprep.subr.mxu0 0.0
    %2112 = vmatpush1.msra.mxu0 0.0
    %2113 = vmatprep.subr.mxu0 0.0
    %2114 = vmatpush1.msra.mxu0 0.0
    %2115 = vmatprep.subr.mxu0 0.0
    %2116 = vmatpush1.msra.mxu0 0.0
    %2117 = vmatprep.subr.mxu0 0.0
    %2118 = vmatpush1.msra.mxu0 0.0
    %2119 = vmatprep.subr.mxu0 0.0
    %2120 = vmatpush1.msra.mxu0 0.0
    %2121 = vmatprep.subr.mxu0 0.0
    %2122 = vmatpush1.msra.mxu0 0.0
    %2123 = vmatprep.subr.mxu0 0.0
    %2124 = vmatpush1.msra.mxu0 0.0
    %2125 = vmatprep.subr.mxu0 0.0
    %2126 = vmatpush1.msra.mxu0 0.0
    %2127 = vmatprep.subr.mxu0 0.0
    %2128 = vmatpush1.msra.mxu0 0.0
    %2129 = vmatprep.subr.mxu0 0.0
    %2130 = vmatpush1.msra.mxu0 0.0
    %2131 = vmatprep.subr.mxu0 0.0
    %2132 = vmatpush1.msra.mxu0 0.0
    %2133 = vmatprep.subr.mxu0 0.0
    %2134 = vmatpush1.msra.mxu0 0.0
    %2135 = vmatprep.subr.mxu0 0.0
    %2136 = vmatpush1.msra.mxu0 0.0
    %2137 = vmatprep.mubr.f32.mxu0 0.0
    %2138 = vmatmul.mubr.f32.gmra.mrb[0].mxu0 %v2062
    %v2139 = vpop.f32.mrb[0].mxu0
    %v2140 = vadd.f32 %v2059, %v2139
    %v2141 = vpop.f32.mrb[0].mxu0
    %2142 = vmatprep.mubr.f32.mxu0 0.0
    %2143 = vmatmul.mubr.f32.gmra.mrb[0].mxu0 %v2065
    %v2144 = vpop.f32.mrb[0].mxu0
    %v2145 = vadd.f32 %v2059, %v2144
    %v2146 = vpop.f32.mrb[0].mxu0
    %2147 = vmatprep.mubr.f32.mxu0 0.0
    %2148 = vmatmul.mubr.f32.gmra.mrb[0].mxu0 %v2068
    %v2149 = vpop.f32.mrb[0].mxu0
    %v2150 = vadd.f32 %v2059, %v2149
    %v2151 = vpop.f32.mrb[0].mxu0
    %2152 = vmatprep.mubr.f32.mxu0 0.0
    %2153 = vmatmul.mubr.f32.gmra.mrb[0].mxu0 %v2071
    %v2154 = vpop.f32.mrb[0].mxu0
    %v2155 = vadd.f32 %v2059, %v2154
    %v2156 = vpop.f32.mrb[0].mxu0
    %2157 = vdwg.mxu0
    %v2158 = vadd.f32 %v178, %v2140
    %v2159 = vadd.f32 %v179, %v2145
    %v2160 = vadd.f32 %v180, %v2150
    %v2161 = vadd.f32 %v181, %v2155
    %v2162 = vld [vmem:[%s10] sm:$0x1]
    %v2163 = vld [vmem:[%s11] sm:$0x1]
    %v2164 = vsel %vm184, %v2158, 0.0
    %2165 = vadd.xlane.f32.xlu0 %v2164
    %v2166 = vpop.xlane.xlu0 %2165
    %v2167 = vsel %vm184, %v2159, 0.0
    %2168 = vadd.xlane.f32.xlu0 %v2167
    %v2169 = vpop.xlane.xlu0 %2168
    %v2170 = vsel %vm184, %v2160, 0.0
    %2171 = vadd.xlane.f32.xlu0 %v2170
    %v2172 = vpop.xlane.xlu0 %2171
    %v2173 = vsel %vm184, %v2161, 0.0
    %2174 = vadd.xlane.f32.xlu0 %v2173
    %v2175 = vpop.xlane.xlu0 %2174
    %v2176 = vmul.f32 %v2166, %v197
    %v2177 = vmul.f32 %v2169, %v197
    %v2178 = vmul.f32 %v2172, %v197
    %v2179 = vmul.f32 %v2175, %v197
    %v2180 = vsub.f32 %v2158, %v2176
    %v2181 = vsub.f32 %v2159, %v2177
    %v2182 = vsub.f32 %v2160, %v2178
    %v2183 = vsub.f32 %v2161, %v2179
    %v2184 = vmul.f32 %v2180, %v2180
    %v2185 = vmul.f32 %v2181, %v2181
    %v2186 = vmul.f32 %v2182, %v2182
    %v2187 = vmul.f32 %v2183, %v2183
    %v2188 = vsel %vm184, %v2184, 0.0
    %2189 = vadd.xlane.f32.xlu0 %v2188
    %v2190 = vpop.xlane.xlu0 %2189
    %v2191 = vsel %vm184, %v2185, 0.0
    %2192 = vadd.xlane.f32.xlu0 %v2191
    %v2193 = vpop.xlane.xlu0 %2192
    %v2194 = vsel %vm184, %v2186, 0.0
    %2195 = vadd.xlane.f32.xlu0 %v2194
    %v2196 = vpop.xlane.xlu0 %2195
    %v2197 = vsel %vm184, %v2187, 0.0
    %2198 = vadd.xlane.f32.xlu0 %v2197
    %v2199 = vpop.xlane.xlu0 %2198
    %v2200 = vmul.f32 %v2190, %v197
    %v2201 = vmul.f32 %v2193, %v197
    %v2202 = vmul.f32 %v2196, %v197
    %v2203 = vmul.f32 %v2199, %v197
    %v2204 = vadd.f32 %v2200, 1e-05
    %v2205 = vadd.f32 %v2201, 1e-05
    %v2206 = vadd.f32 %v2202, 1e-05
    %v2207 = vadd.f32 %v2203, 1e-05
    %v2208 = vrsqrt.pop %v2204
    %v2209 = vrsqrt.pop %v2205
    %v2210 = vrsqrt.pop %v2206
    %v2211 = vrsqrt.pop %v2207
    %v2212 = vmul.f32 %v2180, %v2208
    %v2213 = vmul.f32 %v2181, %v2209
    %v2214 = vmul.f32 %v2182, %v2210
    %v2215 = vmul.f32 %v2183, %v2211
    %v2217 = vlaneseq
    %v2218 = vshrl.u32 %v2217, 7
    %v2219 = vsub.s32 0, %v2218
    %v2220 = vrot.slane %v2162, %v2219
    %v2222 = vmul.f32 %v2212, %v2220
    %v2223 = vmul.f32 %v2213, %v2220
    %v2224 = vmul.f32 %v2214, %v2220
    %v2225 = vmul.f32 %v2215, %v2220
    %v2227 = vlaneseq
    %v2228 = vshrl.u32 %v2227, 7
    %v2229 = vsub.s32 0, %v2228
    %v2230 = vrot.slane %v2163, %v2229
    %v2232 = vadd.f32 %v2222, %v2230
    %v2233 = vadd.f32 %v2223, %v2230
    %v2234 = vadd.f32 %v2224, %v2230
    %v2235 = vadd.f32 %v2225, %v2230
    %v2236 = vld [vmem:[%s12] sm:$0xff]
    %v2237 = vld [vmem:[%s12 + $0x8] sm:$0xff]
    %v2238 = vld [vmem:[%s12 + $0x10] sm:$0xff]
    %v2239 = vld [vmem:[%s12 + $0x18] sm:$0xff]
    %v2240 = vld [vmem:[%s12 + $0x20] sm:$0xff]
    %v2241 = vld [vmem:[%s12 + $0x28] sm:$0xff]
    %v2242 = vld [vmem:[%s12 + $0x30] sm:$0xff]
    %v2243 = vld [vmem:[%s12 + $0x38] sm:$0xff]
    %v2244 = vld [vmem:[%s12 + $0x40] sm:$0xff]
    %v2245 = vld [vmem:[%s12 + $0x48] sm:$0xff]
    %v2246 = vld [vmem:[%s12 + $0x50] sm:$0xff]
    %v2247 = vld [vmem:[%s12 + $0x58] sm:$0xff]
    %v2248 = vld [vmem:[%s12 + $0x60] sm:$0xff]
    %v2249 = vld [vmem:[%s12 + $0x68] sm:$0xff]
    %v2250 = vld [vmem:[%s12 + $0x70] sm:$0xff]
    %v2251 = vld [vmem:[%s12 + $0x78] sm:$0xff]
    %v2252 = vld [vmem:[%s13] sm:$0x3]
    %v2254 = vlaneseq
    %v2255 = vshrl.u32 %v2254, 7
    %v2256 = vsub.s32 0, %v2255
    %v2257 = vrot.slane %v2252, %v2256
    %v2258 = vlaneseq
    %v2259 = vshrl.u32 %v2258, 7
    %v2260 = vsub.s32 1, %v2259
    %v2261 = vrot.slane %v2252, %v2260
    %v2265 = vsel %vm184, %v2232, 0
    %v2268 = vsel %vm184, %v2233, 0
    %v2271 = vsel %vm184, %v2234, 0
    %v2274 = vsel %vm184, %v2235, 0
    %2276 = vmatprep.subr.mxu0 %v2237
    %2277 = vmatpush1.msra.mxu0 %v2236
    %2278 = vmatprep.subr.mxu0 %v2239
    %2279 = vmatpush1.msra.mxu0 %v2238
    %2280 = vmatprep.subr.mxu0 %v2241
    %2281 = vmatpush1.msra.mxu0 %v2240
    %2282 = vmatprep.subr.mxu0 %v2243
    %2283 = vmatpush1.msra.mxu0 %v2242
    %2284 = vmatprep.subr.mxu0 %v2245
    %2285 = vmatpush1.msra.mxu0 %v2244
    %2286 = vmatprep.subr.mxu0 %v2247
    %2287 = vmatpush1.msra.mxu0 %v2246
    %2288 = vmatprep.subr.mxu0 %v2249
    %2289 = vmatpush1.msra.mxu0 %v2248
    %2290 = vmatprep.subr.mxu0 %v2251
    %2291 = vmatpush1.msra.mxu0 %v2250
    %2292 = vmatprep.subr.mxu0 0.0
    %2293 = vmatpush1.msra.mxu0 0.0
    %2294 = vmatprep.subr.mxu0 0.0
    %2295 = vmatpush1.msra.mxu0 0.0
    %2296 = vmatprep.subr.mxu0 0.0
    %2297 = vmatpush1.msra.mxu0 0.0
    %2298 = vmatprep.subr.mxu0 0.0
    %2299 = vmatpush1.msra.mxu0 0.0
    %2300 = vmatprep.subr.mxu0 0.0
    %2301 = vmatpush1.msra.mxu0 0.0
    %2302 = vmatprep.subr.mxu0 0.0
    %2303 = vmatpush1.msra.mxu0 0.0
    %2304 = vmatprep.subr.mxu0 0.0
    %2305 = vmatpush1.msra.mxu0 0.0
    %2306 = vmatprep.subr.mxu0 0.0
    %2307 = vmatpush1.msra.mxu0 0.0
    %2308 = vmatprep.subr.mxu0 0.0
    %2309 = vmatpush1.msra.mxu0 0.0
    %2310 = vmatprep.subr.mxu0 0.0
    %2311 = vmatpush1.msra.mxu0 0.0
    %2312 = vmatprep.subr.mxu0 0.0
    %2313 = vmatpush1.msra.mxu0 0.0
    %2314 = vmatprep.subr.mxu0 0.0
    %2315 = vmatpush1.msra.mxu0 0.0
    %2316 = vmatprep.subr.mxu0 0.0
    %2317 = vmatpush1.msra.mxu0 0.0
    %2318 = vmatprep.subr.mxu0 0.0
    %2319 = vmatpush1.msra.mxu0 0.0
    %2320 = vmatprep.subr.mxu0 0.0
    %2321 = vmatpush1.msra.mxu0 0.0
    %2322 = vmatprep.subr.mxu0 0.0
    %2323 = vmatpush1.msra.mxu0 0.0
    %2324 = vmatprep.subr.mxu0 0.0
    %2325 = vmatpush1.msra.mxu0 0.0
    %2326 = vmatprep.subr.mxu0 0.0
    %2327 = vmatpush1.msra.mxu0 0.0
    %2328 = vmatprep.subr.mxu0 0.0
    %2329 = vmatpush1.msra.mxu0 0.0
    %2330 = vmatprep.subr.mxu0 0.0
    %2331 = vmatpush1.msra.mxu0 0.0
    %2332 = vmatprep.subr.mxu0 0.0
    %2333 = vmatpush1.msra.mxu0 0.0
    %2334 = vmatprep.subr.mxu0 0.0
    %2335 = vmatpush1.msra.mxu0 0.0
    %2336 = vmatprep.subr.mxu0 0.0
    %2337 = vmatpush1.msra.mxu0 0.0
    %2338 = vmatprep.subr.mxu0 0.0
    %2339 = vmatpush1.msra.mxu0 0.0
    %2340 = vmatprep.mubr.f32.mxu0 0.0
    %2341 = vmatmul.mubr.f32.gmra.mrb[0].mxu0 %v2265
    %v2342 = vpop.f32.mrb[0].mxu0
    %v2343 = vadd.f32 %v2257, %v2342
    %v2344 = vpop.f32.mrb[0].mxu0
    %v2345 = vadd.f32 %v2261, %v2344
    %2346 = vmatprep.mubr.f32.mxu0 0.0
    %2347 = vmatmul.mubr.f32.gmra.mrb[0].mxu0 %v2268
    %v2348 = vpop.f32.mrb[0].mxu0
    %v2349 = vadd.f32 %v2257, %v2348
    %v2350 = vpop.f32.mrb[0].mxu0
    %v2351 = vadd.f32 %v2261, %v2350
    %2352 = vmatprep.mubr.f32.mxu0 0.0
    %2353 = vmatmul.mubr.f32.gmra.mrb[0].mxu0 %v2271
    %v2354 = vpop.f32.mrb[0].mxu0
    %v2355 = vadd.f32 %v2257, %v2354
    %v2356 = vpop.f32.mrb[0].mxu0
    %v2357 = vadd.f32 %v2261, %v2356
    %2358 = vmatprep.mubr.f32.mxu0 0.0
    %2359 = vmatmul.mubr.f32.gmra.mrb[0].mxu0 %v2274
    %v2360 = vpop.f32.mrb[0].mxu0
    %v2361 = vadd.f32 %v2257, %v2360
    %v2362 = vpop.f32.mrb[0].mxu0
    %v2363 = vadd.f32 %v2261, %v2362
    %2364 = vdwg.mxu0
    %v2365 = vmul.f32 %v2343, 1.702
    %v2366 = vmul.f32 %v2345, 1.702
    %v2367 = vmul.f32 %v2349, 1.702
    %v2368 = vmul.f32 %v2351, 1.702
    %v2369 = vmul.f32 %v2355, 1.702
    %v2370 = vmul.f32 %v2357, 1.702
    %v2371 = vmul.f32 %v2361, 1.702
    %v2372 = vmul.f32 %v2363, 1.702
    %v2373 = vxor.u32 %v2365, 2147483648
    %v2374 = vxor.u32 %v2366, 2147483648
    %v2375 = vxor.u32 %v2367, 2147483648
    %v2376 = vxor.u32 %v2368, 2147483648
    %v2377 = vxor.u32 %v2369, 2147483648
    %v2378 = vxor.u32 %v2370, 2147483648
    %v2379 = vxor.u32 %v2371, 2147483648
    %v2380 = vxor.u32 %v2372, 2147483648
    %v2381 = vmul.f32 %v2373, 1.442695
    %v2382 = vpow.pop %v2381
    %v2383 = vmul.f32 %v2374, 1.442695
    %v2384 = vpow.pop %v2383
    %v2385 = vmul.f32 %v2375, 1.442695
    %v2386 = vpow.pop %v2385
    %v2387 = vmul.f32 %v2376, 1.442695
    %v2388 = vpow.pop %v2387
    %v2389 = vmul.f32 %v2377, 1.442695
    %v2390 = vpow.pop %v2389
    %v2391 = vmul.f32 %v2378, 1.442695
    %v2392 = vpow.pop %v2391
    %v2393 = vmul.f32 %v2379, 1.442695
    %v2394 = vpow.pop %v2393
    %v2395 = vmul.f32 %v2380, 1.442695
    %v2396 = vpow.pop %v2395
    %v2397 = vadd.f32 %v2382, 1.0
    %v2398 = vadd.f32 %v2384, 1.0
    %v2399 = vadd.f32 %v2386, 1.0
    %v2400 = vadd.f32 %v2388, 1.0
    %v2401 = vadd.f32 %v2390, 1.0
    %v2402 = vadd.f32 %v2392, 1.0
    %v2403 = vadd.f32 %v2394, 1.0
    %v2404 = vadd.f32 %v2396, 1.0
    %v2405 = vrcp.pop %v2397
    %v2406 = vmul.f32 1.0, %v2405
    %v2407 = vrcp.pop %v2398
    %v2408 = vmul.f32 1.0, %v2407
    %v2409 = vrcp.pop %v2399
    %v2410 = vmul.f32 1.0, %v2409
    %v2411 = vrcp.pop %v2400
    %v2412 = vmul.f32 1.0, %v2411
    %v2413 = vrcp.pop %v2401
    %v2414 = vmul.f32 1.0, %v2413
    %v2415 = vrcp.pop %v2402
    %v2416 = vmul.f32 1.0, %v2415
    %v2417 = vrcp.pop %v2403
    %v2418 = vmul.f32 1.0, %v2417
    %v2419 = vrcp.pop %v2404
    %v2420 = vmul.f32 1.0, %v2419
    %v2421 = vmul.f32 %v2343, %v2406
    %v2422 = vmul.f32 %v2345, %v2408
    %v2423 = vmul.f32 %v2349, %v2410
    %v2424 = vmul.f32 %v2351, %v2412
    %v2425 = vmul.f32 %v2355, %v2414
    %v2426 = vmul.f32 %v2357, %v2416
    %v2427 = vmul.f32 %v2361, %v2418
    %v2428 = vmul.f32 %v2363, %v2420
    %v2429 = vld [vmem:[%s14] sm:$0xff]
    %v2430 = vld [vmem:[%s14 + $0x8] sm:$0xff]
    %v2431 = vld [vmem:[%s14 + $0x10] sm:$0xff]
    %v2432 = vld [vmem:[%s14 + $0x18] sm:$0xff]
    %v2433 = vld [vmem:[%s14 + $0x20] sm:$0xff]
    %v2434 = vld [vmem:[%s14 + $0x28] sm:$0xff]
    %v2435 = vld [vmem:[%s14 + $0x30] sm:$0xff]
    %v2436 = vld [vmem:[%s14 + $0x38] sm:$0xff]
    %v2437 = vld [vmem:[%s14 + $0x40] sm:$0xff]
    %v2438 = vld [vmem:[%s14 + $0x48] sm:$0xff]
    %v2439 = vld [vmem:[%s14 + $0x50] sm:$0xff]
    %v2440 = vld [vmem:[%s14 + $0x58] sm:$0xff]
    %v2441 = vld [vmem:[%s14 + $0x60] sm:$0xff]
    %v2442 = vld [vmem:[%s14 + $0x68] sm:$0xff]
    %v2443 = vld [vmem:[%s14 + $0x70] sm:$0xff]
    %v2444 = vld [vmem:[%s14 + $0x78] sm:$0xff]
    %v2445 = vld [vmem:[%s14 + $0x80] sm:$0xff]
    %v2446 = vld [vmem:[%s14 + $0x88] sm:$0xff]
    %v2447 = vld [vmem:[%s14 + $0x90] sm:$0xff]
    %v2448 = vld [vmem:[%s14 + $0x98] sm:$0xff]
    %v2449 = vld [vmem:[%s14 + $0xa0] sm:$0xff]
    %v2450 = vld [vmem:[%s14 + $0xa8] sm:$0xff]
    %v2451 = vld [vmem:[%s14 + $0xb0] sm:$0xff]
    %v2452 = vld [vmem:[%s14 + $0xb8] sm:$0xff]
    %v2453 = vld [vmem:[%s14 + $0xc0] sm:$0xff]
    %v2454 = vld [vmem:[%s14 + $0xc8] sm:$0xff]
    %v2455 = vld [vmem:[%s14 + $0xd0] sm:$0xff]
    %v2456 = vld [vmem:[%s14 + $0xd8] sm:$0xff]
    %v2457 = vld [vmem:[%s14 + $0xe0] sm:$0xff]
    %v2458 = vld [vmem:[%s14 + $0xe8] sm:$0xff]
    %v2459 = vld [vmem:[%s14 + $0xf0] sm:$0xff]
    %v2460 = vld [vmem:[%s14 + $0xf8] sm:$0xff]
    %v2461 = vld [vmem:[%s15] sm:$0x1]
    %v2463 = vlaneseq
    %v2464 = vshrl.u32 %v2463, 7
    %v2465 = vsub.s32 0, %v2464
    %v2466 = vrot.slane %v2461, %v2465
    %2468 = vmatprep.subr.mxu0 0.0
    %2469 = vmatpush1.msra.mxu0 %v2429
    %2470 = vmatprep.subr.mxu0 0.0
    %2471 = vmatpush1.msra.mxu0 %v2430
    %2472 = vmatprep.subr.mxu0 0.0
    %2473 = vmatpush1.msra.mxu0 %v2431
    %2474 = vmatprep.subr.mxu0 0.0
    %2475 = vmatpush1.msra.mxu0 %v2432
    %2476 = vmatprep.subr.mxu0 0.0
    %2477 = vmatpush1.msra.mxu0 %v2433
    %2478 = vmatprep.subr.mxu0 0.0
    %2479 = vmatpush1.msra.mxu0 %v2434
    %2480 = vmatprep.subr.mxu0 0.0
    %2481 = vmatpush1.msra.mxu0 %v2435
    %2482 = vmatprep.subr.mxu0 0.0
    %2483 = vmatpush1.msra.mxu0 %v2436
    %2484 = vmatprep.subr.mxu0 0.0
    %2485 = vmatpush1.msra.mxu0 %v2437
    %2486 = vmatprep.subr.mxu0 0.0
    %2487 = vmatpush1.msra.mxu0 %v2438
    %2488 = vmatprep.subr.mxu0 0.0
    %2489 = vmatpush1.msra.mxu0 %v2439
    %2490 = vmatprep.subr.mxu0 0.0
    %2491 = vmatpush1.msra.mxu0 %v2440
    %2492 = vmatprep.subr.mxu0 0.0
    %2493 = vmatpush1.msra.mxu0 %v2441
    %2494 = vmatprep.subr.mxu0 0.0
    %2495 = vmatpush1.msra.mxu0 %v2442
    %2496 = vmatprep.subr.mxu0 0.0
    %2497 = vmatpush1.msra.mxu0 %v2443
    %2498 = vmatprep.subr.mxu0 0.0
    %2499 = vmatpush1.msra.mxu0 %v2444
    %2500 = vmatprep.subr.mxu0 0.0
    %2501 = vmatpush1.msra.mxu0 %v2445
    %2502 = vmatprep.subr.mxu0 0.0
    %2503 = vmatpush1.msra.mxu0 %v2446
    %2504 = vmatprep.subr.mxu0 0.0
    %2505 = vmatpush1.msra.mxu0 %v2447
    %2506 = vmatprep.subr.mxu0 0.0
    %2507 = vmatpush1.msra.mxu0 %v2448
    %2508 = vmatprep.subr.mxu0 0.0
    %2509 = vmatpush1.msra.mxu0 %v2449
    %2510 = vmatprep.subr.mxu0 0.0
    %2511 = vmatpush1.msra.mxu0 %v2450
    %2512 = vmatprep.subr.mxu0 0.0
    %2513 = vmatpush1.msra.mxu0 %v2451
    %2514 = vmatprep.subr.mxu0 0.0
    %2515 = vmatpush1.msra.mxu0 %v2452
    %2516 = vmatprep.subr.mxu0 0.0
    %2517 = vmatpush1.msra.mxu0 %v2453
    %2518 = vmatprep.subr.mxu0 0.0
    %2519 = vmatpush1.msra.mxu0 %v2454
    %2520 = vmatprep.subr.mxu0 0.0
    %2521 = vmatpush1.msra.mxu0 %v2455
    %2522 = vmatprep.subr.mxu0 0.0
    %2523 = vmatpush1.msra.mxu0 %v2456
    %2524 = vmatprep.subr.mxu0 0.0
    %2525 = vmatpush1.msra.mxu0 %v2457
    %2526 = vmatprep.subr.mxu0 0.0
    %2527 = vmatpush1.msra.mxu0 %v2458
    %2528 = vmatprep.subr.mxu0 0.0
    %2529 = vmatpush1.msra.mxu0 %v2459
    %2530 = vmatprep.subr.mxu0 0.0
    %2531 = vmatpush1.msra.mxu0 %v2460
    %2532 = vmatprep.mubr.f32.mxu0 %v2422
    %2533 = vmatmul.mubr.f32.gmra.mrb[0].mxu0 %v2421
    %v2534 = vpop.f32.mrb[0].mxu0
    %v2535 = vadd.f32 %v2466, %v2534
    %v2536 = vpop.f32.mrb[0].mxu0
    %2537 = vmatprep.mubr.f32.mxu0 %v2424
    %2538 = vmatmul.mubr.f32.gmra.mrb[0].mxu0 %v2423
    %v2539 = vpop.f32.mrb[0].mxu0
    %v2540 = vadd.f32 %v2466, %v2539
    %v2541 = vpop.f32.mrb[0].mxu0
    %2542 = vmatprep.mubr.f32.mxu0 %v2426
    %2543 = vmatmul.mubr.f32.gmra.mrb[0].mxu0 %v2425
    %v2544 = vpop.f32.mrb[0].mxu0
    %v2545 = vadd.f32 %v2466, %v2544
    %v2546 = vpop.f32.mrb[0].mxu0
    %2547 = vmatprep.mubr.f32.mxu0 %v2428
    %2548 = vmatmul.mubr.f32.gmra.mrb[0].mxu0 %v2427
    %v2549 = vpop.f32.mrb[0].mxu0
    %v2550 = vadd.f32 %v2466, %v2549
    %v2551 = vpop.f32.mrb[0].mxu0
    %2552 = vdwg.mxu0
    %v2553 = vadd.f32 %v2158, %v2535
    %v2554 = vadd.f32 %v2159, %v2540
    %v2555 = vadd.f32 %v2160, %v2545
    %v2556 = vadd.f32 %v2161, %v2550
    %s2557 = scalar_lea.vmem %s4, 1
    %v2558 = vld [vmem:[%s2557] sm:$0x1]
    %s2559 = scalar_lea.vmem %s5, 1
    %v2560 = vld [vmem:[%s2559] sm:$0x1]
    %v2561 = vsel %vm184, %v2553, 0.0
    %2562 = vadd.xlane.f32.xlu0 %v2561
    %v2563 = vpop.xlane.xlu0 %2562
    %v2564 = vsel %vm184, %v2554, 0.0
    %2565 = vadd.xlane.f32.xlu0 %v2564
    %v2566 = vpop.xlane.xlu0 %2565
    %v2567 = vsel %vm184, %v2555, 0.0
    %2568 = vadd.xlane.f32.xlu0 %v2567
    %v2569 = vpop.xlane.xlu0 %2568
    %v2570 = vsel %vm184, %v2556, 0.0
    %2571 = vadd.xlane.f32.xlu0 %v2570
    %v2572 = vpop.xlane.xlu0 %2571
    %v2573 = vmul.f32 %v2563, %v197
    %v2574 = vmul.f32 %v2566, %v197
    %v2575 = vmul.f32 %v2569, %v197
    %v2576 = vmul.f32 %v2572, %v197
    %v2577 = vsub.f32 %v2553, %v2573
    %v2578 = vsub.f32 %v2554, %v2574
    %v2579 = vsub.f32 %v2555, %v2575
    %v2580 = vsub.f32 %v2556, %v2576
    %v2581 = vmul.f32 %v2577, %v2577
    %v2582 = vmul.f32 %v2578, %v2578
    %v2583 = vmul.f32 %v2579, %v2579
    %v2584 = vmul.f32 %v2580, %v2580
    %v2585 = vsel %vm184, %v2581, 0.0
    %2586 = vadd.xlane.f32.xlu0 %v2585
    %v2587 = vpop.xlane.xlu0 %2586
    %v2588 = vsel %vm184, %v2582, 0.0
    %2589 = vadd.xlane.f32.xlu0 %v2588
    %v2590 = vpop.xlane.xlu0 %2589
    %v2591 = vsel %vm184, %v2583, 0.0
    %2592 = vadd.xlane.f32.xlu0 %v2591
    %v2593 = vpop.xlane.xlu0 %2592
    %v2594 = vsel %vm184, %v2584, 0.0
    %2595 = vadd.xlane.f32.xlu0 %v2594
    %v2596 = vpop.xlane.xlu0 %2595
    %v2597 = vmul.f32 %v2587, %v197
    %v2598 = vmul.f32 %v2590, %v197
    %v2599 = vmul.f32 %v2593, %v197
    %v2600 = vmul.f32 %v2596, %v197
    %v2601 = vadd.f32 %v2597, 1e-05
    %v2602 = vadd.f32 %v2598, 1e-05
    %v2603 = vadd.f32 %v2599, 1e-05
    %v2604 = vadd.f32 %v2600, 1e-05
    %v2605 = vrsqrt.pop %v2601
    %v2606 = vrsqrt.pop %v2602
    %v2607 = vrsqrt.pop %v2603
    %v2608 = vrsqrt.pop %v2604
    %v2609 = vmul.f32 %v2577, %v2605
    %v2610 = vmul.f32 %v2578, %v2606
    %v2611 = vmul.f32 %v2579, %v2607
    %v2612 = vmul.f32 %v2580, %v2608
    %v2614 = vlaneseq
    %v2615 = vshrl.u32 %v2614, 7
    %v2616 = vsub.s32 0, %v2615
    %v2617 = vrot.slane %v2558, %v2616
    %v2619 = vmul.f32 %v2609, %v2617
    %v2620 = vmul.f32 %v2610, %v2617
    %v2621 = vmul.f32 %v2611, %v2617
    %v2622 = vmul.f32 %v2612, %v2617
    %v2624 = vlaneseq
    %v2625 = vshrl.u32 %v2624, 7
    %v2626 = vsub.s32 0, %v2625
    %v2627 = vrot.slane %v2560, %v2626
    %v2629 = vadd.f32 %v2619, %v2627
    %v2630 = vadd.f32 %v2620, %v2627
    %v2631 = vadd.f32 %v2621, %v2627
    %v2632 = vadd.f32 %v2622, %v2627
    %s2633 = scalar_lea.vmem %s6, 128
    %v2634 = vld [vmem:[%s2633] sm:$0xff]
    %v2635 = vld [vmem:[%s2633 + $0x8] sm:$0xff]
    %v2636 = vld [vmem:[%s2633 + $0x10] sm:$0xff]
    %v2637 = vld [vmem:[%s2633 + $0x18] sm:$0xff]
    %v2638 = vld [vmem:[%s2633 + $0x20] sm:$0xff]
    %v2639 = vld [vmem:[%s2633 + $0x28] sm:$0xff]
    %v2640 = vld [vmem:[%s2633 + $0x30] sm:$0xff]
    %v2641 = vld [vmem:[%s2633 + $0x38] sm:$0xff]
    %v2642 = vld [vmem:[%s2633 + $0x40] sm:$0xff]
    %v2643 = vld [vmem:[%s2633 + $0x48] sm:$0xff]
    %v2644 = vld [vmem:[%s2633 + $0x50] sm:$0xff]
    %v2645 = vld [vmem:[%s2633 + $0x58] sm:$0xff]
    %v2646 = vld [vmem:[%s2633 + $0x60] sm:$0xff]
    %v2647 = vld [vmem:[%s2633 + $0x68] sm:$0xff]
    %v2648 = vld [vmem:[%s2633 + $0x70] sm:$0xff]
    %v2649 = vld [vmem:[%s2633 + $0x78] sm:$0xff]
    %s2650 = scalar_lea.vmem %s7, 2
    %v2651 = vld [vmem:[%s2650] sm:$0x3]
    %v2653 = vlaneseq
    %v2654 = vshrl.u32 %v2653, 7
    %v2655 = vsub.s32 0, %v2654
    %v2656 = vrot.slane %v2651, %v2655
    %v2657 = vlaneseq
    %v2658 = vshrl.u32 %v2657, 7
    %v2659 = vsub.s32 1, %v2658
    %v2660 = vrot.slane %v2651, %v2659
    %v2664 = vsel %vm184, %v2629, 0
    %v2667 = vsel %vm184, %v2630, 0
    %v2670 = vsel %vm184, %v2631, 0
    %v2673 = vsel %vm184, %v2632, 0
    %2675 = vmatprep.subr.mxu0 %v2635
    %2676 = vmatpush1.msra.mxu0 %v2634
    %2677 = vmatprep.subr.mxu0 %v2637
    %2678 = vmatpush1.msra.mxu0 %v2636
    %2679 = vmatprep.subr.mxu0 %v2639
    %2680 = vmatpush1.msra.mxu0 %v2638
    %2681 = vmatprep.subr.mxu0 %v2641
    %2682 = vmatpush1.msra.mxu0 %v2640
    %2683 = vmatprep.subr.mxu0 %v2643
    %2684 = vmatpush1.msra.mxu0 %v2642
    %2685 = vmatprep.subr.mxu0 %v2645
    %2686 = vmatpush1.msra.mxu0 %v2644
    %2687 = vmatprep.subr.mxu0 %v2647
    %2688 = vmatpush1.msra.mxu0 %v2646
    %2689 = vmatprep.subr.mxu0 %v2649
    %2690 = vmatpush1.msra.mxu0 %v2648
    %2691 = vmatprep.subr.mxu0 0.0
    %2692 = vmatpush1.msra.mxu0 0.0
    %2693 = vmatprep.subr.mxu0 0.0
    %2694 = vmatpush1.msra.mxu0 0.0
    %2695 = vmatprep.subr.mxu0 0.0
    %2696 = vmatpush1.msra.mxu0 0.0
    %2697 = vmatprep.subr.mxu0 0.0
    %2698 = vmatpush1.msra.mxu0 0.0
    %2699 = vmatprep.subr.mxu0 0.0
    %2700 = vmatpush1.msra.mxu0 0.0
    %2701 = vmatprep.subr.mxu0 0.0
    %2702 = vmatpush1.msra.mxu0 0.0
    %2703 = vmatprep.subr.mxu0 0.0
    %2704 = vmatpush1.msra.mxu0 0.0
    %2705 = vmatprep.subr.mxu0 0.0
    %2706 = vmatpush1.msra.mxu0 0.0
    %2707 = vmatprep.subr.mxu0 0.0
    %2708 = vmatpush1.msra.mxu0 0.0
    %2709 = vmatprep.subr.mxu0 0.0
    %2710 = vmatpush1.msra.mxu0 0.0
    %2711 = vmatprep.subr.mxu0 0.0
    %2712 = vmatpush1.msra.mxu0 0.0
    %2713 = vmatprep.subr.mxu0 0.0
    %2714 = vmatpush1.msra.mxu0 0.0
    %2715 = vmatprep.subr.mxu0 0.0
    %2716 = vmatpush1.msra.mxu0 0.0
    %2717 = vmatprep.subr.mxu0 0.0
    %2718 = vmatpush1.msra.mxu0 0.0
    %2719 = vmatprep.subr.mxu0 0.0
    %2720 = vmatpush1.msra.mxu0 0.0
    %2721 = vmatprep.subr.mxu0 0.0
    %2722 = vmatpush1.msra.mxu0 0.0
    %2723 = vmatprep.subr.mxu0 0.0
    %2724 = vmatpush1.msra.mxu0 0.0
    %2725 = vmatprep.subr.mxu0 0.0
    %2726 = vmatpush1.msra.mxu0 0.0
    %2727 = vmatprep.subr.mxu0 0.0
    %2728 = vmatpush1.msra.mxu0 0.0
    %2729 = vmatprep.subr.mxu0 0.0
    %2730 = vmatpush1.msra.mxu0 0.0
    %2731 = vmatprep.subr.mxu0 0.0
    %2732 = vmatpush1.msra.mxu0 0.0
    %2733 = vmatprep.subr.mxu0 0.0
    %2734 = vmatpush1.msra.mxu0 0.0
    %2735 = vmatprep.subr.mxu0 0.0
    %2736 = vmatpush1.msra.mxu0 0.0
    %2737 = vmatprep.subr.mxu0 0.0
    %2738 = vmatpush1.msra.mxu0 0.0
    %2739 = vmatprep.mubr.f32.mxu0 0.0
    %2740 = vmatmul.mubr.f32.gmra.mrb[0].mxu0 %v2664
    %v2741 = vpop.f32.mrb[0].mxu0
    %v2742 = vadd.f32 %v2656, %v2741
    %v2743 = vpop.f32.mrb[0].mxu0
    %v2744 = vadd.f32 %v2660, %v2743
    %2745 = vmatprep.mubr.f32.mxu0 0.0
    %2746 = vmatmul.mubr.f32.gmra.mrb[0].mxu0 %v2667
    %v2747 = vpop.f32.mrb[0].mxu0
    %v2748 = vadd.f32 %v2656, %v2747
    %v2749 = vpop.f32.mrb[0].mxu0
    %v2750 = vadd.f32 %v2660, %v2749
    %2751 = vmatprep.mubr.f32.mxu0 0.0
    %2752 = vmatmul.mubr.f32.gmra.mrb[0].mxu0 %v2670
    %v2753 = vpop.f32.mrb[0].mxu0
    %v2754 = vadd.f32 %v2656, %v2753
    %v2755 = vpop.f32.mrb[0].mxu0
    %v2756 = vadd.f32 %v2660, %v2755
    %2757 = vmatprep.mubr.f32.mxu0 0.0
    %2758 = vmatmul.mubr.f32.gmra.mrb[0].mxu0 %v2673
    %v2759 = vpop.f32.mrb[0].mxu0
    %v2760 = vadd.f32 %v2656, %v2759
    %v2761 = vpop.f32.mrb[0].mxu0
    %v2762 = vadd.f32 %v2660, %v2761
    %2763 = vdwg.mxu0
    %v2764 = vmul.f32 %v2742, 0.25
    %v2765 = vmul.f32 %v2748, 0.25
    %v2766 = vmul.f32 %v2754, 0.25
    %v2767 = vmul.f32 %v2760, 0.25
    %2770 = vrot.lane.b32.xlu0 %v2742, 64
    %v2771 = vpop.permute.xlu0 %2770
    %2772 = vrot.lane.b32.xlu0 %v2748, 64
    %v2773 = vpop.permute.xlu0 %2772
    %v2775 = vsel %vm397, %v2764, 0
    %v2778 = vsel %vm397, %v2765, 0
    %v2780 = vsel %vm397, %v2771, 0
    %v2782 = vsel %vm397, %v2773, 0
    %2784 = vmatprep.subr.mxu0 0.0
    %2785 = vmatpush1.xpose.msra.mxu0 %v2780
    %2786 = vmatprep.subr.mxu0 0.0
    %2787 = vmatpush1.xpose.msra.mxu0 %v2782
    %2788 = vmatprep.subr.mxu0 0.0
    %2789 = vmatpush1.xpose.msra.mxu0 0.0
    %2790 = vmatprep.subr.mxu0 0.0
    %2791 = vmatpush1.xpose.msra.mxu0 0.0
    %2792 = vmatprep.subr.mxu0 0.0
    %2793 = vmatpush1.xpose.msra.mxu0 0.0
    %2794 = vmatprep.subr.mxu0 0.0
    %2795 = vmatpush1.xpose.msra.mxu0 0.0
    %2796 = vmatprep.subr.mxu0 0.0
    %2797 = vmatpush1.xpose.msra.mxu0 0.0
    %2798 = vmatprep.subr.mxu0 0.0
    %2799 = vmatpush1.xpose.msra.mxu0 0.0
    %2800 = vmatprep.subr.mxu0 0.0
    %2801 = vmatpush1.xpose.msra.mxu0 0.0
    %2802 = vmatprep.subr.mxu0 0.0
    %2803 = vmatpush1.xpose.msra.mxu0 0.0
    %2804 = vmatprep.subr.mxu0 0.0
    %2805 = vmatpush1.xpose.msra.mxu0 0.0
    %2806 = vmatprep.subr.mxu0 0.0
    %2807 = vmatpush1.xpose.msra.mxu0 0.0
    %2808 = vmatprep.subr.mxu0 0.0
    %2809 = vmatpush1.xpose.msra.mxu0 0.0
    %2810 = vmatprep.subr.mxu0 0.0
    %2811 = vmatpush1.xpose.msra.mxu0 0.0
    %2812 = vmatprep.subr.mxu0 0.0
    %2813 = vmatpush1.xpose.msra.mxu0 0.0
    %2814 = vmatprep.subr.mxu0 0.0
    %2815 = vmatpush1.xpose.msra.mxu0 0.0
    %2816 = vmatprep.subr.mxu0 0.0
    %2817 = vmatpush1.xpose.msra.mxu0 0.0
    %2818 = vmatprep.subr.mxu0 0.0
    %2819 = vmatpush1.xpose.msra.mxu0 0.0
    %2820 = vmatprep.subr.mxu0 0.0
    %2821 = vmatpush1.xpose.msra.mxu0 0.0
    %2822 = vmatprep.subr.mxu0 0.0
    %2823 = vmatpush1.xpose.msra.mxu0 0.0
    %2824 = vmatprep.subr.mxu0 0.0
    %2825 = vmatpush1.xpose.msra.mxu0 0.0
    %2826 = vmatprep.subr.mxu0 0.0
    %2827 = vmatpush1.xpose.msra.mxu0 0.0
    %2828 = vmatprep.subr.mxu0 0.0
    %2829 = vmatpush1.xpose.msra.mxu0 0.0
    %2830 = vmatprep.subr.mxu0 0.0
    %2831 = vmatpush1.xpose.msra.mxu0 0.0
    %2832 = vmatprep.subr.mxu0 0.0
    %2833 = vmatpush1.xpose.msra.mxu0 0.0
    %2834 = vmatprep.subr.mxu0 0.0
    %2835 = vmatpush1.xpose.msra.mxu0 0.0
    %2836 = vmatprep.subr.mxu0 0.0
    %2837 = vmatpush1.xpose.msra.mxu0 0.0
    %2838 = vmatprep.subr.mxu0 0.0
    %2839 = vmatpush1.xpose.msra.mxu0 0.0
    %2840 = vmatprep.subr.mxu0 0.0
    %2841 = vmatpush1.xpose.msra.mxu0 0.0
    %2842 = vmatprep.subr.mxu0 0.0
    %2843 = vmatpush1.xpose.msra.mxu0 0.0
    %2844 = vmatprep.subr.mxu0 0.0
    %2845 = vmatpush1.xpose.msra.mxu0 0.0
    %2846 = vmatprep.subr.mxu0 0.0
    %2847 = vmatpush1.xpose.msra.mxu0 0.0
    %2848 = vmatprep.mubr.f32.mxu0 0.0
    %2849 = vmatmul.mubr.f32.gmra.mrb[0].mxu0 %v2775
    %v2850 = vpop.f32.mrb[0].mxu0
    %v2851 = vadd.f32 0.0, %v2850
    %v2852 = vpop.f32.mrb[0].mxu0
    %2853 = vmatprep.mubr.f32.mxu0 0.0
    %2854 = vmatmul.mubr.f32.gmra.mrb[0].mxu0 %v2778
    %v2855 = vpop.f32.mrb[0].mxu0
    %v2856 = vadd.f32 0.0, %v2855
    %v2857 = vpop.f32.mrb[0].mxu0
    %2858 = vdwg.mxu0
    %v2859 = vsel %vm397, %v2851, -inf
    %2860 = vmax.xlane.f32.xlu0 %v2859
    %v2861 = vpop.xlane.xlu0 %2860
    %v2862 = vsel %vm397, %v2856, -inf
    %2863 = vmax.xlane.f32.xlu0 %v2862
    %v2864 = vpop.xlane.xlu0 %2863
    %v2865 = vsub.f32 %v2851, %v2861
    %v2866 = vsub.f32 %v2856, %v2864
    %v2867 = vmul.f32 %v2865, 1.442695
    %v2868 = vpow.pop %v2867
    %v2869 = vmul.f32 %v2866, 1.442695
    %v2870 = vpow.pop %v2869
    %v2871 = vsel %vm397, %v2868, 0.0
    %2872 = vadd.xlane.f32.xlu0 %v2871
    %v2873 = vpop.xlane.xlu0 %2872
    %v2874 = vsel %vm397, %v2870, 0.0
    %2875 = vadd.xlane.f32.xlu0 %v2874
    %v2876 = vpop.xlane.xlu0 %2875
    %v2877 = vrcp.pop %v2873
    %v2878 = vrcp.pop %v2876
    %v2879 = vmul.f32 %v2868, %v2877
    %v2880 = vmul.f32 %v2870, %v2878
    %v2882 = vsel %vm397, %v2879, 0
    %v2885 = vsel %vm397, %v2880, 0
    %2887 = vmatprep.subr.mxu0 0.0
    %2888 = vmatpush1.msra.mxu0 %v2744
    %2889 = vmatprep.subr.mxu0 0.0
    %2890 = vmatpush1.msra.mxu0 %v2750
    %2891 = vmatprep.subr.mxu0 0.0
    %2892 = vmatpush1.msra.mxu0 0.0
    %2893 = vmatprep.subr.mxu0 0.0
    %2894 = vmatpush1.msra.mxu0 0.0
    %2895 = vmatprep.subr.mxu0 0.0
    %2896 = vmatpush1.msra.mxu0 0.0
    %2897 = vmatprep.subr.mxu0 0.0
    %2898 = vmatpush1.msra.mxu0 0.0
    %2899 = vmatprep.subr.mxu0 0.0
    %2900 = vmatpush1.msra.mxu0 0.0
    %2901 = vmatprep.subr.mxu0 0.0
    %2902 = vmatpush1.msra.mxu0 0.0
    %2903 = vmatprep.subr.mxu0 0.0
    %2904 = vmatpush1.msra.mxu0 0.0
    %2905 = vmatprep.subr.mxu0 0.0
    %2906 = vmatpush1.msra.mxu0 0.0
    %2907 = vmatprep.subr.mxu0 0.0
    %2908 = vmatpush1.msra.mxu0 0.0
    %2909 = vmatprep.subr.mxu0 0.0
    %2910 = vmatpush1.msra.mxu0 0.0
    %2911 = vmatprep.subr.mxu0 0.0
    %2912 = vmatpush1.msra.mxu0 0.0
    %2913 = vmatprep.subr.mxu0 0.0
    %2914 = vmatpush1.msra.mxu0 0.0
    %2915 = vmatprep.subr.mxu0 0.0
    %2916 = vmatpush1.msra.mxu0 0.0
    %2917 = vmatprep.subr.mxu0 0.0
    %2918 = vmatpush1.msra.mxu0 0.0
    %2919 = vmatprep.subr.mxu0 0.0
    %2920 = vmatpush1.msra.mxu0 0.0
    %2921 = vmatprep.subr.mxu0 0.0
    %2922 = vmatpush1.msra.mxu0 0.0
    %2923 = vmatprep.subr.mxu0 0.0
    %2924 = vmatpush1.msra.mxu0 0.0
    %2925 = vmatprep.subr.mxu0 0.0
    %2926 = vmatpush1.msra.mxu0 0.0
    %2927 = vmatprep.subr.mxu0 0.0
    %2928 = vmatpush1.msra.mxu0 0.0
    %2929 = vmatprep.subr.mxu0 0.0
    %2930 = vmatpush1.msra.mxu0 0.0
    %2931 = vmatprep.subr.mxu0 0.0
    %2932 = vmatpush1.msra.mxu0 0.0
    %2933 = vmatprep.subr.mxu0 0.0
    %2934 = vmatpush1.msra.mxu0 0.0
    %2935 = vmatprep.subr.mxu0 0.0
    %2936 = vmatpush1.msra.mxu0 0.0
    %2937 = vmatprep.subr.mxu0 0.0
    %2938 = vmatpush1.msra.mxu0 0.0
    %2939 = vmatprep.subr.mxu0 0.0
    %2940 = vmatpush1.msra.mxu0 0.0
    %2941 = vmatprep.subr.mxu0 0.0
    %2942 = vmatpush1.msra.mxu0 0.0
    %2943 = vmatprep.subr.mxu0 0.0
    %2944 = vmatpush1.msra.mxu0 0.0
    %2945 = vmatprep.subr.mxu0 0.0
    %2946 = vmatpush1.msra.mxu0 0.0
    %2947 = vmatprep.subr.mxu0 0.0
    %2948 = vmatpush1.msra.mxu0 0.0
    %2949 = vmatprep.subr.mxu0 0.0
    %2950 = vmatpush1.msra.mxu0 0.0
    %2951 = vmatprep.mubr.f32.mxu0 0.0
    %2952 = vmatmul.mubr.f32.gmra.mrb[0].mxu0 %v2882
    %v2953 = vpop.f32.mrb[0].mxu0
    %v2954 = vadd.f32 0.0, %v2953
    %v2955 = vpop.f32.mrb[0].mxu0
    %2956 = vmatprep.mubr.f32.mxu0 0.0
    %2957 = vmatmul.mubr.f32.gmra.mrb[0].mxu0 %v2885
    %v2958 = vpop.f32.mrb[0].mxu0
    %v2959 = vadd.f32 0.0, %v2958
    %v2960 = vpop.f32.mrb[0].mxu0
    %2961 = vdwg.mxu0
    %2962 = vrot.lane.b32.xlu0 %v2764, 112
    %v2963 = vpop.permute.xlu0 %2962
    %2964 = vrot.lane.b32.xlu0 %v2765, 112
    %v2965 = vpop.permute.xlu0 %2964
    %2966 = vrot.lane.b32.xlu0 %v2742, 48
    %v2967 = vpop.permute.xlu0 %2966
    %2968 = vrot.lane.b32.xlu0 %v2748, 48
    %v2969 = vpop.permute.xlu0 %2968
    %v2970 = vsel %vm397, %v2963, 0
    %v2972 = vsel %vm397, %v2965, 0
    %v2974 = vsel %vm397, %v2967, 0
    %v2976 = vsel %vm397, %v2969, 0
    %2978 = vmatprep.subr.mxu0 0.0
    %2979 = vmatpush1.xpose.msra.mxu0 %v2974
    %2980 = vmatprep.subr.mxu0 0.0
    %2981 = vmatpush1.xpose.msra.mxu0 %v2976
    %2982 = vmatprep.subr.mxu0 0.0
    %2983 = vmatpush1.xpose.msra.mxu0 0.0
    %2984 = vmatprep.subr.mxu0 0.0
    %2985 = vmatpush1.xpose.msra.mxu0 0.0
    %2986 = vmatprep.subr.mxu0 0.0
    %2987 = vmatpush1.xpose.msra.mxu0 0.0
    %2988 = vmatprep.subr.mxu0 0.0
    %2989 = vmatpush1.xpose.msra.mxu0 0.0
    %2990 = vmatprep.subr.mxu0 0.0
    %2991 = vmatpush1.xpose.msra.mxu0 0.0
    %2992 = vmatprep.subr.mxu0 0.0
    %2993 = vmatpush1.xpose.msra.mxu0 0.0
    %2994 = vmatprep.subr.mxu0 0.0
    %2995 = vmatpush1.xpose.msra.mxu0 0.0
    %2996 = vmatprep.subr.mxu0 0.0
    %2997 = vmatpush1.xpose.msra.mxu0 0.0
    %2998 = vmatprep.subr.mxu0 0.0
    %2999 = vmatpush1.xpose.msra.mxu0 0.0
    %3000 = vmatprep.subr.mxu0 0.0
    %3001 = vmatpush1.xpose.msra.mxu0 0.0
    %3002 = vmatprep.subr.mxu0 0.0
    %3003 = vmatpush1.xpose.msra.mxu0 0.0
    %3004 = vmatprep.subr.mxu0 0.0
    %3005 = vmatpush1.xpose.msra.mxu0 0.0
    %3006 = vmatprep.subr.mxu0 0.0
    %3007 = vmatpush1.xpose.msra.mxu0 0.0
    %3008 = vmatprep.subr.mxu0 0.0
    %3009 = vmatpush1.xpose.msra.mxu0 0.0
    %3010 = vmatprep.subr.mxu0 0.0
    %3011 = vmatpush1.xpose.msra.mxu0 0.0
    %3012 = vmatprep.subr.mxu0 0.0
    %3013 = vmatpush1.xpose.msra.mxu0 0.0
    %3014 = vmatprep.subr.mxu0 0.0
    %3015 = vmatpush1.xpose.msra.mxu0 0.0
    %3016 = vmatprep.subr.mxu0 0.0
    %3017 = vmatpush1.xpose.msra.mxu0 0.0
    %3018 = vmatprep.subr.mxu0 0.0
    %3019 = vmatpush1.xpose.msra.mxu0 0.0
    %3020 = vmatprep.subr.mxu0 0.0
    %3021 = vmatpush1.xpose.msra.mxu0 0.0
    %3022 = vmatprep.subr.mxu0 0.0
    %3023 = vmatpush1.xpose.msra.mxu0 0.0
    %3024 = vmatprep.subr.mxu0 0.0
    %3025 = vmatpush1.xpose.msra.mxu0 0.0
    %3026 = vmatprep.subr.mxu0 0.0
    %3027 = vmatpush1.xpose.msra.mxu0 0.0
    %3028 = vmatprep.subr.mxu0 0.0
    %3029 = vmatpush1.xpose.msra.mxu0 0.0
    %3030 = vmatprep.subr.mxu0 0.0
    %3031 = vmatpush1.xpose.msra.mxu0 0.0
    %3032 = vmatprep.subr.mxu0 0.0
    %3033 = vmatpush1.xpose.msra.mxu0 0.0
    %3034 = vmatprep.subr.mxu0 0.0
    %3035 = vmatpush1.xpose.msra.mxu0 0.0
    %3036 = vmatprep.subr.mxu0 0.0
    %3037 = vmatpush1.xpose.msra.mxu0 0.0
    %3038 = vmatprep.subr.mxu0 0.0
    %3039 = vmatpush1.xpose.msra.mxu0 0.0
    %3040 = vmatprep.subr.mxu0 0.0
    %3041 = vmatpush1.xpose.msra.mxu0 0.0
    %3042 = vmatprep.mubr.f32.mxu0 0.0
    %3043 = vmatmul.mubr.f32.gmra.mrb[0].mxu0 %v2970
    %v3044 = vpop.f32.mrb[0].mxu0
    %v3045 = vadd.f32 0.0, %v3044
    %v3046 = vpop.f32.mrb[0].mxu0
    %3047 = vmatprep.mubr.f32.mxu0 0.0
    %3048 = vmatmul.mubr.f32.gmra.mrb[0].mxu0 %v2972
    %v3049 = vpop.f32.mrb[0].mxu0
    %v3050 = vadd.f32 0.0, %v3049
    %v3051 = vpop.f32.mrb[0].mxu0
    %3052 = vdwg.mxu0
    %v3053 = vsel %vm397, %v3045, -inf
    %3054 = vmax.xlane.f32.xlu0 %v3053
    %v3055 = vpop.xlane.xlu0 %3054
    %v3056 = vsel %vm397, %v3050, -inf
    %3057 = vmax.xlane.f32.xlu0 %v3056
    %v3058 = vpop.xlane.xlu0 %3057
    %v3059 = vsub.f32 %v3045, %v3055
    %v3060 = vsub.f32 %v3050, %v3058
    %v3061 = vmul.f32 %v3059, 1.442695
    %v3062 = vpow.pop %v3061
    %v3063 = vmul.f32 %v3060, 1.442695
    %v3064 = vpow.pop %v3063
    %v3065 = vsel %vm397, %v3062, 0.0
    %3066 = vadd.xlane.f32.xlu0 %v3065
    %v3067 = vpop.xlane.xlu0 %3066
    %v3068 = vsel %vm397, %v3064, 0.0
    %3069 = vadd.xlane.f32.xlu0 %v3068
    %v3070 = vpop.xlane.xlu0 %3069
    %v3071 = vrcp.pop %v3067
    %v3072 = vrcp.pop %v3070
    %v3073 = vmul.f32 %v3062, %v3071
    %v3074 = vmul.f32 %v3064, %v3072
    %3077 = vrot.lane.b32.xlu0 %v2744, 112
    %v3078 = vpop.permute.xlu0 %3077
    %3079 = vrot.lane.b32.xlu0 %v2750, 112
    %v3080 = vpop.permute.xlu0 %3079
    %v3084 = vsel %vm397, %v3073, 0
    %v3087 = vsel %vm397, %v3074, 0
    %3089 = vmatprep.subr.mxu0 0.0
    %3090 = vmatpush1.msra.mxu0 %v3078
    %3091 = vmatprep.subr.mxu0 0.0
    %3092 = vmatpush1.msra.mxu0 %v3080
    %3093 = vmatprep.subr.mxu0 0.0
    %3094 = vmatpush1.msra.mxu0 0.0
    %3095 = vmatprep.subr.mxu0 0.0
    %3096 = vmatpush1.msra.mxu0 0.0
    %3097 = vmatprep.subr.mxu0 0.0
    %3098 = vmatpush1.msra.mxu0 0.0
    %3099 = vmatprep.subr.mxu0 0.0
    %3100 = vmatpush1.msra.mxu0 0.0
    %3101 = vmatprep.subr.mxu0 0.0
    %3102 = vmatpush1.msra.mxu0 0.0
    %3103 = vmatprep.subr.mxu0 0.0
    %3104 = vmatpush1.msra.mxu0 0.0
    %3105 = vmatprep.subr.mxu0 0.0
    %3106 = vmatpush1.msra.mxu0 0.0
    %3107 = vmatprep.subr.mxu0 0.0
    %3108 = vmatpush1.msra.mxu0 0.0
    %3109 = vmatprep.subr.mxu0 0.0
    %3110 = vmatpush1.msra.mxu0 0.0
    %3111 = vmatprep.subr.mxu0 0.0
    %3112 = vmatpush1.msra.mxu0 0.0
    %3113 = vmatprep.subr.mxu0 0.0
    %3114 = vmatpush1.msra.mxu0 0.0
    %3115 = vmatprep.subr.mxu0 0.0
    %3116 = vmatpush1.msra.mxu0 0.0
    %3117 = vmatprep.subr.mxu0 0.0
    %3118 = vmatpush1.msra.mxu0 0.0
    %3119 = vmatprep.subr.mxu0 0.0
    %3120 = vmatpush1.msra.mxu0 0.0
    %3121 = vmatprep.subr.mxu0 0.0
    %3122 = vmatpush1.msra.mxu0 0.0
    %3123 = vmatprep.subr.mxu0 0.0
    %3124 = vmatpush1.msra.mxu0 0.0
    %3125 = vmatprep.subr.mxu0 0.0
    %3126 = vmatpush1.msra.mxu0 0.0
    %3127 = vmatprep.subr.mxu0 0.0
    %3128 = vmatpush1.msra.mxu0 0.0
    %3129 = vmatprep.subr.mxu0 0.0
    %3130 = vmatpush1.msra.mxu0 0.0
    %3131 = vmatprep.subr.mxu0 0.0
    %3132 = vmatpush1.msra.mxu0 0.0
    %3133 = vmatprep.subr.mxu0 0.0
    %3134 = vmatpush1.msra.mxu0 0.0
    %3135 = vmatprep.subr.mxu0 0.0
    %3136 = vmatpush1.msra.mxu0 0.0
    %3137 = vmatprep.subr.mxu0 0.0
    %3138 = vmatpush1.msra.mxu0 0.0
    %3139 = vmatprep.subr.mxu0 0.0
    %3140 = vmatpush1.msra.mxu0 0.0
    %3141 = vmatprep.subr.mxu0 0.0
    %3142 = vmatpush1.msra.mxu0 0.0
    %3143 = vmatprep.subr.mxu0 0.0
    %3144 = vmatpush1.msra.mxu0 0.0
    %3145 = vmatprep.subr.mxu0 0.0
    %3146 = vmatpush1.msra.mxu0 0.0
    %3147 = vmatprep.subr.mxu0 0.0
    %3148 = vmatpush1.msra.mxu0 0.0
    %3149 = vmatprep.subr.mxu0 0.0
    %3150 = vmatpush1.msra.mxu0 0.0
    %3151 = vmatprep.subr.mxu0 0.0
    %3152 = vmatpush1.msra.mxu0 0.0
    %3153 = vmatprep.mubr.f32.mxu0 0.0
    %3154 = vmatmul.mubr.f32.gmra.mrb[0].mxu0 %v3084
    %v3155 = vpop.f32.mrb[0].mxu0
    %v3156 = vadd.f32 0.0, %v3155
    %v3157 = vpop.f32.mrb[0].mxu0
    %3158 = vmatprep.mubr.f32.mxu0 0.0
    %3159 = vmatmul.mubr.f32.gmra.mrb[0].mxu0 %v3087
    %v3160 = vpop.f32.mrb[0].mxu0
    %v3161 = vadd.f32 0.0, %v3160
    %v3162 = vpop.f32.mrb[0].mxu0
    %3163 = vdwg.mxu0
    %3164 = vrot.lane.b32.xlu0 %v2764, 96
    %v3165 = vpop.permute.xlu0 %3164
    %3166 = vrot.lane.b32.xlu0 %v2765, 96
    %v3167 = vpop.permute.xlu0 %3166
    %3168 = vrot.lane.b32.xlu0 %v2742, 32
    %v3169 = vpop.permute.xlu0 %3168
    %3170 = vrot.lane.b32.xlu0 %v2748, 32
    %v3171 = vpop.permute.xlu0 %3170
    %v3172 = vsel %vm397, %v3165, 0
    %v3174 = vsel %vm397, %v3167, 0
    %v3176 = vsel %vm397, %v3169, 0
    %v3178 = vsel %vm397, %v3171, 0
    %3180 = vmatprep.subr.mxu0 0.0
    %3181 = vmatpush1.xpose.msra.mxu0 %v3176
    %3182 = vmatprep.subr.mxu0 0.0
    %3183 = vmatpush1.xpose.msra.mxu0 %v3178
    %3184 = vmatprep.subr.mxu0 0.0
    %3185 = vmatpush1.xpose.msra.mxu0 0.0
    %3186 = vmatprep.subr.mxu0 0.0
    %3187 = vmatpush1.xpose.msra.mxu0 0.0
    %3188 = vmatprep.subr.mxu0 0.0
    %3189 = vmatpush1.xpose.msra.mxu0 0.0
    %3190 = vmatprep.subr.mxu0 0.0
    %3191 = vmatpush1.xpose.msra.mxu0 0.0
    %3192 = vmatprep.subr.mxu0 0.0
    %3193 = vmatpush1.xpose.msra.mxu0 0.0
    %3194 = vmatprep.subr.mxu0 0.0
    %3195 = vmatpush1.xpose.msra.mxu0 0.0
    %3196 = vmatprep.subr.mxu0 0.0
    %3197 = vmatpush1.xpose.msra.mxu0 0.0
    %3198 = vmatprep.subr.mxu0 0.0
    %3199 = vmatpush1.xpose.msra.mxu0 0.0
    %3200 = vmatprep.subr.mxu0 0.0
    %3201 = vmatpush1.xpose.msra.mxu0 0.0
    %3202 = vmatprep.subr.mxu0 0.0
    %3203 = vmatpush1.xpose.msra.mxu0 0.0
    %3204 = vmatprep.subr.mxu0 0.0
    %3205 = vmatpush1.xpose.msra.mxu0 0.0
    %3206 = vmatprep.subr.mxu0 0.0
    %3207 = vmatpush1.xpose.msra.mxu0 0.0
    %3208 = vmatprep.subr.mxu0 0.0
    %3209 = vmatpush1.xpose.msra.mxu0 0.0
    %3210 = vmatprep.subr.mxu0 0.0
    %3211 = vmatpush1.xpose.msra.mxu0 0.0
    %3212 = vmatprep.subr.mxu0 0.0
    %3213 = vmatpush1.xpose.msra.mxu0 0.0
    %3214 = vmatprep.subr.mxu0 0.0
    %3215 = vmatpush1.xpose.msra.mxu0 0.0
    %3216 = vmatprep.subr.mxu0 0.0
    %3217 = vmatpush1.xpose.msra.mxu0 0.0
    %3218 = vmatprep.subr.mxu0 0.0
    %3219 = vmatpush1.xpose.msra.mxu0 0.0
    %3220 = vmatprep.subr.mxu0 0.0
    %3221 = vmatpush1.xpose.msra.mxu0 0.0
    %3222 = vmatprep.subr.mxu0 0.0
    %3223 = vmatpush1.xpose.msra.mxu0 0.0
    %3224 = vmatprep.subr.mxu0 0.0
    %3225 = vmatpush1.xpose.msra.mxu0 0.0
    %3226 = vmatprep.subr.mxu0 0.0
    %3227 = vmatpush1.xpose.msra.mxu0 0.0
    %3228 = vmatprep.subr.mxu0 0.0
    %3229 = vmatpush1.xpose.msra.mxu0 0.0
    %3230 = vmatprep.subr.mxu0 0.0
    %3231 = vmatpush1.xpose.msra.mxu0 0.0
    %3232 = vmatprep.subr.mxu0 0.0
    %3233 = vmatpush1.xpose.msra.mxu0 0.0
    %3234 = vmatprep.subr.mxu0 0.0
    %3235 = vmatpush1.xpose.msra.mxu0 0.0
    %3236 = vmatprep.subr.mxu0 0.0
    %3237 = vmatpush1.xpose.msra.mxu0 0.0
    %3238 = vmatprep.subr.mxu0 0.0
    %3239 = vmatpush1.xpose.msra.mxu0 0.0
    %3240 = vmatprep.subr.mxu0 0.0
    %3241 = vmatpush1.xpose.msra.mxu0 0.0
    %3242 = vmatprep.subr.mxu0 0.0
    %3243 = vmatpush1.xpose.msra.mxu0 0.0
    %3244 = vmatprep.mubr.f32.mxu0 0.0
    %3245 = vmatmul.mubr.f32.gmra.mrb[0].mxu0 %v3172
    %v3246 = vpop.f32.mrb[0].mxu0
    %v3247 = vadd.f32 0.0, %v3246
    %v3248 = vpop.f32.mrb[0].mxu0
    %3249 = vmatprep.mubr.f32.mxu0 0.0
    %3250 = vmatmul.mubr.f32.gmra.mrb[0].mxu0 %v3174
    %v3251 = vpop.f32.mrb[0].mxu0
    %v3252 = vadd.f32 0.0, %v3251
    %v3253 = vpop.f32.mrb[0].mxu0
    %3254 = vdwg.mxu0
    %v3255 = vsel %vm397, %v3247, -inf
    %3256 = vmax.xlane.f32.xlu0 %v3255
    %v3257 = vpop.xlane.xlu0 %3256
    %v3258 = vsel %vm397, %v3252, -inf
    %3259 = vmax.xlane.f32.xlu0 %v3258
    %v3260 = vpop.xlane.xlu0 %3259
    %v3261 = vsub.f32 %v3247, %v3257
    %v3262 = vsub.f32 %v3252, %v3260
    %v3263 = vmul.f32 %v3261, 1.442695
    %v3264 = vpow.pop %v3263
    %v3265 = vmul.f32 %v3262, 1.442695
    %v3266 = vpow.pop %v3265
    %v3267 = vsel %vm397, %v3264, 0.0
    %3268 = vadd.xlane.f32.xlu0 %v3267
    %v3269 = vpop.xlane.xlu0 %3268
    %v3270 = vsel %vm397, %v3266, 0.0
    %3271 = vadd.xlane.f32.xlu0 %v3270
    %v3272 = vpop.xlane.xlu0 %3271
    %v3273 = vrcp.pop %v3269
    %v3274 = vrcp.pop %v3272
    %v3275 = vmul.f32 %v3264, %v3273
    %v3276 = vmul.f32 %v3266, %v3274
    %3277 = vrot.lane.b32.xlu0 %v2744, 96
    %v3278 = vpop.permute.xlu0 %3277
    %3279 = vrot.lane.b32.xlu0 %v2750, 96
    %v3280 = vpop.permute.xlu0 %3279
    %v3284 = vsel %vm397, %v3275, 0
    %v3287 = vsel %vm397, %v3276, 0
    %3289 = vmatprep.subr.mxu0 0.0
    %3290 = vmatpush1.msra.mxu0 %v3278
    %3291 = vmatprep.subr.mxu0 0.0
    %3292 = vmatpush1.msra.mxu0 %v3280
    %3293 = vmatprep.subr.mxu0 0.0
    %3294 = vmatpush1.msra.mxu0 0.0
    %3295 = vmatprep.subr.mxu0 0.0
    %3296 = vmatpush1.msra.mxu0 0.0
    %3297 = vmatprep.subr.mxu0 0.0
    %3298 = vmatpush1.msra.mxu0 0.0
    %3299 = vmatprep.subr.mxu0 0.0
    %3300 = vmatpush1.msra.mxu0 0.0
    %3301 = vmatprep.subr.mxu0 0.0
    %3302 = vmatpush1.msra.mxu0 0.0
    %3303 = vmatprep.subr.mxu0 0.0
    %3304 = vmatpush1.msra.mxu0 0.0
    %3305 = vmatprep.subr.mxu0 0.0
    %3306 = vmatpush1.msra.mxu0 0.0
    %3307 = vmatprep.subr.mxu0 0.0
    %3308 = vmatpush1.msra.mxu0 0.0
    %3309 = vmatprep.subr.mxu0 0.0
    %3310 = vmatpush1.msra.mxu0 0.0
    %3311 = vmatprep.subr.mxu0 0.0
    %3312 = vmatpush1.msra.mxu0 0.0
    %3313 = vmatprep.subr.mxu0 0.0
    %3314 = vmatpush1.msra.mxu0 0.0
    %3315 = vmatprep.subr.mxu0 0.0
    %3316 = vmatpush1.msra.mxu0 0.0
    %3317 = vmatprep.subr.mxu0 0.0
    %3318 = vmatpush1.msra.mxu0 0.0
    %3319 = vmatprep.subr.mxu0 0.0
    %3320 = vmatpush1.msra.mxu0 0.0
    %3321 = vmatprep.subr.mxu0 0.0
    %3322 = vmatpush1.msra.mxu0 0.0
    %3323 = vmatprep.subr.mxu0 0.0
    %3324 = vmatpush1.msra.mxu0 0.0
    %3325 = vmatprep.subr.mxu0 0.0
    %3326 = vmatpush1.msra.mxu0 0.0
    %3327 = vmatprep.subr.mxu0 0.0
    %3328 = vmatpush1.msra.mxu0 0.0
    %3329 = vmatprep.subr.mxu0 0.0
    %3330 = vmatpush1.msra.mxu0 0.0
    %3331 = vmatprep.subr.mxu0 0.0
    %3332 = vmatpush1.msra.mxu0 0.0
    %3333 = vmatprep.subr.mxu0 0.0
    %3334 = vmatpush1.msra.mxu0 0.0
    %3335 = vmatprep.subr.mxu0 0.0
    %3336 = vmatpush1.msra.mxu0 0.0
    %3337 = vmatprep.subr.mxu0 0.0
    %3338 = vmatpush1.msra.mxu0 0.0
    %3339 = vmatprep.subr.mxu0 0.0
    %3340 = vmatpush1.msra.mxu0 0.0
    %3341 = vmatprep.subr.mxu0 0.0
    %3342 = vmatpush1.msra.mxu0 0.0
    %3343 = vmatprep.subr.mxu0 0.0
    %3344 = vmatpush1.msra.mxu0 0.0
    %3345 = vmatprep.subr.mxu0 0.0
    %3346 = vmatpush1.msra.mxu0 0.0
    %3347 = vmatprep.subr.mxu0 0.0
    %3348 = vmatpush1.msra.mxu0 0.0
    %3349 = vmatprep.subr.mxu0 0.0
    %3350 = vmatpush1.msra.mxu0 0.0
    %3351 = vmatprep.subr.mxu0 0.0
    %3352 = vmatpush1.msra.mxu0 0.0
    %3353 = vmatprep.mubr.f32.mxu0 0.0
    %3354 = vmatmul.mubr.f32.gmra.mrb[0].mxu0 %v3284
    %v3355 = vpop.f32.mrb[0].mxu0
    %v3356 = vadd.f32 0.0, %v3355
    %v3357 = vpop.f32.mrb[0].mxu0
    %3358 = vmatprep.mubr.f32.mxu0 0.0
    %3359 = vmatmul.mubr.f32.gmra.mrb[0].mxu0 %v3287
    %v3360 = vpop.f32.mrb[0].mxu0
    %v3361 = vadd.f32 0.0, %v3360
    %v3362 = vpop.f32.mrb[0].mxu0
    %3363 = vdwg.mxu0
    %3364 = vrot.lane.b32.xlu0 %v2764, 80
    %v3365 = vpop.permute.xlu0 %3364
    %3366 = vrot.lane.b32.xlu0 %v2765, 80
    %v3367 = vpop.permute.xlu0 %3366
    %3368 = vrot.lane.b32.xlu0 %v2742, 16
    %v3369 = vpop.permute.xlu0 %3368
    %3370 = vrot.lane.b32.xlu0 %v2748, 16
    %v3371 = vpop.permute.xlu0 %3370
    %v3372 = vsel %vm397, %v3365, 0
    %v3374 = vsel %vm397, %v3367, 0
    %v3376 = vsel %vm397, %v3369, 0
    %v3378 = vsel %vm397, %v3371, 0
    %3380 = vmatprep.subr.mxu0 0.0
    %3381 = vmatpush1.xpose.msra.mxu0 %v3376
    %3382 = vmatprep.subr.mxu0 0.0
    %3383 = vmatpush1.xpose.msra.mxu0 %v3378
    %3384 = vmatprep.subr.mxu0 0.0
    %3385 = vmatpush1.xpose.msra.mxu0 0.0
    %3386 = vmatprep.subr.mxu0 0.0
    %3387 = vmatpush1.xpose.msra.mxu0 0.0
    %3388 = vmatprep.subr.mxu0 0.0
    %3389 = vmatpush1.xpose.msra.mxu0 0.0
    %3390 = vmatprep.subr.mxu0 0.0
    %3391 = vmatpush1.xpose.msra.mxu0 0.0
    %3392 = vmatprep.subr.mxu0 0.0
    %3393 = vmatpush1.xpose.msra.mxu0 0.0
    %3394 = vmatprep.subr.mxu0 0.0
    %3395 = vmatpush1.xpose.msra.mxu0 0.0
    %3396 = vmatprep.subr.mxu0 0.0
    %3397 = vmatpush1.xpose.msra.mxu0 0.0
    %3398 = vmatprep.subr.mxu0 0.0
    %3399 = vmatpush1.xpose.msra.mxu0 0.0
    %3400 = vmatprep.subr.mxu0 0.0
    %3401 = vmatpush1.xpose.msra.mxu0 0.0
    %3402 = vmatprep.subr.mxu0 0.0
    %3403 = vmatpush1.xpose.msra.mxu0 0.0
    %3404 = vmatprep.subr.mxu0 0.0
    %3405 = vmatpush1.xpose.msra.mxu0 0.0
    %3406 = vmatprep.subr.mxu0 0.0
    %3407 = vmatpush1.xpose.msra.mxu0 0.0
    %3408 = vmatprep.subr.mxu0 0.0
    %3409 = vmatpush1.xpose.msra.mxu0 0.0
    %3410 = vmatprep.subr.mxu0 0.0
    %3411 = vmatpush1.xpose.msra.mxu0 0.0
    %3412 = vmatprep.subr.mxu0 0.0
    %3413 = vmatpush1.xpose.msra.mxu0 0.0
    %3414 = vmatprep.subr.mxu0 0.0
    %3415 = vmatpush1.xpose.msra.mxu0 0.0
    %3416 = vmatprep.subr.mxu0 0.0
    %3417 = vmatpush1.xpose.msra.mxu0 0.0
    %3418 = vmatprep.subr.mxu0 0.0
    %3419 = vmatpush1.xpose.msra.mxu0 0.0
    %3420 = vmatprep.subr.mxu0 0.0
    %3421 = vmatpush1.xpose.msra.mxu0 0.0
    %3422 = vmatprep.subr.mxu0 0.0
    %3423 = vmatpush1.xpose.msra.mxu0 0.0
    %3424 = vmatprep.subr.mxu0 0.0
    %3425 = vmatpush1.xpose.msra.mxu0 0.0
    %3426 = vmatprep.subr.mxu0 0.0
    %3427 = vmatpush1.xpose.msra.mxu0 0.0
    %3428 = vmatprep.subr.mxu0 0.0
    %3429 = vmatpush1.xpose.msra.mxu0 0.0
    %3430 = vmatprep.subr.mxu0 0.0
    %3431 = vmatpush1.xpose.msra.mxu0 0.0
    %3432 = vmatprep.subr.mxu0 0.0
    %3433 = vmatpush1.xpose.msra.mxu0 0.0
    %3434 = vmatprep.subr.mxu0 0.0
    %3435 = vmatpush1.xpose.msra.mxu0 0.0
    %3436 = vmatprep.subr.mxu0 0.0
    %3437 = vmatpush1.xpose.msra.mxu0 0.0
    %3438 = vmatprep.subr.mxu0 0.0
    %3439 = vmatpush1.xpose.msra.mxu0 0.0
    %3440 = vmatprep.subr.mxu0 0.0
    %3441 = vmatpush1.xpose.msra.mxu0 0.0
    %3442 = vmatprep.subr.mxu0 0.0
    %3443 = vmatpush1.xpose.msra.mxu0 0.0
    %3444 = vmatprep.mubr.f32.mxu0 0.0
    %3445 = vmatmul.mubr.f32.gmra.mrb[0].mxu0 %v3372
    %v3446 = vpop.f32.mrb[0].mxu0
    %v3447 = vadd.f32 0.0, %v3446
    %v3448 = vpop.f32.mrb[0].mxu0
    %3449 = vmatprep.mubr.f32.mxu0 0.0
    %3450 = vmatmul.mubr.f32.gmra.mrb[0].mxu0 %v3374
    %v3451 = vpop.f32.mrb[0].mxu0
    %v3452 = vadd.f32 0.0, %v3451
    %v3453 = vpop.f32.mrb[0].mxu0
    %3454 = vdwg.mxu0
    %v3455 = vsel %vm397, %v3447, -inf
    %3456 = vmax.xlane.f32.xlu0 %v3455
    %v3457 = vpop.xlane.xlu0 %3456
    %v3458 = vsel %vm397, %v3452, -inf
    %3459 = vmax.xlane.f32.xlu0 %v3458
    %v3460 = vpop.xlane.xlu0 %3459
    %v3461 = vsub.f32 %v3447, %v3457
    %v3462 = vsub.f32 %v3452, %v3460
    %v3463 = vmul.f32 %v3461, 1.442695
    %v3464 = vpow.pop %v3463
    %v3465 = vmul.f32 %v3462, 1.442695
    %v3466 = vpow.pop %v3465
    %v3467 = vsel %vm397, %v3464, 0.0
    %3468 = vadd.xlane.f32.xlu0 %v3467
    %v3469 = vpop.xlane.xlu0 %3468
    %v3470 = vsel %vm397, %v3466, 0.0
    %3471 = vadd.xlane.f32.xlu0 %v3470
    %v3472 = vpop.xlane.xlu0 %3471
    %v3473 = vrcp.pop %v3469
    %v3474 = vrcp.pop %v3472
    %v3475 = vmul.f32 %v3464, %v3473
    %v3476 = vmul.f32 %v3466, %v3474
    %3477 = vrot.lane.b32.xlu0 %v2744, 80
    %v3478 = vpop.permute.xlu0 %3477
    %3479 = vrot.lane.b32.xlu0 %v2750, 80
    %v3480 = vpop.permute.xlu0 %3479
    %v3484 = vsel %vm397, %v3475, 0
    %v3487 = vsel %vm397, %v3476, 0
    %3489 = vmatprep.subr.mxu0 0.0
    %3490 = vmatpush1.msra.mxu0 %v3478
    %3491 = vmatprep.subr.mxu0 0.0
    %3492 = vmatpush1.msra.mxu0 %v3480
    %3493 = vmatprep.subr.mxu0 0.0
    %3494 = vmatpush1.msra.mxu0 0.0
    %3495 = vmatprep.subr.mxu0 0.0
    %3496 = vmatpush1.msra.mxu0 0.0
    %3497 = vmatprep.subr.mxu0 0.0
    %3498 = vmatpush1.msra.mxu0 0.0
    %3499 = vmatprep.subr.mxu0 0.0
    %3500 = vmatpush1.msra.mxu0 0.0
    %3501 = vmatprep.subr.mxu0 0.0
    %3502 = vmatpush1.msra.mxu0 0.0
    %3503 = vmatprep.subr.mxu0 0.0
    %3504 = vmatpush1.msra.mxu0 0.0
    %3505 = vmatprep.subr.mxu0 0.0
    %3506 = vmatpush1.msra.mxu0 0.0
    %3507 = vmatprep.subr.mxu0 0.0
    %3508 = vmatpush1.msra.mxu0 0.0
    %3509 = vmatprep.subr.mxu0 0.0
    %3510 = vmatpush1.msra.mxu0 0.0
    %3511 = vmatprep.subr.mxu0 0.0
    %3512 = vmatpush1.msra.mxu0 0.0
    %3513 = vmatprep.subr.mxu0 0.0
    %3514 = vmatpush1.msra.mxu0 0.0
    %3515 = vmatprep.subr.mxu0 0.0
    %3516 = vmatpush1.msra.mxu0 0.0
    %3517 = vmatprep.subr.mxu0 0.0
    %3518 = vmatpush1.msra.mxu0 0.0
    %3519 = vmatprep.subr.mxu0 0.0
    %3520 = vmatpush1.msra.mxu0 0.0
    %3521 = vmatprep.subr.mxu0 0.0
    %3522 = vmatpush1.msra.mxu0 0.0
    %3523 = vmatprep.subr.mxu0 0.0
    %3524 = vmatpush1.msra.mxu0 0.0
    %3525 = vmatprep.subr.mxu0 0.0
    %3526 = vmatpush1.msra.mxu0 0.0
    %3527 = vmatprep.subr.mxu0 0.0
    %3528 = vmatpush1.msra.mxu0 0.0
    %3529 = vmatprep.subr.mxu0 0.0
    %3530 = vmatpush1.msra.mxu0 0.0
    %3531 = vmatprep.subr.mxu0 0.0
    %3532 = vmatpush1.msra.mxu0 0.0
    %3533 = vmatprep.subr.mxu0 0.0
    %3534 = vmatpush1.msra.mxu0 0.0
    %3535 = vmatprep.subr.mxu0 0.0
    %3536 = vmatpush1.msra.mxu0 0.0
    %3537 = vmatprep.subr.mxu0 0.0
    %3538 = vmatpush1.msra.mxu0 0.0
    %3539 = vmatprep.subr.mxu0 0.0
    %3540 = vmatpush1.msra.mxu0 0.0
    %3541 = vmatprep.subr.mxu0 0.0
    %3542 = vmatpush1.msra.mxu0 0.0
    %3543 = vmatprep.subr.mxu0 0.0
    %3544 = vmatpush1.msra.mxu0 0.0
    %3545 = vmatprep.subr.mxu0 0.0
    %3546 = vmatpush1.msra.mxu0 0.0
    %3547 = vmatprep.subr.mxu0 0.0
    %3548 = vmatpush1.msra.mxu0 0.0
    %3549 = vmatprep.subr.mxu0 0.0
    %3550 = vmatpush1.msra.mxu0 0.0
    %3551 = vmatprep.subr.mxu0 0.0
    %3552 = vmatpush1.msra.mxu0 0.0
    %3553 = vmatprep.mubr.f32.mxu0 0.0
    %3554 = vmatmul.mubr.f32.gmra.mrb[0].mxu0 %v3484
    %v3555 = vpop.f32.mrb[0].mxu0
    %v3556 = vadd.f32 0.0, %v3555
    %v3557 = vpop.f32.mrb[0].mxu0
    %3558 = vmatprep.mubr.f32.mxu0 0.0
    %3559 = vmatmul.mubr.f32.gmra.mrb[0].mxu0 %v3487
    %v3560 = vpop.f32.mrb[0].mxu0
    %v3561 = vadd.f32 0.0, %v3560
    %v3562 = vpop.f32.mrb[0].mxu0
    %3563 = vdwg.mxu0
    %3566 = vrot.lane.b32.xlu0 %v3156, 16
    %v3567 = vpop.permute.xlu0 %3566
    %3568 = vrot.lane.b32.xlu0 %v3161, 16
    %v3569 = vpop.permute.xlu0 %3568
    %3574 = vrot.lane.b32.xlu0 %v3356, 32
    %v3575 = vpop.permute.xlu0 %3574
    %3576 = vrot.lane.b32.xlu0 %v3361, 32
    %v3577 = vpop.permute.xlu0 %3576
    %3582 = vrot.lane.b32.xlu0 %v3556, 48
    %v3583 = vpop.permute.xlu0 %3582
    %3584 = vrot.lane.b32.xlu0 %v3561, 48
    %v3585 = vpop.permute.xlu0 %3584
    %v3588 = vsel %vm397, %v2954, %v3567
    %v3589 = vsel %vm397, %v2959, %v3569
    %v3590 = vsel %vm1214, %v3588, %v3575
    %v3591 = vsel %vm1214, %v3589, %v3577
    %v3592 = vsel %vm1217, %v3590, %v3583
    %v3593 = vsel %vm1217, %v3591, %v3585
    %3596 = vrot.lane.b32.xlu0 %v2754, 64
    %v3597 = vpop.permute.xlu0 %3596
    %3598 = vrot.lane.b32.xlu0 %v2760, 64
    %v3599 = vpop.permute.xlu0 %3598
    %v3601 = vsel %vm397, %v2766, 0
    %v3604 = vsel %vm397, %v2767, 0
    %v3606 = vsel %vm397, %v3597, 0
    %v3608 = vsel %vm397, %v3599, 0
    %3610 = vmatprep.subr.mxu0 0.0
    %3611 = vmatpush1.xpose.msra.mxu0 %v3606
    %3612 = vmatprep.subr.mxu0 0.0
    %3613 = vmatpush1.xpose.msra.mxu0 %v3608
    %3614 = vmatprep.subr.mxu0 0.0
    %3615 = vmatpush1.xpose.msra.mxu0 0.0
    %3616 = vmatprep.subr.mxu0 0.0
    %3617 = vmatpush1.xpose.msra.mxu0 0.0
    %3618 = vmatprep.subr.mxu0 0.0
    %3619 = vmatpush1.xpose.msra.mxu0 0.0
    %3620 = vmatprep.subr.mxu0 0.0
    %3621 = vmatpush1.xpose.msra.mxu0 0.0
    %3622 = vmatprep.subr.mxu0 0.0
    %3623 = vmatpush1.xpose.msra.mxu0 0.0
    %3624 = vmatprep.subr.mxu0 0.0
    %3625 = vmatpush1.xpose.msra.mxu0 0.0
    %3626 = vmatprep.subr.mxu0 0.0
    %3627 = vmatpush1.xpose.msra.mxu0 0.0
    %3628 = vmatprep.subr.mxu0 0.0
    %3629 = vmatpush1.xpose.msra.mxu0 0.0
    %3630 = vmatprep.subr.mxu0 0.0
    %3631 = vmatpush1.xpose.msra.mxu0 0.0
    %3632 = vmatprep.subr.mxu0 0.0
    %3633 = vmatpush1.xpose.msra.mxu0 0.0
    %3634 = vmatprep.subr.mxu0 0.0
    %3635 = vmatpush1.xpose.msra.mxu0 0.0
    %3636 = vmatprep.subr.mxu0 0.0
    %3637 = vmatpush1.xpose.msra.mxu0 0.0
    %3638 = vmatprep.subr.mxu0 0.0
    %3639 = vmatpush1.xpose.msra.mxu0 0.0
    %3640 = vmatprep.subr.mxu0 0.0
    %3641 = vmatpush1.xpose.msra.mxu0 0.0
    %3642 = vmatprep.subr.mxu0 0.0
    %3643 = vmatpush1.xpose.msra.mxu0 0.0
    %3644 = vmatprep.subr.mxu0 0.0
    %3645 = vmatpush1.xpose.msra.mxu0 0.0
    %3646 = vmatprep.subr.mxu0 0.0
    %3647 = vmatpush1.xpose.msra.mxu0 0.0
    %3648 = vmatprep.subr.mxu0 0.0
    %3649 = vmatpush1.xpose.msra.mxu0 0.0
    %3650 = vmatprep.subr.mxu0 0.0
    %3651 = vmatpush1.xpose.msra.mxu0 0.0
    %3652 = vmatprep.subr.mxu0 0.0
    %3653 = vmatpush1.xpose.msra.mxu0 0.0
    %3654 = vmatprep.subr.mxu0 0.0
    %3655 = vmatpush1.xpose.msra.mxu0 0.0
    %3656 = vmatprep.subr.mxu0 0.0
    %3657 = vmatpush1.xpose.msra.mxu0 0.0
    %3658 = vmatprep.subr.mxu0 0.0
    %3659 = vmatpush1.xpose.msra.mxu0 0.0
    %3660 = vmatprep.subr.mxu0 0.0
    %3661 = vmatpush1.xpose.msra.mxu0 0.0
    %3662 = vmatprep.subr.mxu0 0.0
    %3663 = vmatpush1.xpose.msra.mxu0 0.0
    %3664 = vmatprep.subr.mxu0 0.0
    %3665 = vmatpush1.xpose.msra.mxu0 0.0
    %3666 = vmatprep.subr.mxu0 0.0
    %3667 = vmatpush1.xpose.msra.mxu0 0.0
    %3668 = vmatprep.subr.mxu0 0.0
    %3669 = vmatpush1.xpose.msra.mxu0 0.0
    %3670 = vmatprep.subr.mxu0 0.0
    %3671 = vmatpush1.xpose.msra.mxu0 0.0
    %3672 = vmatprep.subr.mxu0 0.0
    %3673 = vmatpush1.xpose.msra.mxu0 0.0
    %3674 = vmatprep.mubr.f32.mxu0 0.0
    %3675 = vmatmul.mubr.f32.gmra.mrb[0].mxu0 %v3601
    %v3676 = vpop.f32.mrb[0].mxu0
    %v3677 = vadd.f32 0.0, %v3676
    %v3678 = vpop.f32.mrb[0].mxu0
    %3679 = vmatprep.mubr.f32.mxu0 0.0
    %3680 = vmatmul.mubr.f32.gmra.mrb[0].mxu0 %v3604
    %v3681 = vpop.f32.mrb[0].mxu0
    %v3682 = vadd.f32 0.0, %v3681
    %v3683 = vpop.f32.mrb[0].mxu0
    %3684 = vdwg.mxu0
    %v3685 = vsel %vm397, %v3677, -inf
    %3686 = vmax.xlane.f32.xlu0 %v3685
    %v3687 = vpop.xlane.xlu0 %3686
    %v3688 = vsel %vm397, %v3682, -inf
    %3689 = vmax.xlane.f32.xlu0 %v3688
    %v3690 = vpop.xlane.xlu0 %3689
    %v3691 = vsub.f32 %v3677, %v3687
    %v3692 = vsub.f32 %v3682, %v3690
    %v3693 = vmul.f32 %v3691, 1.442695
    %v3694 = vpow.pop %v3693
    %v3695 = vmul.f32 %v3692, 1.442695
    %v3696 = vpow.pop %v3695
    %v3697 = vsel %vm397, %v3694, 0.0
    %3698 = vadd.xlane.f32.xlu0 %v3697
    %v3699 = vpop.xlane.xlu0 %3698
    %v3700 = vsel %vm397, %v3696, 0.0
    %3701 = vadd.xlane.f32.xlu0 %v3700
    %v3702 = vpop.xlane.xlu0 %3701
    %v3703 = vrcp.pop %v3699
    %v3704 = vrcp.pop %v3702
    %v3705 = vmul.f32 %v3694, %v3703
    %v3706 = vmul.f32 %v3696, %v3704
    %v3708 = vsel %vm397, %v3705, 0
    %v3711 = vsel %vm397, %v3706, 0
    %3713 = vmatprep.subr.mxu0 0.0
    %3714 = vmatpush1.msra.mxu0 %v2756
    %3715 = vmatprep.subr.mxu0 0.0
    %3716 = vmatpush1.msra.mxu0 %v2762
    %3717 = vmatprep.subr.mxu0 0.0
    %3718 = vmatpush1.msra.mxu0 0.0
    %3719 = vmatprep.subr.mxu0 0.0
    %3720 = vmatpush1.msra.mxu0 0.0
    %3721 = vmatprep.subr.mxu0 0.0
    %3722 = vmatpush1.msra.mxu0 0.0
    %3723 = vmatprep.subr.mxu0 0.0
    %3724 = vmatpush1.msra.mxu0 0.0
    %3725 = vmatprep.subr.mxu0 0.0
    %3726 = vmatpush1.msra.mxu0 0.0
    %3727 = vmatprep.subr.mxu0 0.0
    %3728 = vmatpush1.msra.mxu0 0.0
    %3729 = vmatprep.subr.mxu0 0.0
    %3730 = vmatpush1.msra.mxu0 0.0
    %3731 = vmatprep.subr.mxu0 0.0
    %3732 = vmatpush1.msra.mxu0 0.0
    %3733 = vmatprep.subr.mxu0 0.0
    %3734 = vmatpush1.msra.mxu0 0.0
    %3735 = vmatprep.subr.mxu0 0.0
    %3736 = vmatpush1.msra.mxu0 0.0
    %3737 = vmatprep.subr.mxu0 0.0
    %3738 = vmatpush1.msra.mxu0 0.0
    %3739 = vmatprep.subr.mxu0 0.0
    %3740 = vmatpush1.msra.mxu0 0.0
    %3741 = vmatprep.subr.mxu0 0.0
    %3742 = vmatpush1.msra.mxu0 0.0
    %3743 = vmatprep.subr.mxu0 0.0
    %3744 = vmatpush1.msra.mxu0 0.0
    %3745 = vmatprep.subr.mxu0 0.0
    %3746 = vmatpush1.msra.mxu0 0.0
    %3747 = vmatprep.subr.mxu0 0.0
    %3748 = vmatpush1.msra.mxu0 0.0
    %3749 = vmatprep.subr.mxu0 0.0
    %3750 = vmatpush1.msra.mxu0 0.0
    %3751 = vmatprep.subr.mxu0 0.0
    %3752 = vmatpush1.msra.mxu0 0.0
    %3753 = vmatprep.subr.mxu0 0.0
    %3754 = vmatpush1.msra.mxu0 0.0
    %3755 = vmatprep.subr.mxu0 0.0
    %3756 = vmatpush1.msra.mxu0 0.0
    %3757 = vmatprep.subr.mxu0 0.0
    %3758 = vmatpush1.msra.mxu0 0.0
    %3759 = vmatprep.subr.mxu0 0.0
    %3760 = vmatpush1.msra.mxu0 0.0
    %3761 = vmatprep.subr.mxu0 0.0
    %3762 = vmatpush1.msra.mxu0 0.0
    %3763 = vmatprep.subr.mxu0 0.0
    %3764 = vmatpush1.msra.mxu0 0.0
    %3765 = vmatprep.subr.mxu0 0.0
    %3766 = vmatpush1.msra.mxu0 0.0
    %3767 = vmatprep.subr.mxu0 0.0
    %3768 = vmatpush1.msra.mxu0 0.0
    %3769 = vmatprep.subr.mxu0 0.0
    %3770 = vmatpush1.msra.mxu0 0.0
    %3771 = vmatprep.subr.mxu0 0.0
    %3772 = vmatpush1.msra.mxu0 0.0
    %3773 = vmatprep.subr.mxu0 0.0
    %3774 = vmatpush1.msra.mxu0 0.0
    %3775 = vmatprep.subr.mxu0 0.0
    %3776 = vmatpush1.msra.mxu0 0.0
    %3777 = vmatprep.mubr.f32.mxu0 0.0
    %3778 = vmatmul.mubr.f32.gmra.mrb[0].mxu0 %v3708
    %v3779 = vpop.f32.mrb[0].mxu0
    %v3780 = vadd.f32 0.0, %v3779
    %v3781 = vpop.f32.mrb[0].mxu0
    %3782 = vmatprep.mubr.f32.mxu0 0.0
    %3783 = vmatmul.mubr.f32.gmra.mrb[0].mxu0 %v3711
    %v3784 = vpop.f32.mrb[0].mxu0
    %v3785 = vadd.f32 0.0, %v3784
    %v3786 = vpop.f32.mrb[0].mxu0
    %3787 = vdwg.mxu0
    %3788 = vrot.lane.b32.xlu0 %v2766, 112
    %v3789 = vpop.permute.xlu0 %3788
    %3790 = vrot.lane.b32.xlu0 %v2767, 112
    %v3791 = vpop.permute.xlu0 %3790
    %3792 = vrot.lane.b32.xlu0 %v2754, 48
    %v3793 = vpop.permute.xlu0 %3792
    %3794 = vrot.lane.b32.xlu0 %v2760, 48
    %v3795 = vpop.permute.xlu0 %3794
    %v3796 = vsel %vm397, %v3789, 0
    %v3798 = vsel %vm397, %v3791, 0
    %v3800 = vsel %vm397, %v3793, 0
    %v3802 = vsel %vm397, %v3795, 0
    %3804 = vmatprep.subr.mxu0 0.0
    %3805 = vmatpush1.xpose.msra.mxu0 %v3800
    %3806 = vmatprep.subr.mxu0 0.0
    %3807 = vmatpush1.xpose.msra.mxu0 %v3802
    %3808 = vmatprep.subr.mxu0 0.0
    %3809 = vmatpush1.xpose.msra.mxu0 0.0
    %3810 = vmatprep.subr.mxu0 0.0
    %3811 = vmatpush1.xpose.msra.mxu0 0.0
    %3812 = vmatprep.subr.mxu0 0.0
    %3813 = vmatpush1.xpose.msra.mxu0 0.0
    %3814 = vmatprep.subr.mxu0 0.0
    %3815 = vmatpush1.xpose.msra.mxu0 0.0
    %3816 = vmatprep.subr.mxu0 0.0
    %3817 = vmatpush1.xpose.msra.mxu0 0.0
    %3818 = vmatprep.subr.mxu0 0.0
    %3819 = vmatpush1.xpose.msra.mxu0 0.0
    %3820 = vmatprep.subr.mxu0 0.0
    %3821 = vmatpush1.xpose.msra.mxu0 0.0
    %3822 = vmatprep.subr.mxu0 0.0
    %3823 = vmatpush1.xpose.msra.mxu0 0.0
    %3824 = vmatprep.subr.mxu0 0.0
    %3825 = vmatpush1.xpose.msra.mxu0 0.0
    %3826 = vmatprep.subr.mxu0 0.0
    %3827 = vmatpush1.xpose.msra.mxu0 0.0
    %3828 = vmatprep.subr.mxu0 0.0
    %3829 = vmatpush1.xpose.msra.mxu0 0.0
    %3830 = vmatprep.subr.mxu0 0.0
    %3831 = vmatpush1.xpose.msra.mxu0 0.0
    %3832 = vmatprep.subr.mxu0 0.0
    %3833 = vmatpush1.xpose.msra.mxu0 0.0
    %3834 = vmatprep.subr.mxu0 0.0
    %3835 = vmatpush1.xpose.msra.mxu0 0.0
    %3836 = vmatprep.subr.mxu0 0.0
    %3837 = vmatpush1.xpose.msra.mxu0 0.0
    %3838 = vmatprep.subr.mxu0 0.0
    %3839 = vmatpush1.xpose.msra.mxu0 0.0
    %3840 = vmatprep.subr.mxu0 0.0
    %3841 = vmatpush1.xpose.msra.mxu0 0.0
    %3842 = vmatprep.subr.mxu0 0.0
    %3843 = vmatpush1.xpose.msra.mxu0 0.0
    %3844 = vmatprep.subr.mxu0 0.0
    %3845 = vmatpush1.xpose.msra.mxu0 0.0
    %3846 = vmatprep.subr.mxu0 0.0
    %3847 = vmatpush1.xpose.msra.mxu0 0.0
    %3848 = vmatprep.subr.mxu0 0.0
    %3849 = vmatpush1.xpose.msra.mxu0 0.0
    %3850 = vmatprep.subr.mxu0 0.0
    %3851 = vmatpush1.xpose.msra.mxu0 0.0
    %3852 = vmatprep.subr.mxu0 0.0
    %3853 = vmatpush1.xpose.msra.mxu0 0.0
    %3854 = vmatprep.subr.mxu0 0.0
    %3855 = vmatpush1.xpose.msra.mxu0 0.0
    %3856 = vmatprep.subr.mxu0 0.0
    %3857 = vmatpush1.xpose.msra.mxu0 0.0
    %3858 = vmatprep.subr.mxu0 0.0
    %3859 = vmatpush1.xpose.msra.mxu0 0.0
    %3860 = vmatprep.subr.mxu0 0.0
    %3861 = vmatpush1.xpose.msra.mxu0 0.0
    %3862 = vmatprep.subr.mxu0 0.0
    %3863 = vmatpush1.xpose.msra.mxu0 0.0
    %3864 = vmatprep.subr.mxu0 0.0
    %3865 = vmatpush1.xpose.msra.mxu0 0.0
    %3866 = vmatprep.subr.mxu0 0.0
    %3867 = vmatpush1.xpose.msra.mxu0 0.0
    %3868 = vmatprep.mubr.f32.mxu0 0.0
    %3869 = vmatmul.mubr.f32.gmra.mrb[0].mxu0 %v3796
    %v3870 = vpop.f32.mrb[0].mxu0
    %v3871 = vadd.f32 0.0, %v3870
    %v3872 = vpop.f32.mrb[0].mxu0
    %3873 = vmatprep.mubr.f32.mxu0 0.0
    %3874 = vmatmul.mubr.f32.gmra.mrb[0].mxu0 %v3798
    %v3875 = vpop.f32.mrb[0].mxu0
    %v3876 = vadd.f32 0.0, %v3875
    %v3877 = vpop.f32.mrb[0].mxu0
    %3878 = vdwg.mxu0
    %v3879 = vsel %vm397, %v3871, -inf
    %3880 = vmax.xlane.f32.xlu0 %v3879
    %v3881 = vpop.xlane.xlu0 %3880
    %v3882 = vsel %vm397, %v3876, -inf
    %3883 = vmax.xlane.f32.xlu0 %v3882
    %v3884 = vpop.xlane.xlu0 %3883
    %v3885 = vsub.f32 %v3871, %v3881
    %v3886 = vsub.f32 %v3876, %v3884
    %v3887 = vmul.f32 %v3885, 1.442695
    %v3888 = vpow.pop %v3887
    %v3889 = vmul.f32 %v3886, 1.442695
    %v3890 = vpow.pop %v3889
    %v3891 = vsel %vm397, %v3888, 0.0
    %3892 = vadd.xlane.f32.xlu0 %v3891
    %v3893 = vpop.xlane.xlu0 %3892
    %v3894 = vsel %vm397, %v3890, 0.0
    %3895 = vadd.xlane.f32.xlu0 %v3894
    %v3896 = vpop.xlane.xlu0 %3895
    %v3897 = vrcp.pop %v3893
    %v3898 = vrcp.pop %v3896
    %v3899 = vmul.f32 %v3888, %v3897
    %v3900 = vmul.f32 %v3890, %v3898
    %3903 = vrot.lane.b32.xlu0 %v2756, 112
    %v3904 = vpop.permute.xlu0 %3903
    %3905 = vrot.lane.b32.xlu0 %v2762, 112
    %v3906 = vpop.permute.xlu0 %3905
    %v3910 = vsel %vm397, %v3899, 0
    %v3913 = vsel %vm397, %v3900, 0
    %3915 = vmatprep.subr.mxu0 0.0
    %3916 = vmatpush1.msra.mxu0 %v3904
    %3917 = vmatprep.subr.mxu0 0.0
    %3918 = vmatpush1.msra.mxu0 %v3906
    %3919 = vmatprep.subr.mxu0 0.0
    %3920 = vmatpush1.msra.mxu0 0.0
    %3921 = vmatprep.subr.mxu0 0.0
    %3922 = vmatpush1.msra.mxu0 0.0
    %3923 = vmatprep.subr.mxu0 0.0
    %3924 = vmatpush1.msra.mxu0 0.0
    %3925 = vmatprep.subr.mxu0 0.0
    %3926 = vmatpush1.msra.mxu0 0.0
    %3927 = vmatprep.subr.mxu0 0.0
    %3928 = vmatpush1.msra.mxu0 0.0
    %3929 = vmatprep.subr.mxu0 0.0
    %3930 = vmatpush1.msra.mxu0 0.0
    %3931 = vmatprep.subr.mxu0 0.0
    %3932 = vmatpush1.msra.mxu0 0.0
    %3933 = vmatprep.subr.mxu0 0.0
    %3934 = vmatpush1.msra.mxu0 0.0
    %3935 = vmatprep.subr.mxu0 0.0
    %3936 = vmatpush1.msra.mxu0 0.0
    %3937 = vmatprep.subr.mxu0 0.0
    %3938 = vmatpush1.msra.mxu0 0.0
    %3939 = vmatprep.subr.mxu0 0.0
    %3940 = vmatpush1.msra.mxu0 0.0
    %3941 = vmatprep.subr.mxu0 0.0
    %3942 = vmatpush1.msra.mxu0 0.0
    %3943 = vmatprep.subr.mxu0 0.0
    %3944 = vmatpush1.msra.mxu0 0.0
    %3945 = vmatprep.subr.mxu0 0.0
    %3946 = vmatpush1.msra.mxu0 0.0
    %3947 = vmatprep.subr.mxu0 0.0
    %3948 = vmatpush1.msra.mxu0 0.0
    %3949 = vmatprep.subr.mxu0 0.0
    %3950 = vmatpush1.msra.mxu0 0.0
    %3951 = vmatprep.subr.mxu0 0.0
    %3952 = vmatpush1.msra.mxu0 0.0
    %3953 = vmatprep.subr.mxu0 0.0
    %3954 = vmatpush1.msra.mxu0 0.0
    %3955 = vmatprep.subr.mxu0 0.0
    %3956 = vmatpush1.msra.mxu0 0.0
    %3957 = vmatprep.subr.mxu0 0.0
    %3958 = vmatpush1.msra.mxu0 0.0
    %3959 = vmatprep.subr.mxu0 0.0
    %3960 = vmatpush1.msra.mxu0 0.0
    %3961 = vmatprep.subr.mxu0 0.0
    %3962 = vmatpush1.msra.mxu0 0.0
    %3963 = vmatprep.subr.mxu0 0.0
    %3964 = vmatpush1.msra.mxu0 0.0
    %3965 = vmatprep.subr.mxu0 0.0
    %3966 = vmatpush1.msra.mxu0 0.0
    %3967 = vmatprep.subr.mxu0 0.0
    %3968 = vmatpush1.msra.mxu0 0.0
    %3969 = vmatprep.subr.mxu0 0.0
    %3970 = vmatpush1.msra.mxu0 0.0
    %3971 = vmatprep.subr.mxu0 0.0
    %3972 = vmatpush1.msra.mxu0 0.0
    %3973 = vmatprep.subr.mxu0 0.0
    %3974 = vmatpush1.msra.mxu0 0.0
    %3975 = vmatprep.subr.mxu0 0.0
    %3976 = vmatpush1.msra.mxu0 0.0
    %3977 = vmatprep.subr.mxu0 0.0
    %3978 = vmatpush1.msra.mxu0 0.0
    %3979 = vmatprep.mubr.f32.mxu0 0.0
    %3980 = vmatmul.mubr.f32.gmra.mrb[0].mxu0 %v3910
    %v3981 = vpop.f32.mrb[0].mxu0
    %v3982 = vadd.f32 0.0, %v3981
    %v3983 = vpop.f32.mrb[0].mxu0
    %3984 = vmatprep.mubr.f32.mxu0 0.0
    %3985 = vmatmul.mubr.f32.gmra.mrb[0].mxu0 %v3913
    %v3986 = vpop.f32.mrb[0].mxu0
    %v3987 = vadd.f32 0.0, %v3986
    %v3988 = vpop.f32.mrb[0].mxu0
    %3989 = vdwg.mxu0
    %3990 = vrot.lane.b32.xlu0 %v2766, 96
    %v3991 = vpop.permute.xlu0 %3990
    %3992 = vrot.lane.b32.xlu0 %v2767, 96
    %v3993 = vpop.permute.xlu0 %3992
    %3994 = vrot.lane.b32.xlu0 %v2754, 32
    %v3995 = vpop.permute.xlu0 %3994
    %3996 = vrot.lane.b32.xlu0 %v2760, 32
    %v3997 = vpop.permute.xlu0 %3996
    %v3998 = vsel %vm397, %v3991, 0
    %v4000 = vsel %vm397, %v3993, 0
    %v4002 = vsel %vm397, %v3995, 0
    %v4004 = vsel %vm397, %v3997, 0
    %4006 = vmatprep.subr.mxu0 0.0
    %4007 = vmatpush1.xpose.msra.mxu0 %v4002
    %4008 = vmatprep.subr.mxu0 0.0
    %4009 = vmatpush1.xpose.msra.mxu0 %v4004
    %4010 = vmatprep.subr.mxu0 0.0
    %4011 = vmatpush1.xpose.msra.mxu0 0.0
    %4012 = vmatprep.subr.mxu0 0.0
    %4013 = vmatpush1.xpose.msra.mxu0 0.0
    %4014 = vmatprep.subr.mxu0 0.0
    %4015 = vmatpush1.xpose.msra.mxu0 0.0
    %4016 = vmatprep.subr.mxu0 0.0
    %4017 = vmatpush1.xpose.msra.mxu0 0.0
    %4018 = vmatprep.subr.mxu0 0.0
    %4019 = vmatpush1.xpose.msra.mxu0 0.0
    %4020 = vmatprep.subr.mxu0 0.0
    %4021 = vmatpush1.xpose.msra.mxu0 0.0
    %4022 = vmatprep.subr.mxu0 0.0
    %4023 = vmatpush1.xpose.msra.mxu0 0.0
    %4024 = vmatprep.subr.mxu0 0.0
    %4025 = vmatpush1.xpose.msra.mxu0 0.0
    %4026 = vmatprep.subr.mxu0 0.0
    %4027 = vmatpush1.xpose.msra.mxu0 0.0
    %4028 = vmatprep.subr.mxu0 0.0
    %4029 = vmatpush1.xpose.msra.mxu0 0.0
    %4030 = vmatprep.subr.mxu0 0.0
    %4031 = vmatpush1.xpose.msra.mxu0 0.0
    %4032 = vmatprep.subr.mxu0 0.0
    %4033 = vmatpush1.xpose.msra.mxu0 0.0
    %4034 = vmatprep.subr.mxu0 0.0
    %4035 = vmatpush1.xpose.msra.mxu0 0.0
    %4036 = vmatprep.subr.mxu0 0.0
    %4037 = vmatpush1.xpose.msra.mxu0 0.0
    %4038 = vmatprep.subr.mxu0 0.0
    %4039 = vmatpush1.xpose.msra.mxu0 0.0
    %4040 = vmatprep.subr.mxu0 0.0
    %4041 = vmatpush1.xpose.msra.mxu0 0.0
    %4042 = vmatprep.subr.mxu0 0.0
    %4043 = vmatpush1.xpose.msra.mxu0 0.0
    %4044 = vmatprep.subr.mxu0 0.0
    %4045 = vmatpush1.xpose.msra.mxu0 0.0
    %4046 = vmatprep.subr.mxu0 0.0
    %4047 = vmatpush1.xpose.msra.mxu0 0.0
    %4048 = vmatprep.subr.mxu0 0.0
    %4049 = vmatpush1.xpose.msra.mxu0 0.0
    %4050 = vmatprep.subr.mxu0 0.0
    %4051 = vmatpush1.xpose.msra.mxu0 0.0
    %4052 = vmatprep.subr.mxu0 0.0
    %4053 = vmatpush1.xpose.msra.mxu0 0.0
    %4054 = vmatprep.subr.mxu0 0.0
    %4055 = vmatpush1.xpose.msra.mxu0 0.0
    %4056 = vmatprep.subr.mxu0 0.0
    %4057 = vmatpush1.xpose.msra.mxu0 0.0
    %4058 = vmatprep.subr.mxu0 0.0
    %4059 = vmatpush1.xpose.msra.mxu0 0.0
    %4060 = vmatprep.subr.mxu0 0.0
    %4061 = vmatpush1.xpose.msra.mxu0 0.0
    %4062 = vmatprep.subr.mxu0 0.0
    %4063 = vmatpush1.xpose.msra.mxu0 0.0
    %4064 = vmatprep.subr.mxu0 0.0
    %4065 = vmatpush1.xpose.msra.mxu0 0.0
    %4066 = vmatprep.subr.mxu0 0.0
    %4067 = vmatpush1.xpose.msra.mxu0 0.0
    %4068 = vmatprep.subr.mxu0 0.0
    %4069 = vmatpush1.xpose.msra.mxu0 0.0
    %4070 = vmatprep.mubr.f32.mxu0 0.0
    %4071 = vmatmul.mubr.f32.gmra.mrb[0].mxu0 %v3998
    %v4072 = vpop.f32.mrb[0].mxu0
    %v4073 = vadd.f32 0.0, %v4072
    %v4074 = vpop.f32.mrb[0].mxu0
    %4075 = vmatprep.mubr.f32.mxu0 0.0
    %4076 = vmatmul.mubr.f32.gmra.mrb[0].mxu0 %v4000
    %v4077 = vpop.f32.mrb[0].mxu0
    %v4078 = vadd.f32 0.0, %v4077
    %v4079 = vpop.f32.mrb[0].mxu0
    %4080 = vdwg.mxu0
    %v4081 = vsel %vm397, %v4073, -inf
    %4082 = vmax.xlane.f32.xlu0 %v4081
    %v4083 = vpop.xlane.xlu0 %4082
    %v4084 = vsel %vm397, %v4078, -inf
    %4085 = vmax.xlane.f32.xlu0 %v4084
    %v4086 = vpop.xlane.xlu0 %4085
    %v4087 = vsub.f32 %v4073, %v4083
    %v4088 = vsub.f32 %v4078, %v4086
    %v4089 = vmul.f32 %v4087, 1.442695
    %v4090 = vpow.pop %v4089
    %v4091 = vmul.f32 %v4088, 1.442695
    %v4092 = vpow.pop %v4091
    %v4093 = vsel %vm397, %v4090, 0.0
    %4094 = vadd.xlane.f32.xlu0 %v4093
    %v4095 = vpop.xlane.xlu0 %4094
    %v4096 = vsel %vm397, %v4092, 0.0
    %4097 = vadd.xlane.f32.xlu0 %v4096
    %v4098 = vpop.xlane.xlu0 %4097
    %v4099 = vrcp.pop %v4095
    %v4100 = vrcp.pop %v4098
    %v4101 = vmul.f32 %v4090, %v4099
    %v4102 = vmul.f32 %v4092, %v4100
    %4103 = vrot.lane.b32.xlu0 %v2756, 96
    %v4104 = vpop.permute.xlu0 %4103
    %4105 = vrot.lane.b32.xlu0 %v2762, 96
    %v4106 = vpop.permute.xlu0 %4105
    %v4110 = vsel %vm397, %v4101, 0
    %v4113 = vsel %vm397, %v4102, 0
    %4115 = vmatprep.subr.mxu0 0.0
    %4116 = vmatpush1.msra.mxu0 %v4104
    %4117 = vmatprep.subr.mxu0 0.0
    %4118 = vmatpush1.msra.mxu0 %v4106
    %4119 = vmatprep.subr.mxu0 0.0
    %4120 = vmatpush1.msra.mxu0 0.0
    %4121 = vmatprep.subr.mxu0 0.0
    %4122 = vmatpush1.msra.mxu0 0.0
    %4123 = vmatprep.subr.mxu0 0.0
    %4124 = vmatpush1.msra.mxu0 0.0
    %4125 = vmatprep.subr.mxu0 0.0
    %4126 = vmatpush1.msra.mxu0 0.0
    %4127 = vmatprep.subr.mxu0 0.0
    %4128 = vmatpush1.msra.mxu0 0.0
    %4129 = vmatprep.subr.mxu0 0.0
    %4130 = vmatpush1.msra.mxu0 0.0
    %4131 = vmatprep.subr.mxu0 0.0
    %4132 = vmatpush1.msra.mxu0 0.0
    %4133 = vmatprep.subr.mxu0 0.0
    %4134 = vmatpush1.msra.mxu0 0.0
    %4135 = vmatprep.subr.mxu0 0.0
    %4136 = vmatpush1.msra.mxu0 0.0
    %4137 = vmatprep.subr.mxu0 0.0
    %4138 = vmatpush1.msra.mxu0 0.0
    %4139 = vmatprep.subr.mxu0 0.0
    %4140 = vmatpush1.msra.mxu0 0.0
    %4141 = vmatprep.subr.mxu0 0.0
    %4142 = vmatpush1.msra.mxu0 0.0
    %4143 = vmatprep.subr.mxu0 0.0
    %4144 = vmatpush1.msra.mxu0 0.0
    %4145 = vmatprep.subr.mxu0 0.0
    %4146 = vmatpush1.msra.mxu0 0.0
    %4147 = vmatprep.subr.mxu0 0.0
    %4148 = vmatpush1.msra.mxu0 0.0
    %4149 = vmatprep.subr.mxu0 0.0
    %4150 = vmatpush1.msra.mxu0 0.0
    %4151 = vmatprep.subr.mxu0 0.0
    %4152 = vmatpush1.msra.mxu0 0.0
    %4153 = vmatprep.subr.mxu0 0.0
    %4154 = vmatpush1.msra.mxu0 0.0
    %4155 = vmatprep.subr.mxu0 0.0
    %4156 = vmatpush1.msra.mxu0 0.0
    %4157 = vmatprep.subr.mxu0 0.0
    %4158 = vmatpush1.msra.mxu0 0.0
    %4159 = vmatprep.subr.mxu0 0.0
    %4160 = vmatpush1.msra.mxu0 0.0
    %4161 = vmatprep.subr.mxu0 0.0
    %4162 = vmatpush1.msra.mxu0 0.0
    %4163 = vmatprep.subr.mxu0 0.0
    %4164 = vmatpush1.msra.mxu0 0.0
    %4165 = vmatprep.subr.mxu0 0.0
    %4166 = vmatpush1.msra.mxu0 0.0
    %4167 = vmatprep.subr.mxu0 0.0
    %4168 = vmatpush1.msra.mxu0 0.0
    %4169 = vmatprep.subr.mxu0 0.0
    %4170 = vmatpush1.msra.mxu0 0.0
    %4171 = vmatprep.subr.mxu0 0.0
    %4172 = vmatpush1.msra.mxu0 0.0
    %4173 = vmatprep.subr.mxu0 0.0
    %4174 = vmatpush1.msra.mxu0 0.0
    %4175 = vmatprep.subr.mxu0 0.0
    %4176 = vmatpush1.msra.mxu0 0.0
    %4177 = vmatprep.subr.mxu0 0.0
    %4178 = vmatpush1.msra.mxu0 0.0
    %4179 = vmatprep.mubr.f32.mxu0 0.0
    %4180 = vmatmul.mubr.f32.gmra.mrb[0].mxu0 %v4110
    %v4181 = vpop.f32.mrb[0].mxu0
    %v4182 = vadd.f32 0.0, %v4181
    %v4183 = vpop.f32.mrb[0].mxu0
    %4184 = vmatprep.mubr.f32.mxu0 0.0
    %4185 = vmatmul.mubr.f32.gmra.mrb[0].mxu0 %v4113
    %v4186 = vpop.f32.mrb[0].mxu0
    %v4187 = vadd.f32 0.0, %v4186
    %v4188 = vpop.f32.mrb[0].mxu0
    %4189 = vdwg.mxu0
    %4190 = vrot.lane.b32.xlu0 %v2766, 80
    %v4191 = vpop.permute.xlu0 %4190
    %4192 = vrot.lane.b32.xlu0 %v2767, 80
    %v4193 = vpop.permute.xlu0 %4192
    %4194 = vrot.lane.b32.xlu0 %v2754, 16
    %v4195 = vpop.permute.xlu0 %4194
    %4196 = vrot.lane.b32.xlu0 %v2760, 16
    %v4197 = vpop.permute.xlu0 %4196
    %v4198 = vsel %vm397, %v4191, 0
    %v4200 = vsel %vm397, %v4193, 0
    %v4202 = vsel %vm397, %v4195, 0
    %v4204 = vsel %vm397, %v4197, 0
    %4206 = vmatprep.subr.mxu0 0.0
    %4207 = vmatpush1.xpose.msra.mxu0 %v4202
    %4208 = vmatprep.subr.mxu0 0.0
    %4209 = vmatpush1.xpose.msra.mxu0 %v4204
    %4210 = vmatprep.subr.mxu0 0.0
    %4211 = vmatpush1.xpose.msra.mxu0 0.0
    %4212 = vmatprep.subr.mxu0 0.0
    %4213 = vmatpush1.xpose.msra.mxu0 0.0
    %4214 = vmatprep.subr.mxu0 0.0
    %4215 = vmatpush1.xpose.msra.mxu0 0.0
    %4216 = vmatprep.subr.mxu0 0.0
    %4217 = vmatpush1.xpose.msra.mxu0 0.0
    %4218 = vmatprep.subr.mxu0 0.0
    %4219 = vmatpush1.xpose.msra.mxu0 0.0
    %4220 = vmatprep.subr.mxu0 0.0
    %4221 = vmatpush1.xpose.msra.mxu0 0.0
    %4222 = vmatprep.subr.mxu0 0.0
    %4223 = vmatpush1.xpose.msra.mxu0 0.0
    %4224 = vmatprep.subr.mxu0 0.0
    %4225 = vmatpush1.xpose.msra.mxu0 0.0
    %4226 = vmatprep.subr.mxu0 0.0
    %4227 = vmatpush1.xpose.msra.mxu0 0.0
    %4228 = vmatprep.subr.mxu0 0.0
    %4229 = vmatpush1.xpose.msra.mxu0 0.0
    %4230 = vmatprep.subr.mxu0 0.0
    %4231 = vmatpush1.xpose.msra.mxu0 0.0
    %4232 = vmatprep.subr.mxu0 0.0
    %4233 = vmatpush1.xpose.msra.mxu0 0.0
    %4234 = vmatprep.subr.mxu0 0.0
    %4235 = vmatpush1.xpose.msra.mxu0 0.0
    %4236 = vmatprep.subr.mxu0 0.0
    %4237 = vmatpush1.xpose.msra.mxu0 0.0
    %4238 = vmatprep.subr.mxu0 0.0
    %4239 = vmatpush1.xpose.msra.mxu0 0.0
    %4240 = vmatprep.subr.mxu0 0.0
    %4241 = vmatpush1.xpose.msra.mxu0 0.0
    %4242 = vmatprep.subr.mxu0 0.0
    %4243 = vmatpush1.xpose.msra.mxu0 0.0
    %4244 = vmatprep.subr.mxu0 0.0
    %4245 = vmatpush1.xpose.msra.mxu0 0.0
    %4246 = vmatprep.subr.mxu0 0.0
    %4247 = vmatpush1.xpose.msra.mxu0 0.0
    %4248 = vmatprep.subr.mxu0 0.0
    %4249 = vmatpush1.xpose.msra.mxu0 0.0
    %4250 = vmatprep.subr.mxu0 0.0
    %4251 = vmatpush1.xpose.msra.mxu0 0.0
    %4252 = vmatprep.subr.mxu0 0.0
    %4253 = vmatpush1.xpose.msra.mxu0 0.0
    %4254 = vmatprep.subr.mxu0 0.0
    %4255 = vmatpush1.xpose.msra.mxu0 0.0
    %4256 = vmatprep.subr.mxu0 0.0
    %4257 = vmatpush1.xpose.msra.mxu0 0.0
    %4258 = vmatprep.subr.mxu0 0.0
    %4259 = vmatpush1.xpose.msra.mxu0 0.0
    %4260 = vmatprep.subr.mxu0 0.0
    %4261 = vmatpush1.xpose.msra.mxu0 0.0
    %4262 = vmatprep.subr.mxu0 0.0
    %4263 = vmatpush1.xpose.msra.mxu0 0.0
    %4264 = vmatprep.subr.mxu0 0.0
    %4265 = vmatpush1.xpose.msra.mxu0 0.0
    %4266 = vmatprep.subr.mxu0 0.0
    %4267 = vmatpush1.xpose.msra.mxu0 0.0
    %4268 = vmatprep.subr.mxu0 0.0
    %4269 = vmatpush1.xpose.msra.mxu0 0.0
    %4270 = vmatprep.mubr.f32.mxu0 0.0
    %4271 = vmatmul.mubr.f32.gmra.mrb[0].mxu0 %v4198
    %v4272 = vpop.f32.mrb[0].mxu0
    %v4273 = vadd.f32 0.0, %v4272
    %v4274 = vpop.f32.mrb[0].mxu0
    %4275 = vmatprep.mubr.f32.mxu0 0.0
    %4276 = vmatmul.mubr.f32.gmra.mrb[0].mxu0 %v4200
    %v4277 = vpop.f32.mrb[0].mxu0
    %v4278 = vadd.f32 0.0, %v4277
    %v4279 = vpop.f32.mrb[0].mxu0
    %4280 = vdwg.mxu0
    %v4281 = vsel %vm397, %v4273, -inf
    %4282 = vmax.xlane.f32.xlu0 %v4281
    %v4283 = vpop.xlane.xlu0 %4282
    %v4284 = vsel %vm397, %v4278, -inf
    %4285 = vmax.xlane.f32.xlu0 %v4284
    %v4286 = vpop.xlane.xlu0 %4285
    %v4287 = vsub.f32 %v4273, %v4283
    %v4288 = vsub.f32 %v4278, %v4286
    %v4289 = vmul.f32 %v4287, 1.442695
    %v4290 = vpow.pop %v4289
    %v4291 = vmul.f32 %v4288, 1.442695
    %v4292 = vpow.pop %v4291
    %v4293 = vsel %vm397, %v4290, 0.0
    %4294 = vadd.xlane.f32.xlu0 %v4293
    %v4295 = vpop.xlane.xlu0 %4294
    %v4296 = vsel %vm397, %v4292, 0.0
    %4297 = vadd.xlane.f32.xlu0 %v4296
    %v4298 = vpop.xlane.xlu0 %4297
    %v4299 = vrcp.pop %v4295
    %v4300 = vrcp.pop %v4298
    %v4301 = vmul.f32 %v4290, %v4299
    %v4302 = vmul.f32 %v4292, %v4300
    %4303 = vrot.lane.b32.xlu0 %v2756, 80
    %v4304 = vpop.permute.xlu0 %4303
    %4305 = vrot.lane.b32.xlu0 %v2762, 80
    %v4306 = vpop.permute.xlu0 %4305
    %v4310 = vsel %vm397, %v4301, 0
    %v4313 = vsel %vm397, %v4302, 0
    %4315 = vmatprep.subr.mxu0 0.0
    %4316 = vmatpush1.msra.mxu0 %v4304
    %4317 = vmatprep.subr.mxu0 0.0
    %4318 = vmatpush1.msra.mxu0 %v4306
    %4319 = vmatprep.subr.mxu0 0.0
    %4320 = vmatpush1.msra.mxu0 0.0
    %4321 = vmatprep.subr.mxu0 0.0
    %4322 = vmatpush1.msra.mxu0 0.0
    %4323 = vmatprep.subr.mxu0 0.0
    %4324 = vmatpush1.msra.mxu0 0.0
    %4325 = vmatprep.subr.mxu0 0.0
    %4326 = vmatpush1.msra.mxu0 0.0
    %4327 = vmatprep.subr.mxu0 0.0
    %4328 = vmatpush1.msra.mxu0 0.0
    %4329 = vmatprep.subr.mxu0 0.0
    %4330 = vmatpush1.msra.mxu0 0.0
    %4331 = vmatprep.subr.mxu0 0.0
    %4332 = vmatpush1.msra.mxu0 0.0
    %4333 = vmatprep.subr.mxu0 0.0
    %4334 = vmatpush1.msra.mxu0 0.0
    %4335 = vmatprep.subr.mxu0 0.0
    %4336 = vmatpush1.msra.mxu0 0.0
    %4337 = vmatprep.subr.mxu0 0.0
    %4338 = vmatpush1.msra.mxu0 0.0
    %4339 = vmatprep.subr.mxu0 0.0
    %4340 = vmatpush1.msra.mxu0 0.0
    %4341 = vmatprep.subr.mxu0 0.0
    %4342 = vmatpush1.msra.mxu0 0.0
    %4343 = vmatprep.subr.mxu0 0.0
    %4344 = vmatpush1.msra.mxu0 0.0
    %4345 = vmatprep.subr.mxu0 0.0
    %4346 = vmatpush1.msra.mxu0 0.0
    %4347 = vmatprep.subr.mxu0 0.0
    %4348 = vmatpush1.msra.mxu0 0.0
    %4349 = vmatprep.subr.mxu0 0.0
    %4350 = vmatpush1.msra.mxu0 0.0
    %4351 = vmatprep.subr.mxu0 0.0
    %4352 = vmatpush1.msra.mxu0 0.0
    %4353 = vmatprep.subr.mxu0 0.0
    %4354 = vmatpush1.msra.mxu0 0.0
    %4355 = vmatprep.subr.mxu0 0.0
    %4356 = vmatpush1.msra.mxu0 0.0
    %4357 = vmatprep.subr.mxu0 0.0
    %4358 = vmatpush1.msra.mxu0 0.0
    %4359 = vmatprep.subr.mxu0 0.0
    %4360 = vmatpush1.msra.mxu0 0.0
    %4361 = vmatprep.subr.mxu0 0.0
    %4362 = vmatpush1.msra.mxu0 0.0
    %4363 = vmatprep.subr.mxu0 0.0
    %4364 = vmatpush1.msra.mxu0 0.0
    %4365 = vmatprep.subr.mxu0 0.0
    %4366 = vmatpush1.msra.mxu0 0.0
    %4367 = vmatprep.subr.mxu0 0.0
    %4368 = vmatpush1.msra.mxu0 0.0
    %4369 = vmatprep.subr.mxu0 0.0
    %4370 = vmatpush1.msra.mxu0 0.0
    %4371 = vmatprep.subr.mxu0 0.0
    %4372 = vmatpush1.msra.mxu0 0.0
    %4373 = vmatprep.subr.mxu0 0.0
    %4374 = vmatpush1.msra.mxu0 0.0
    %4375 = vmatprep.subr.mxu0 0.0
    %4376 = vmatpush1.msra.mxu0 0.0
    %4377 = vmatprep.subr.mxu0 0.0
    %4378 = vmatpush1.msra.mxu0 0.0
    %4379 = vmatprep.mubr.f32.mxu0 0.0
    %4380 = vmatmul.mubr.f32.gmra.mrb[0].mxu0 %v4310
    %v4381 = vpop.f32.mrb[0].mxu0
    %v4382 = vadd.f32 0.0, %v4381
    %v4383 = vpop.f32.mrb[0].mxu0
    %4384 = vmatprep.mubr.f32.mxu0 0.0
    %4385 = vmatmul.mubr.f32.gmra.mrb[0].mxu0 %v4313
    %v4386 = vpop.f32.mrb[0].mxu0
    %v4387 = vadd.f32 0.0, %v4386
    %v4388 = vpop.f32.mrb[0].mxu0
    %4389 = vdwg.mxu0
    %4392 = vrot.lane.b32.xlu0 %v3982, 16
    %v4393 = vpop.permute.xlu0 %4392
    %4394 = vrot.lane.b32.xlu0 %v3987, 16
    %v4395 = vpop.permute.xlu0 %4394
    %4400 = vrot.lane.b32.xlu0 %v4182, 32
    %v4401 = vpop.permute.xlu0 %4400
    %4402 = vrot.lane.b32.xlu0 %v4187, 32
    %v4403 = vpop.permute.xlu0 %4402
    %4408 = vrot.lane.b32.xlu0 %v4382, 48
    %v4409 = vpop.permute.xlu0 %4408
    %4410 = vrot.lane.b32.xlu0 %v4387, 48
    %v4411 = vpop.permute.xlu0 %4410
    %v4414 = vsel %vm397, %v3780, %v4393
    %v4415 = vsel %vm397, %v3785, %v4395
    %v4416 = vsel %vm1214, %v4414, %v4401
    %v4417 = vsel %vm1214, %v4415, %v4403
    %v4418 = vsel %vm1217, %v4416, %v4409
    %v4419 = vsel %vm1217, %v4417, %v4411
    %s4420 = scalar_lea.vmem %s8, 64
    %v4421 = vld [vmem:[%s4420] sm:$0xff]
    %v4422 = vld [vmem:[%s4420 + $0x8] sm:$0xff]
    %v4423 = vld [vmem:[%s4420 + $0x10] sm:$0xff]
    %v4424 = vld [vmem:[%s4420 + $0x18] sm:$0xff]
    %v4425 = vld [vmem:[%s4420 + $0x20] sm:$0xff]
    %v4426 = vld [vmem:[%s4420 + $0x28] sm:$0xff]
    %v4427 = vld [vmem:[%s4420 + $0x30] sm:$0xff]
    %v4428 = vld [vmem:[%s4420 + $0x38] sm:$0xff]
    %s4429 = scalar_lea.vmem %s9, 1
    %v4430 = vld [vmem:[%s4429] sm:$0x1]
    %v4432 = vlaneseq
    %v4433 = vshrl.u32 %v4432, 7
    %v4434 = vsub.s32 0, %v4433
    %v4435 = vrot.slane %v4430, %v4434
    %v4438 = vsel %vm184, %v3592, 0
    %v4441 = vsel %vm184, %v3593, 0
    %v4444 = vsel %vm184, %v4418, 0
    %v4447 = vsel %vm184, %v4419, 0
    %4449 = vmatprep.subr.mxu0 0.0
    %4450 = vmatpush1.msra.mxu0 %v4421
    %4451 = vmatprep.subr.mxu0 0.0
    %4452 = vmatpush1.msra.mxu0 %v4422
    %4453 = vmatprep.subr.mxu0 0.0
    %4454 = vmatpush1.msra.mxu0 %v4423
    %4455 = vmatprep.subr.mxu0 0.0
    %4456 = vmatpush1.msra.mxu0 %v4424
    %4457 = vmatprep.subr.mxu0 0.0
    %4458 = vmatpush1.msra.mxu0 %v4425
    %4459 = vmatprep.subr.mxu0 0.0
    %4460 = vmatpush1.msra.mxu0 %v4426
    %4461 = vmatprep.subr.mxu0 0.0
    %4462 = vmatpush1.msra.mxu0 %v4427
    %4463 = vmatprep.subr.mxu0 0.0
    %4464 = vmatpush1.msra.mxu0 %v4428
    %4465 = vmatprep.subr.mxu0 0.0
    %4466 = vmatpush1.msra.mxu0 0.0
    %4467 = vmatprep.subr.mxu0 0.0
    %4468 = vmatpush1.msra.mxu0 0.0
    %4469 = vmatprep.subr.mxu0 0.0
    %4470 = vmatpush1.msra.mxu0 0.0
    %4471 = vmatprep.subr.mxu0 0.0
    %4472 = vmatpush1.msra.mxu0 0.0
    %4473 = vmatprep.subr.mxu0 0.0
    %4474 = vmatpush1.msra.mxu0 0.0
    %4475 = vmatprep.subr.mxu0 0.0
    %4476 = vmatpush1.msra.mxu0 0.0
    %4477 = vmatprep.subr.mxu0 0.0
    %4478 = vmatpush1.msra.mxu0 0.0
    %4479 = vmatprep.subr.mxu0 0.0
    %4480 = vmatpush1.msra.mxu0 0.0
    %4481 = vmatprep.subr.mxu0 0.0
    %4482 = vmatpush1.msra.mxu0 0.0
    %4483 = vmatprep.subr.mxu0 0.0
    %4484 = vmatpush1.msra.mxu0 0.0
    %4485 = vmatprep.subr.mxu0 0.0
    %4486 = vmatpush1.msra.mxu0 0.0
    %4487 = vmatprep.subr.mxu0 0.0
    %4488 = vmatpush1.msra.mxu0 0.0
    %4489 = vmatprep.subr.mxu0 0.0
    %4490 = vmatpush1.msra.mxu0 0.0
    %4491 = vmatprep.subr.mxu0 0.0
    %4492 = vmatpush1.msra.mxu0 0.0
    %4493 = vmatprep.subr.mxu0 0.0
    %4494 = vmatpush1.msra.mxu0 0.0
    %4495 = vmatprep.subr.mxu0 0.0
    %4496 = vmatpush1.msra.mxu0 0.0
    %4497 = vmatprep.subr.mxu0 0.0
    %4498 = vmatpush1.msra.mxu0 0.0
    %4499 = vmatprep.subr.mxu0 0.0
    %4500 = vmatpush1.msra.mxu0 0.0
    %4501 = vmatprep.subr.mxu0 0.0
    %4502 = vmatpush1.msra.mxu0 0.0
    %4503 = vmatprep.subr.mxu0 0.0
    %4504 = vmatpush1.msra.mxu0 0.0
    %4505 = vmatprep.subr.mxu0 0.0
    %4506 = vmatpush1.msra.mxu0 0.0
    %4507 = vmatprep.subr.mxu0 0.0
    %4508 = vmatpush1.msra.mxu0 0.0
    %4509 = vmatprep.subr.mxu0 0.0
    %4510 = vmatpush1.msra.mxu0 0.0
    %4511 = vmatprep.subr.mxu0 0.0
    %4512 = vmatpush1.msra.mxu0 0.0
    %4513 = vmatprep.mubr.f32.mxu0 0.0
    %4514 = vmatmul.mubr.f32.gmra.mrb[0].mxu0 %v4438
    %v4515 = vpop.f32.mrb[0].mxu0
    %v4516 = vadd.f32 %v4435, %v4515
    %v4517 = vpop.f32.mrb[0].mxu0
    %4518 = vmatprep.mubr.f32.mxu0 0.0
    %4519 = vmatmul.mubr.f32.gmra.mrb[0].mxu0 %v4441
    %v4520 = vpop.f32.mrb[0].mxu0
    %v4521 = vadd.f32 %v4435, %v4520
    %v4522 = vpop.f32.mrb[0].mxu0
    %4523 = vmatprep.mubr.f32.mxu0 0.0
    %4524 = vmatmul.mubr.f32.gmra.mrb[0].mxu0 %v4444
    %v4525 = vpop.f32.mrb[0].mxu0
    %v4526 = vadd.f32 %v4435, %v4525
    %v4527 = vpop.f32.mrb[0].mxu0
    %4528 = vmatprep.mubr.f32.mxu0 0.0
    %4529 = vmatmul.mubr.f32.gmra.mrb[0].mxu0 %v4447
    %v4530 = vpop.f32.mrb[0].mxu0
    %v4531 = vadd.f32 %v4435, %v4530
    %v4532 = vpop.f32.mrb[0].mxu0
    %4533 = vdwg.mxu0
    %v4534 = vadd.f32 %v2553, %v4516
    %v4535 = vadd.f32 %v2554, %v4521
    %v4536 = vadd.f32 %v2555, %v4526
    %v4537 = vadd.f32 %v2556, %v4531
    %s4538 = scalar_lea.vmem %s10, 1
    %v4539 = vld [vmem:[%s4538] sm:$0x1]
    %s4540 = scalar_lea.vmem %s11, 1
    %v4541 = vld [vmem:[%s4540] sm:$0x1]
    %v4542 = vsel %vm184, %v4534, 0.0
    %4543 = vadd.xlane.f32.xlu0 %v4542
    %v4544 = vpop.xlane.xlu0 %4543
    %v4545 = vsel %vm184, %v4535, 0.0
    %4546 = vadd.xlane.f32.xlu0 %v4545
    %v4547 = vpop.xlane.xlu0 %4546
    %v4548 = vsel %vm184, %v4536, 0.0
    %4549 = vadd.xlane.f32.xlu0 %v4548
    %v4550 = vpop.xlane.xlu0 %4549
    %v4551 = vsel %vm184, %v4537, 0.0
    %4552 = vadd.xlane.f32.xlu0 %v4551
    %v4553 = vpop.xlane.xlu0 %4552
    %v4554 = vmul.f32 %v4544, %v197
    %v4555 = vmul.f32 %v4547, %v197
    %v4556 = vmul.f32 %v4550, %v197
    %v4557 = vmul.f32 %v4553, %v197
    %v4558 = vsub.f32 %v4534, %v4554
    %v4559 = vsub.f32 %v4535, %v4555
    %v4560 = vsub.f32 %v4536, %v4556
    %v4561 = vsub.f32 %v4537, %v4557
    %v4562 = vmul.f32 %v4558, %v4558
    %v4563 = vmul.f32 %v4559, %v4559
    %v4564 = vmul.f32 %v4560, %v4560
    %v4565 = vmul.f32 %v4561, %v4561
    %v4566 = vsel %vm184, %v4562, 0.0
    %4567 = vadd.xlane.f32.xlu0 %v4566
    %v4568 = vpop.xlane.xlu0 %4567
    %v4569 = vsel %vm184, %v4563, 0.0
    %4570 = vadd.xlane.f32.xlu0 %v4569
    %v4571 = vpop.xlane.xlu0 %4570
    %v4572 = vsel %vm184, %v4564, 0.0
    %4573 = vadd.xlane.f32.xlu0 %v4572
    %v4574 = vpop.xlane.xlu0 %4573
    %v4575 = vsel %vm184, %v4565, 0.0
    %4576 = vadd.xlane.f32.xlu0 %v4575
    %v4577 = vpop.xlane.xlu0 %4576
    %v4578 = vmul.f32 %v4568, %v197
    %v4579 = vmul.f32 %v4571, %v197
    %v4580 = vmul.f32 %v4574, %v197
    %v4581 = vmul.f32 %v4577, %v197
    %v4582 = vadd.f32 %v4578, 1e-05
    %v4583 = vadd.f32 %v4579, 1e-05
    %v4584 = vadd.f32 %v4580, 1e-05
    %v4585 = vadd.f32 %v4581, 1e-05
    %v4586 = vrsqrt.pop %v4582
    %v4587 = vrsqrt.pop %v4583
    %v4588 = vrsqrt.pop %v4584
    %v4589 = vrsqrt.pop %v4585
    %v4590 = vmul.f32 %v4558, %v4586
    %v4591 = vmul.f32 %v4559, %v4587
    %v4592 = vmul.f32 %v4560, %v4588
    %v4593 = vmul.f32 %v4561, %v4589
    %v4595 = vlaneseq
    %v4596 = vshrl.u32 %v4595, 7
    %v4597 = vsub.s32 0, %v4596
    %v4598 = vrot.slane %v4539, %v4597
    %v4600 = vmul.f32 %v4590, %v4598
    %v4601 = vmul.f32 %v4591, %v4598
    %v4602 = vmul.f32 %v4592, %v4598
    %v4603 = vmul.f32 %v4593, %v4598
    %v4605 = vlaneseq
    %v4606 = vshrl.u32 %v4605, 7
    %v4607 = vsub.s32 0, %v4606
    %v4608 = vrot.slane %v4541, %v4607
    %v4610 = vadd.f32 %v4600, %v4608
    %v4611 = vadd.f32 %v4601, %v4608
    %v4612 = vadd.f32 %v4602, %v4608
    %v4613 = vadd.f32 %v4603, %v4608
    %s4614 = scalar_lea.vmem %s12, 128
    %v4615 = vld [vmem:[%s4614] sm:$0xff]
    %v4616 = vld [vmem:[%s4614 + $0x8] sm:$0xff]
    %v4617 = vld [vmem:[%s4614 + $0x10] sm:$0xff]
    %v4618 = vld [vmem:[%s4614 + $0x18] sm:$0xff]
    %v4619 = vld [vmem:[%s4614 + $0x20] sm:$0xff]
    %v4620 = vld [vmem:[%s4614 + $0x28] sm:$0xff]
    %v4621 = vld [vmem:[%s4614 + $0x30] sm:$0xff]
    %v4622 = vld [vmem:[%s4614 + $0x38] sm:$0xff]
    %v4623 = vld [vmem:[%s4614 + $0x40] sm:$0xff]
    %v4624 = vld [vmem:[%s4614 + $0x48] sm:$0xff]
    %v4625 = vld [vmem:[%s4614 + $0x50] sm:$0xff]
    %v4626 = vld [vmem:[%s4614 + $0x58] sm:$0xff]
    %v4627 = vld [vmem:[%s4614 + $0x60] sm:$0xff]
    %v4628 = vld [vmem:[%s4614 + $0x68] sm:$0xff]
    %v4629 = vld [vmem:[%s4614 + $0x70] sm:$0xff]
    %v4630 = vld [vmem:[%s4614 + $0x78] sm:$0xff]
    %s4631 = scalar_lea.vmem %s13, 2
    %v4632 = vld [vmem:[%s4631] sm:$0x3]
    %v4634 = vlaneseq
    %v4635 = vshrl.u32 %v4634, 7
    %v4636 = vsub.s32 0, %v4635
    %v4637 = vrot.slane %v4632, %v4636
    %v4638 = vlaneseq
    %v4639 = vshrl.u32 %v4638, 7
    %v4640 = vsub.s32 1, %v4639
    %v4641 = vrot.slane %v4632, %v4640
    %v4645 = vsel %vm184, %v4610, 0
    %v4648 = vsel %vm184, %v4611, 0
    %v4651 = vsel %vm184, %v4612, 0
    %v4654 = vsel %vm184, %v4613, 0
    %4656 = vmatprep.subr.mxu0 %v4616
    %4657 = vmatpush1.msra.mxu0 %v4615
    %4658 = vmatprep.subr.mxu0 %v4618
    %4659 = vmatpush1.msra.mxu0 %v4617
    %4660 = vmatprep.subr.mxu0 %v4620
    %4661 = vmatpush1.msra.mxu0 %v4619
    %4662 = vmatprep.subr.mxu0 %v4622
    %4663 = vmatpush1.msra.mxu0 %v4621
    %4664 = vmatprep.subr.mxu0 %v4624
    %4665 = vmatpush1.msra.mxu0 %v4623
    %4666 = vmatprep.subr.mxu0 %v4626
    %4667 = vmatpush1.msra.mxu0 %v4625
    %4668 = vmatprep.subr.mxu0 %v4628
    %4669 = vmatpush1.msra.mxu0 %v4627
    %4670 = vmatprep.subr.mxu0 %v4630
    %4671 = vmatpush1.msra.mxu0 %v4629
    %4672 = vmatprep.subr.mxu0 0.0
    %4673 = vmatpush1.msra.mxu0 0.0
    %4674 = vmatprep.subr.mxu0 0.0
    %4675 = vmatpush1.msra.mxu0 0.0
    %4676 = vmatprep.subr.mxu0 0.0
    %4677 = vmatpush1.msra.mxu0 0.0
    %4678 = vmatprep.subr.mxu0 0.0
    %4679 = vmatpush1.msra.mxu0 0.0
    %4680 = vmatprep.subr.mxu0 0.0
    %4681 = vmatpush1.msra.mxu0 0.0
    %4682 = vmatprep.subr.mxu0 0.0
    %4683 = vmatpush1.msra.mxu0 0.0
    %4684 = vmatprep.subr.mxu0 0.0
    %4685 = vmatpush1.msra.mxu0 0.0
    %4686 = vmatprep.subr.mxu0 0.0
    %4687 = vmatpush1.msra.mxu0 0.0
    %4688 = vmatprep.subr.mxu0 0.0
    %4689 = vmatpush1.msra.mxu0 0.0
    %4690 = vmatprep.subr.mxu0 0.0
    %4691 = vmatpush1.msra.mxu0 0.0
    %4692 = vmatprep.subr.mxu0 0.0
    %4693 = vmatpush1.msra.mxu0 0.0
    %4694 = vmatprep.subr.mxu0 0.0
    %4695 = vmatpush1.msra.mxu0 0.0
    %4696 = vmatprep.subr.mxu0 0.0
    %4697 = vmatpush1.msra.mxu0 0.0
    %4698 = vmatprep.subr.mxu0 0.0
    %4699 = vmatpush1.msra.mxu0 0.0
    %4700 = vmatprep.subr.mxu0 0.0
    %4701 = vmatpush1.msra.mxu0 0.0
    %4702 = vmatprep.subr.mxu0 0.0
    %4703 = vmatpush1.msra.mxu0 0.0
    %4704 = vmatprep.subr.mxu0 0.0
    %4705 = vmatpush1.msra.mxu0 0.0
    %4706 = vmatprep.subr.mxu0 0.0
    %4707 = vmatpush1.msra.mxu0 0.0
    %4708 = vmatprep.subr.mxu0 0.0
    %4709 = vmatpush1.msra.mxu0 0.0
    %4710 = vmatprep.subr.mxu0 0.0
    %4711 = vmatpush1.msra.mxu0 0.0
    %4712 = vmatprep.subr.mxu0 0.0
    %4713 = vmatpush1.msra.mxu0 0.0
    %4714 = vmatprep.subr.mxu0 0.0
    %4715 = vmatpush1.msra.mxu0 0.0
    %4716 = vmatprep.subr.mxu0 0.0
    %4717 = vmatpush1.msra.mxu0 0.0
    %4718 = vmatprep.subr.mxu0 0.0
    %4719 = vmatpush1.msra.mxu0 0.0
    %4720 = vmatprep.mubr.f32.mxu0 0.0
    %4721 = vmatmul.mubr.f32.gmra.mrb[0].mxu0 %v4645
    %v4722 = vpop.f32.mrb[0].mxu0
    %v4723 = vadd.f32 %v4637, %v4722
    %v4724 = vpop.f32.mrb[0].mxu0
    %v4725 = vadd.f32 %v4641, %v4724
    %4726 = vmatprep.mubr.f32.mxu0 0.0
    %4727 = vmatmul.mubr.f32.gmra.mrb[0].mxu0 %v4648
    %v4728 = vpop.f32.mrb[0].mxu0
    %v4729 = vadd.f32 %v4637, %v4728
    %v4730 = vpop.f32.mrb[0].mxu0
    %v4731 = vadd.f32 %v4641, %v4730
    %4732 = vmatprep.mubr.f32.mxu0 0.0
    %4733 = vmatmul.mubr.f32.gmra.mrb[0].mxu0 %v4651
    %v4734 = vpop.f32.mrb[0].mxu0
    %v4735 = vadd.f32 %v4637, %v4734
    %v4736 = vpop.f32.mrb[0].mxu0
    %v4737 = vadd.f32 %v4641, %v4736
    %4738 = vmatprep.mubr.f32.mxu0 0.0
    %4739 = vmatmul.mubr.f32.gmra.mrb[0].mxu0 %v4654
    %v4740 = vpop.f32.mrb[0].mxu0
    %v4741 = vadd.f32 %v4637, %v4740
    %v4742 = vpop.f32.mrb[0].mxu0
    %v4743 = vadd.f32 %v4641, %v4742
    %4744 = vdwg.mxu0
    %v4745 = vmul.f32 %v4723, 1.702
    %v4746 = vmul.f32 %v4725, 1.702
    %v4747 = vmul.f32 %v4729, 1.702
    %v4748 = vmul.f32 %v4731, 1.702
    %v4749 = vmul.f32 %v4735, 1.702
    %v4750 = vmul.f32 %v4737, 1.702
    %v4751 = vmul.f32 %v4741, 1.702
    %v4752 = vmul.f32 %v4743, 1.702
    %v4753 = vxor.u32 %v4745, 2147483648
    %v4754 = vxor.u32 %v4746, 2147483648
    %v4755 = vxor.u32 %v4747, 2147483648
    %v4756 = vxor.u32 %v4748, 2147483648
    %v4757 = vxor.u32 %v4749, 2147483648
    %v4758 = vxor.u32 %v4750, 2147483648
    %v4759 = vxor.u32 %v4751, 2147483648
    %v4760 = vxor.u32 %v4752, 2147483648
    %v4761 = vmul.f32 %v4753, 1.442695
    %v4762 = vpow.pop %v4761
    %v4763 = vmul.f32 %v4754, 1.442695
    %v4764 = vpow.pop %v4763
    %v4765 = vmul.f32 %v4755, 1.442695
    %v4766 = vpow.pop %v4765
    %v4767 = vmul.f32 %v4756, 1.442695
    %v4768 = vpow.pop %v4767
    %v4769 = vmul.f32 %v4757, 1.442695
    %v4770 = vpow.pop %v4769
    %v4771 = vmul.f32 %v4758, 1.442695
    %v4772 = vpow.pop %v4771
    %v4773 = vmul.f32 %v4759, 1.442695
    %v4774 = vpow.pop %v4773
    %v4775 = vmul.f32 %v4760, 1.442695
    %v4776 = vpow.pop %v4775
    %v4777 = vadd.f32 %v4762, 1.0
    %v4778 = vadd.f32 %v4764, 1.0
    %v4779 = vadd.f32 %v4766, 1.0
    %v4780 = vadd.f32 %v4768, 1.0
    %v4781 = vadd.f32 %v4770, 1.0
    %v4782 = vadd.f32 %v4772, 1.0
    %v4783 = vadd.f32 %v4774, 1.0
    %v4784 = vadd.f32 %v4776, 1.0
    %v4785 = vrcp.pop %v4777
    %v4786 = vmul.f32 1.0, %v4785
    %v4787 = vrcp.pop %v4778
    %v4788 = vmul.f32 1.0, %v4787
    %v4789 = vrcp.pop %v4779
    %v4790 = vmul.f32 1.0, %v4789
    %v4791 = vrcp.pop %v4780
    %v4792 = vmul.f32 1.0, %v4791
    %v4793 = vrcp.pop %v4781
    %v4794 = vmul.f32 1.0, %v4793
    %v4795 = vrcp.pop %v4782
    %v4796 = vmul.f32 1.0, %v4795
    %v4797 = vrcp.pop %v4783
    %v4798 = vmul.f32 1.0, %v4797
    %v4799 = vrcp.pop %v4784
    %v4800 = vmul.f32 1.0, %v4799
    %v4801 = vmul.f32 %v4723, %v4786
    %v4802 = vmul.f32 %v4725, %v4788
    %v4803 = vmul.f32 %v4729, %v4790
    %v4804 = vmul.f32 %v4731, %v4792
    %v4805 = vmul.f32 %v4735, %v4794
    %v4806 = vmul.f32 %v4737, %v4796
    %v4807 = vmul.f32 %v4741, %v4798
    %v4808 = vmul.f32 %v4743, %v4800
    %s4809 = scalar_lea.vmem %s14, 256
    %v4810 = vld [vmem:[%s4809] sm:$0xff]
    %v4811 = vld [vmem:[%s4809 + $0x8] sm:$0xff]
    %v4812 = vld [vmem:[%s4809 + $0x10] sm:$0xff]
    %v4813 = vld [vmem:[%s4809 + $0x18] sm:$0xff]
    %v4814 = vld [vmem:[%s4809 + $0x20] sm:$0xff]
    %v4815 = vld [vmem:[%s4809 + $0x28] sm:$0xff]
    %v4816 = vld [vmem:[%s4809 + $0x30] sm:$0xff]
    %v4817 = vld [vmem:[%s4809 + $0x38] sm:$0xff]
    %v4818 = vld [vmem:[%s4809 + $0x40] sm:$0xff]
    %v4819 = vld [vmem:[%s4809 + $0x48] sm:$0xff]
    %v4820 = vld [vmem:[%s4809 + $0x50] sm:$0xff]
    %v4821 = vld [vmem:[%s4809 + $0x58] sm:$0xff]
    %v4822 = vld [vmem:[%s4809 + $0x60] sm:$0xff]
    %v4823 = vld [vmem:[%s4809 + $0x68] sm:$0xff]
    %v4824 = vld [vmem:[%s4809 + $0x70] sm:$0xff]
    %v4825 = vld [vmem:[%s4809 + $0x78] sm:$0xff]
    %v4826 = vld [vmem:[%s4809 + $0x80] sm:$0xff]
    %v4827 = vld [vmem:[%s4809 + $0x88] sm:$0xff]
    %v4828 = vld [vmem:[%s4809 + $0x90] sm:$0xff]
    %v4829 = vld [vmem:[%s4809 + $0x98] sm:$0xff]
    %v4830 = vld [vmem:[%s4809 + $0xa0] sm:$0xff]
    %v4831 = vld [vmem:[%s4809 + $0xa8] sm:$0xff]
    %v4832 = vld [vmem:[%s4809 + $0xb0] sm:$0xff]
    %v4833 = vld [vmem:[%s4809 + $0xb8] sm:$0xff]
    %v4834 = vld [vmem:[%s4809 + $0xc0] sm:$0xff]
    %v4835 = vld [vmem:[%s4809 + $0xc8] sm:$0xff]
    %v4836 = vld [vmem:[%s4809 + $0xd0] sm:$0xff]
    %v4837 = vld [vmem:[%s4809 + $0xd8] sm:$0xff]
    %v4838 = vld [vmem:[%s4809 + $0xe0] sm:$0xff]
    %v4839 = vld [vmem:[%s4809 + $0xe8] sm:$0xff]
    %v4840 = vld [vmem:[%s4809 + $0xf0] sm:$0xff]
    %v4841 = vld [vmem:[%s4809 + $0xf8] sm:$0xff]
    %s4842 = scalar_lea.vmem %s15, 1
    %v4843 = vld [vmem:[%s4842] sm:$0x1]
    %v4845 = vlaneseq
    %v4846 = vshrl.u32 %v4845, 7
    %v4847 = vsub.s32 0, %v4846
    %v4848 = vrot.slane %v4843, %v4847
    %4850 = vmatprep.subr.mxu0 0.0
    %4851 = vmatpush1.msra.mxu0 %v4810
    %4852 = vmatprep.subr.mxu0 0.0
    %4853 = vmatpush1.msra.mxu0 %v4811
    %4854 = vmatprep.subr.mxu0 0.0
    %4855 = vmatpush1.msra.mxu0 %v4812
    %4856 = vmatprep.subr.mxu0 0.0
    %4857 = vmatpush1.msra.mxu0 %v4813
    %4858 = vmatprep.subr.mxu0 0.0
    %4859 = vmatpush1.msra.mxu0 %v4814
    %4860 = vmatprep.subr.mxu0 0.0
    %4861 = vmatpush1.msra.mxu0 %v4815
    %4862 = vmatprep.subr.mxu0 0.0
    %4863 = vmatpush1.msra.mxu0 %v4816
    %4864 = vmatprep.subr.mxu0 0.0
    %4865 = vmatpush1.msra.mxu0 %v4817
    %4866 = vmatprep.subr.mxu0 0.0
    %4867 = vmatpush1.msra.mxu0 %v4818
    %4868 = vmatprep.subr.mxu0 0.0
    %4869 = vmatpush1.msra.mxu0 %v4819
    %4870 = vmatprep.subr.mxu0 0.0
    %4871 = vmatpush1.msra.mxu0 %v4820
    %4872 = vmatprep.subr.mxu0 0.0
    %4873 = vmatpush1.msra.mxu0 %v4821
    %4874 = vmatprep.subr.mxu0 0.0
    %4875 = vmatpush1.msra.mxu0 %v4822
    %4876 = vmatprep.subr.mxu0 0.0
    %4877 = vmatpush1.msra.mxu0 %v4823
    %4878 = vmatprep.subr.mxu0 0.0
    %4879 = vmatpush1.msra.mxu0 %v4824
    %4880 = vmatprep.subr.mxu0 0.0
    %4881 = vmatpush1.msra.mxu0 %v4825
    %4882 = vmatprep.subr.mxu0 0.0
    %4883 = vmatpush1.msra.mxu0 %v4826
    %4884 = vmatprep.subr.mxu0 0.0
    %4885 = vmatpush1.msra.mxu0 %v4827
    %4886 = vmatprep.subr.mxu0 0.0
    %4887 = vmatpush1.msra.mxu0 %v4828
    %4888 = vmatprep.subr.mxu0 0.0
    %4889 = vmatpush1.msra.mxu0 %v4829
    %4890 = vmatprep.subr.mxu0 0.0
    %4891 = vmatpush1.msra.mxu0 %v4830
    %4892 = vmatprep.subr.mxu0 0.0
    %4893 = vmatpush1.msra.mxu0 %v4831
    %4894 = vmatprep.subr.mxu0 0.0
    %4895 = vmatpush1.msra.mxu0 %v4832
    %4896 = vmatprep.subr.mxu0 0.0
    %4897 = vmatpush1.msra.mxu0 %v4833
    %4898 = vmatprep.subr.mxu0 0.0
    %4899 = vmatpush1.msra.mxu0 %v4834
    %4900 = vmatprep.subr.mxu0 0.0
    %4901 = vmatpush1.msra.mxu0 %v4835
    %4902 = vmatprep.subr.mxu0 0.0
    %4903 = vmatpush1.msra.mxu0 %v4836
    %4904 = vmatprep.subr.mxu0 0.0
    %4905 = vmatpush1.msra.mxu0 %v4837
    %4906 = vmatprep.subr.mxu0 0.0
    %4907 = vmatpush1.msra.mxu0 %v4838
    %4908 = vmatprep.subr.mxu0 0.0
    %4909 = vmatpush1.msra.mxu0 %v4839
    %4910 = vmatprep.subr.mxu0 0.0
    %4911 = vmatpush1.msra.mxu0 %v4840
    %4912 = vmatprep.subr.mxu0 0.0
    %4913 = vmatpush1.msra.mxu0 %v4841
    %4914 = vmatprep.mubr.f32.mxu0 %v4802
    %4915 = vmatmul.mubr.f32.gmra.mrb[0].mxu0 %v4801
    %v4916 = vpop.f32.mrb[0].mxu0
    %v4917 = vadd.f32 %v4848, %v4916
    %v4918 = vpop.f32.mrb[0].mxu0
    %4919 = vmatprep.mubr.f32.mxu0 %v4804
    %4920 = vmatmul.mubr.f32.gmra.mrb[0].mxu0 %v4803
    %v4921 = vpop.f32.mrb[0].mxu0
    %v4922 = vadd.f32 %v4848, %v4921
    %v4923 = vpop.f32.mrb[0].mxu0
    %4924 = vmatprep.mubr.f32.mxu0 %v4806
    %4925 = vmatmul.mubr.f32.gmra.mrb[0].mxu0 %v4805
    %v4926 = vpop.f32.mrb[0].mxu0
    %v4927 = vadd.f32 %v4848, %v4926
    %v4928 = vpop.f32.mrb[0].mxu0
    %4929 = vmatprep.mubr.f32.mxu0 %v4808
    %4930 = vmatmul.mubr.f32.gmra.mrb[0].mxu0 %v4807
    %v4931 = vpop.f32.mrb[0].mxu0
    %v4932 = vadd.f32 %v4848, %v4931
    %v4933 = vpop.f32.mrb[0].mxu0
    %4934 = vdwg.mxu0
    %v4935 = vadd.f32 %v4534, %v4917
    %v4936 = vadd.f32 %v4535, %v4922
    %v4937 = vadd.f32 %v4536, %v4927
    %v4938 = vadd.f32 %v4537, %v4932
    %v4939 = vld [vmem:[%s16] sm:$0x1]
    %v4940 = vld [vmem:[%s17] sm:$0x1]
    %v4941 = vsel %vm184, %v4935, 0.0
    %4942 = vadd.xlane.f32.xlu0 %v4941
    %v4943 = vpop.xlane.xlu0 %4942
    %v4944 = vsel %vm184, %v4936, 0.0
    %4945 = vadd.xlane.f32.xlu0 %v4944
    %v4946 = vpop.xlane.xlu0 %4945
    %v4947 = vsel %vm184, %v4937, 0.0
    %4948 = vadd.xlane.f32.xlu0 %v4947
    %v4949 = vpop.xlane.xlu0 %4948
    %v4950 = vsel %vm184, %v4938, 0.0
    %4951 = vadd.xlane.f32.xlu0 %v4950
    %v4952 = vpop.xlane.xlu0 %4951
    %v4953 = vmul.f32 %v4943, %v197
    %v4954 = vmul.f32 %v4946, %v197
    %v4955 = vmul.f32 %v4949, %v197
    %v4956 = vmul.f32 %v4952, %v197
    %v4957 = vsub.f32 %v4935, %v4953
    %v4958 = vsub.f32 %v4936, %v4954
    %v4959 = vsub.f32 %v4937, %v4955
    %v4960 = vsub.f32 %v4938, %v4956
    %v4961 = vmul.f32 %v4957, %v4957
    %v4962 = vmul.f32 %v4958, %v4958
    %v4963 = vmul.f32 %v4959, %v4959
    %v4964 = vmul.f32 %v4960, %v4960
    %v4965 = vsel %vm184, %v4961, 0.0
    %4966 = vadd.xlane.f32.xlu0 %v4965
    %v4967 = vpop.xlane.xlu0 %4966
    %v4968 = vsel %vm184, %v4962, 0.0
    %4969 = vadd.xlane.f32.xlu0 %v4968
    %v4970 = vpop.xlane.xlu0 %4969
    %v4971 = vsel %vm184, %v4963, 0.0
    %4972 = vadd.xlane.f32.xlu0 %v4971
    %v4973 = vpop.xlane.xlu0 %4972
    %v4974 = vsel %vm184, %v4964, 0.0
    %4975 = vadd.xlane.f32.xlu0 %v4974
    %v4976 = vpop.xlane.xlu0 %4975
    %v4977 = vmul.f32 %v4967, %v197
    %v4978 = vmul.f32 %v4970, %v197
    %v4979 = vmul.f32 %v4973, %v197
    %v4980 = vmul.f32 %v4976, %v197
    %v4981 = vadd.f32 %v4977, 1e-05
    %v4982 = vadd.f32 %v4978, 1e-05
    %v4983 = vadd.f32 %v4979, 1e-05
    %v4984 = vadd.f32 %v4980, 1e-05
    %v4985 = vrsqrt.pop %v4981
    %v4986 = vrsqrt.pop %v4982
    %v4987 = vrsqrt.pop %v4983
    %v4988 = vrsqrt.pop %v4984
    %v4989 = vmul.f32 %v4957, %v4985
    %v4990 = vmul.f32 %v4958, %v4986
    %v4991 = vmul.f32 %v4959, %v4987
    %v4992 = vmul.f32 %v4960, %v4988
    %v4994 = vlaneseq
    %v4995 = vshrl.u32 %v4994, 7
    %v4996 = vsub.s32 0, %v4995
    %v4997 = vrot.slane %v4939, %v4996
    %v4999 = vmul.f32 %v4989, %v4997
    %v5000 = vmul.f32 %v4990, %v4997
    %v5001 = vmul.f32 %v4991, %v4997
    %v5002 = vmul.f32 %v4992, %v4997
    %v5004 = vlaneseq
    %v5005 = vshrl.u32 %v5004, 7
    %v5006 = vsub.s32 0, %v5005
    %v5007 = vrot.slane %v4940, %v5006
    %v5009 = vadd.f32 %v4999, %v5007
    %v5010 = vadd.f32 %v5000, %v5007
    %v5011 = vadd.f32 %v5001, %v5007
    %v5012 = vadd.f32 %v5002, %v5007
    %v5013 = vld [vmem:[%s18] sm:$0xff]
    %v5014 = vld [vmem:[%s18 + $0x8] sm:$0xff]
    %v5015 = vld [vmem:[%s18 + $0x10] sm:$0xff]
    %v5016 = vld [vmem:[%s18 + $0x18] sm:$0xff]
    %v5017 = vld [vmem:[%s18 + $0x20] sm:$0xff]
    %v5018 = vld [vmem:[%s18 + $0x28] sm:$0xff]
    %v5019 = vld [vmem:[%s18 + $0x30] sm:$0xff]
    %v5020 = vld [vmem:[%s18 + $0x38] sm:$0xff]
    %v5021 = vld [vmem:[%s19] sm:$0x1]
    %v5023 = vlaneseq
    %v5024 = vshrl.u32 %v5023, 7
    %v5025 = vsub.s32 0, %v5024
    %v5026 = vrot.slane %v5021, %v5025
    %v5029 = vsel %vm184, %v5009, 0
    %v5032 = vsel %vm184, %v5010, 0
    %v5035 = vsel %vm184, %v5011, 0
    %v5038 = vsel %vm184, %v5012, 0
    %5040 = vmatprep.subr.mxu0 0.0
    %5041 = vmatpush1.msra.mxu0 %v5013
    %5042 = vmatprep.subr.mxu0 0.0
    %5043 = vmatpush1.msra.mxu0 %v5014
    %5044 = vmatprep.subr.mxu0 0.0
    %5045 = vmatpush1.msra.mxu0 %v5015
    %5046 = vmatprep.subr.mxu0 0.0
    %5047 = vmatpush1.msra.mxu0 %v5016
    %5048 = vmatprep.subr.mxu0 0.0
    %5049 = vmatpush1.msra.mxu0 %v5017
    %5050 = vmatprep.subr.mxu0 0.0
    %5051 = vmatpush1.msra.mxu0 %v5018
    %5052 = vmatprep.subr.mxu0 0.0
    %5053 = vmatpush1.msra.mxu0 %v5019
    %5054 = vmatprep.subr.mxu0 0.0
    %5055 = vmatpush1.msra.mxu0 %v5020
    %5056 = vmatprep.subr.mxu0 0.0
    %5057 = vmatpush1.msra.mxu0 0.0
    %5058 = vmatprep.subr.mxu0 0.0
    %5059 = vmatpush1.msra.mxu0 0.0
    %5060 = vmatprep.subr.mxu0 0.0
    %5061 = vmatpush1.msra.mxu0 0.0
    %5062 = vmatprep.subr.mxu0 0.0
    %5063 = vmatpush1.msra.mxu0 0.0
    %5064 = vmatprep.subr.mxu0 0.0
    %5065 = vmatpush1.msra.mxu0 0.0
    %5066 = vmatprep.subr.mxu0 0.0
    %5067 = vmatpush1.msra.mxu0 0.0
    %5068 = vmatprep.subr.mxu0 0.0
    %5069 = vmatpush1.msra.mxu0 0.0
    %5070 = vmatprep.subr.mxu0 0.0
    %5071 = vmatpush1.msra.mxu0 0.0
    %5072 = vmatprep.subr.mxu0 0.0
    %5073 = vmatpush1.msra.mxu0 0.0
    %5074 = vmatprep.subr.mxu0 0.0
    %5075 = vmatpush1.msra.mxu0 0.0
    %5076 = vmatprep.subr.mxu0 0.0
    %5077 = vmatpush1.msra.mxu0 0.0
    %5078 = vmatprep.subr.mxu0 0.0
    %5079 = vmatpush1.msra.mxu0 0.0
    %5080 = vmatprep.subr.mxu0 0.0
    %5081 = vmatpush1.msra.mxu0 0.0
    %5082 = vmatprep.subr.mxu0 0.0
    %5083 = vmatpush1.msra.mxu0 0.0
    %5084 = vmatprep.subr.mxu0 0.0
    %5085 = vmatpush1.msra.mxu0 0.0
    %5086 = vmatprep.subr.mxu0 0.0
    %5087 = vmatpush1.msra.mxu0 0.0
    %5088 = vmatprep.subr.mxu0 0.0
    %5089 = vmatpush1.msra.mxu0 0.0
    %5090 = vmatprep.subr.mxu0 0.0
    %5091 = vmatpush1.msra.mxu0 0.0
    %5092 = vmatprep.subr.mxu0 0.0
    %5093 = vmatpush1.msra.mxu0 0.0
    %5094 = vmatprep.subr.mxu0 0.0
    %5095 = vmatpush1.msra.mxu0 0.0
    %5096 = vmatprep.subr.mxu0 0.0
    %5097 = vmatpush1.msra.mxu0 0.0
    %5098 = vmatprep.subr.mxu0 0.0
    %5099 = vmatpush1.msra.mxu0 0.0
    %5100 = vmatprep.subr.mxu0 0.0
    %5101 = vmatpush1.msra.mxu0 0.0
    %5102 = vmatprep.subr.mxu0 0.0
    %5103 = vmatpush1.msra.mxu0 0.0
    %5104 = vmatprep.mubr.f32.mxu0 0.0
    %5105 = vmatmul.mubr.f32.gmra.mrb[0].mxu0 %v5029
    %v5106 = vpop.f32.mrb[0].mxu0
    %v5107 = vadd.f32 %v5026, %v5106
    %v5108 = vpop.f32.mrb[0].mxu0
    %5109 = vmatprep.mubr.f32.mxu0 0.0
    %5110 = vmatmul.mubr.f32.gmra.mrb[0].mxu0 %v5032
    %v5111 = vpop.f32.mrb[0].mxu0
    %v5112 = vadd.f32 %v5026, %v5111
    %v5113 = vpop.f32.mrb[0].mxu0
    %5114 = vmatprep.mubr.f32.mxu0 0.0
    %5115 = vmatmul.mubr.f32.gmra.mrb[0].mxu0 %v5035
    %v5116 = vpop.f32.mrb[0].mxu0
    %v5117 = vadd.f32 %v5026, %v5116
    %v5118 = vpop.f32.mrb[0].mxu0
    %5119 = vmatprep.mubr.f32.mxu0 0.0
    %5120 = vmatmul.mubr.f32.gmra.mrb[0].mxu0 %v5038
    %v5121 = vpop.f32.mrb[0].mxu0
    %v5122 = vadd.f32 %v5026, %v5121
    %v5123 = vpop.f32.mrb[0].mxu0
    %5124 = vdwg.mxu0
    %5125 = vst [vmem:[#allocation2] sm:$0xff] %v5107
    %5126 = vst [vmem:[#allocation2 + $0x8] sm:$0xff] %v5112
    %5127 = vst [vmem:[#allocation2 + $0x10] sm:$0xff] %v5117
    %5128 = vst [vmem:[#allocation2 + $0x18] sm:$0xff] %v5122
    // Predicated region
    $region82: #{tpu_custom_call.1} parent=1 // pred_check
      _
    $region83: #{tpu_custom_call.1} parent=1 // pred_check_branch
      %5130 = sbr.rel (0) target = $region85
    $region84: #{tpu_custom_call.1} parent=1 // pred_region
      %s5132 = ssub.s32 512, 512
      %5133 = vsyncadd [#allocation3], %s5132
      %s5134 = sshll.u32 [#allocation2], 4
      %s5135 = int_to_ptr.vmem [resolvable:$true] %s5134
      %5140 = dma.vmem_to_hbm [thread:$0]  %s5135, 512, %s20, [#allocation3], 128, 128, 8
    $region85: #{tpu_custom_call.1} parent=1 // pred_fallthru
      _
    // Predicated region
    $region86: #{tpu_custom_call.1} parent=1 // pred_check
      _
    $region87: #{tpu_custom_call.1} parent=1 // pred_check_branch
      %5142 = sbr.rel (0) target = $region89
    $region88: #{tpu_custom_call.1} parent=1 // pred_region
      %5143 = dma.done [#allocation3], 512
    $region89: #{tpu_custom_call.1} parent=1 // pred_fallthru
      _
    %5144 = vsyncpa [#allocation3], 1

</llo_original>
